<compile_context>
chip_gen: v6e
topology: v6e:2x2x1
jax: 0.10.0
libtpu: 0.0.40
codegen_flags: <defaults>
</compile_context>

<pallas_src>
import functools

import jax
import jax.numpy as jnp
from jax.experimental import pallas as pl
from jax.experimental.pallas import tpu as pltpu


# ----------------------------- Pallas kernels ------------------------------

def _gemm_lrelu_kernel(a_ref, b_ref, o_ref, *, cout):
    # (TM, K) @ (K, C_pad) on the MXU (bf16 in, f32 acc), fused LeakyReLU epilogue,
    # store only the valid Cout channels in bf16.
    acc = jnp.dot(a_ref[...], b_ref[...], preferred_element_type=jnp.float32)
    y = acc[:, :cout]
    o_ref[...] = jnp.where(y >= 0.0, y, 0.2 * y).astype(o_ref.dtype)


def _gemm_bn_lrelu_kernel(a_ref, b_ref, g_ref, bta_ref, o_ref, *, cout, m_valid):
    # Whole layer in one block: GEMM -> BatchNorm (training-mode batch statistics,
    # biased variance, like PyTorch) -> LeakyReLU(0.2).  All stats/affine math f32.
    acc = jnp.dot(a_ref[...], b_ref[...], preferred_element_type=jnp.float32)
    m_pad = acc.shape[0]
    if m_valid == m_pad:
        mean = jnp.mean(acc, axis=0, keepdims=True)
        var = jnp.mean(jnp.square(acc - mean), axis=0, keepdims=True)
    else:  # generic path: mask zero-padded rows out of the statistics
        row = jax.lax.broadcasted_iota(jnp.int32, acc.shape, 0)
        mask = (row < m_valid).astype(jnp.float32)
        inv = 1.0 / float(m_valid)
        mean = jnp.sum(acc * mask, axis=0, keepdims=True) * inv
        var = jnp.sum(jnp.square(acc - mean) * mask, axis=0, keepdims=True) * inv
    scale = g_ref[...] * jax.lax.rsqrt(var + 1e-5)
    shift = bta_ref[...] - mean * scale
    y = acc * scale + shift
    y = jnp.where(y >= 0.0, y, 0.2 * y)
    o_ref[...] = y[:, :cout].astype(o_ref.dtype)


# ----------------------------- Pallas wrappers ------------------------------

def _round_up(x, m):
    return ((x + m - 1) // m) * m


def _pick_tm(m):
    # Largest tile <= 512 that divides M (M is already a multiple of 8).
    for tm in (512, 256, 128, 64, 32, 16, 8):
        if m % tm == 0:
            return tm
    return m


def fused_conv_lrelu(patches, w_mat, cout):
    """patches: (M, K) bf16, w_mat: (K_pad, C_pad) bf16 -> (M, cout) bf16."""
    M, K = patches.shape
    K_pad, C_pad = w_mat.shape
    if K_pad != K:
        patches = jnp.pad(patches, ((0, 0), (0, K_pad - K)))
        K = K_pad
    M_pad = _round_up(M, 8)
    if M_pad != M:
        patches = jnp.pad(patches, ((0, M_pad - M), (0, 0)))
    tm = _pick_tm(M_pad)
    kernel = functools.partial(_gemm_lrelu_kernel, cout=cout)
    out = pl.pallas_call(
        kernel,
        out_shape=jax.ShapeDtypeStruct((M_pad, cout), jnp.bfloat16),
        grid=(M_pad // tm,),
        in_specs=[
            pl.BlockSpec((tm, K), lambda i: (i, 0)),
            pl.BlockSpec((K, C_pad), lambda i: (0, 0)),
        ],
        out_specs=pl.BlockSpec((tm, cout), lambda i: (i, 0)),
        compiler_params=pltpu.CompilerParams(
            dimension_semantics=("parallel",)),
    )(patches, w_mat)
    return out[:M] if M_pad != M else out


def fused_conv_bn_lrelu(patches, w_mat, gamma_row, beta_row, cout):
    """Whole-layer fused conv+BN+LeakyReLU.  patches: (M, K) bf16 -> (M, cout) bf16."""
    M, K = patches.shape
    K_pad, C_pad = w_mat.shape
    if K_pad != K:
        patches = jnp.pad(patches, ((0, 0), (0, K_pad - K)))
        K = K_pad
    M_pad = _round_up(M, 8)
    if M_pad != M:
        patches = jnp.pad(patches, ((0, M_pad - M), (0, 0)))
    kernel = functools.partial(_gemm_bn_lrelu_kernel, cout=cout, m_valid=M)
    out = pl.pallas_call(
        kernel,
        out_shape=jax.ShapeDtypeStruct((M_pad, cout), jnp.bfloat16),
        grid=(1,),
        in_specs=[
            pl.BlockSpec((M_pad, K), lambda i: (0, 0)),
            pl.BlockSpec((K, C_pad), lambda i: (0, 0)),
            pl.BlockSpec((1, C_pad), lambda i: (0, 0)),
            pl.BlockSpec((1, C_pad), lambda i: (0, 0)),
        ],
        out_specs=pl.BlockSpec((M_pad, cout), lambda i: (0, 0)),
        compiler_params=pltpu.CompilerParams(
            dimension_semantics=("arbitrary",)),
    )(patches, w_mat, gamma_row, beta_row)
    return out[:M] if M_pad != M else out


# ----------------------------- glue (plain JAX) ------------------------------

def im2col_nhwc(x, kh, kw, stride, pad):
    """NHWC -> (N*Ho*Wo, kh*kw*C); K ordered (kh, kw, cin), matching weight prep."""
    N, H, W, C = x.shape
    if pad:
        x = jnp.pad(x, ((0, 0), (pad, pad), (pad, pad), (0, 0)))
    Ho = (H + 2 * pad - kh) // stride + 1
    Wo = (W + 2 * pad - kw) // stride + 1
    cols = []
    for i in range(kh):
        for j in range(kw):
            cols.append(x[:, i:i + stride * Ho:stride, j:j + stride * Wo:stride, :])
    p = jnp.concatenate(cols, axis=-1)                  # (N, Ho, Wo, kh*kw*C)
    return p.reshape(N * Ho * Wo, kh * kw * C), Ho, Wo


# ----------------------------- params ------------------------------

def init_discriminator_params(key, ndf):
    """Mirrors Discriminator._init_weights: conv ~ N(0, .02), BN gamma ~ N(1, .02), beta = 0."""
    nc = 3
    shapes = [
        (ndf, nc, 5, 5),
        (ndf * 2, ndf, 4, 4),
        (ndf * 4, ndf * 2, 4, 4),
        (ndf * 8, ndf * 4, 4, 4),
        (1, ndf * 8, 4, 4),
    ]
    keys = jax.random.split(key, len(shapes) + 3)
    params = {"convs": [0.02 * jax.random.normal(keys[i], s, jnp.float32)
                        for i, s in enumerate(shapes)]}
    bn_channels = [ndf * 2, ndf * 4, ndf * 8]
    params["bn"] = [
        (1.0 + 0.02 * jax.random.normal(keys[len(shapes) + i], (c,), jnp.float32),
         jnp.zeros((c,), jnp.float32))
        for i, c in enumerate(bn_channels)
    ]
    return params


def prepare_params(params):
    """One-time weight reshape/transpose/pad/cast (kept OUT of the jitted forward)."""
    w1, w2, w3, w4, w5 = params["convs"]
    (g2, b2), (g3, b3), (g4, b4) = params["bn"]

    def prep_w(w):
        cout, cin, kh, kw = w.shape
        k = kh * kw * cin
        m = jnp.transpose(w, (2, 3, 1, 0)).reshape(k, cout)   # rows ordered (kh, kw, cin)
        m = jnp.pad(m, ((0, _round_up(k, 128) - k), (0, _round_up(cout, 128) - cout)))
        return m.astype(jnp.bfloat16)

    def prep_bn(g, b, c_pad):
        c = g.shape[0]
        g_row = jnp.pad(g.reshape(1, c), ((0, 0), (0, c_pad - c)), constant_values=1.0)
        b_row = jnp.pad(b.reshape(1, c), ((0, 0), (0, c_pad - c)))
        return g_row.astype(jnp.float32), b_row.astype(jnp.float32)

    c_pads = [_round_up(w.shape[0], 128) for w in (w2, w3, w4)]
    w5_mat = jnp.transpose(w5, (2, 3, 1, 0)).reshape(-1, w5.shape[0]).astype(jnp.float32)

    return {
        "w1": prep_w(w1),
        "w_mid": [prep_w(w2), prep_w(w3), prep_w(w4)],
        "bn_mid": [prep_bn(g2, b2, c_pads[0]),
                   prep_bn(g3, b3, c_pads[1]),
                   prep_bn(g4, b4, c_pads[2])],
        "w5": w5_mat,
    }


# ----------------------------- forward ------------------------------

@functools.partial(jax.jit, static_argnums=(2,))
def discriminator_forward(prep, x_nchw, couts):
    n = x_nchw.shape[0]
    x = jnp.transpose(x_nchw, (0, 2, 3, 1)).astype(jnp.bfloat16)   # NHWC, bf16

    # conv1 (3 -> ndf, 5x5, s3, p1) + LeakyReLU   (fused epilogue, grid over M)
    p, ho, wo = im2col_nhwc(x, 5, 5, 3, 1)
    h = fused_conv_lrelu(p, prep["w1"], couts[0]).reshape(n, ho, wo, couts[0])

    # conv2..4 (4x4, s2, p1) + BatchNorm(batch stats) + LeakyReLU  (one fused pallas_call each)
    for w_mat, (g_row, b_row), cout in zip(prep["w_mid"], prep["bn_mid"], couts[1:4]):
        p, ho, wo = im2col_nhwc(h, 4, 4, 2, 1)
        h = fused_conv_bn_lrelu(p, w_mat, g_row, b_row, cout).reshape(n, ho, wo, cout)

    # conv5 (ndf*8 -> 1, 4x4, s1, p0) + Sigmoid: M=N, Cout=1 -> plain XLA dot is strictly cheaper
    p, _, _ = im2col_nhwc(h, 4, 4, 1, 0)                           # (N, kh*kw*Cin)
    logits = jnp.dot(p.astype(jnp.float32), prep["w5"])            # (N, 1)
    out = jax.nn.sigmoid(logits)
    # output.view(-1, 1).squeeze(1)
    return out.reshape(-1, 1).squeeze(1)


if __name__ == "__main__":
    key = jax.random.PRNGKey(0)
    k_params, k_x = jax.random.split(key)

    ndf = 8                    # config.gen_feature_map (kept small)
    batch = 2
    # 96x96 input is what this conv stack implies (final 4x4 valid conv -> 1x1).
    x = jax.random.normal(k_x, (batch, 3, 96, 96), jnp.float32)

    params = init_discriminator_params(k_params, ndf)
    prep = prepare_params(params)
    couts = (ndf, ndf * 2, ndf * 4, ndf * 8)

    out = discriminator_forward(prep, x, couts)
    out = jax.block_until_ready(out)
    assert out.shape == (batch,)
    assert bool(jnp.all(jnp.isfinite(out)))
    print("KERNEL_OK")
</pallas_src>

<mosaic_0001>
module attributes {stable_mosaic.version = 11 : i64} {
  func.func @_gemm_lrelu_kernel(%arg0: i32, %arg1: memref<512x128xbf16, #tpu.memory_space<vmem>>, %arg2: memref<128x128xbf16, #tpu.memory_space<vmem>>, %arg3: memref<512x8xbf16, #tpu.memory_space<vmem>>) attributes {dimension_semantics = [#tpu.dimension_semantics<parallel>], iteration_bounds = array<i64: 4>, scalar_prefetch = 0 : i64, scratch_operands = 0 : i64, tpu.core_type = #tpu.core_type<tc>, window_params = [{transform_indices = @transform_0, window_bounds = array<i64: 512, 128>}, {pipeline_mode = #tpu.pipeline_mode<synchronous>, transform_indices = @transform_1, window_bounds = array<i64: 128, 128>}, {transform_indices = @transform_2, window_bounds = array<i64: 512, 8>}]} {
    %c0 = arith.constant 0 : index
    %c0_0 = arith.constant 0 : index
    %0 = vector.load %arg1[%c0, %c0_0] : memref<512x128xbf16, #tpu.memory_space<vmem>>, vector<512x128xbf16>
    %c0_1 = arith.constant 0 : index
    %c0_2 = arith.constant 0 : index
    %1 = vector.load %arg2[%c0_1, %c0_2] : memref<128x128xbf16, #tpu.memory_space<vmem>>, vector<128x128xbf16>
    %cst = arith.constant dense<0.000000e+00> : vector<512x128xf32>
    %2 = tpu.matmul %0, %1, %cst {dimension_numbers = #tpu.dot_dimension_numbers<[1], [0], [0], [1], [0, 0, 1, 1], [], []>} : vector<512x128xbf16>, vector<128x128xbf16>, vector<512x128xf32> -> vector<512x128xf32>
    %3 = vector.extract_strided_slice %2 {offsets = [0, 0], sizes = [512, 8], strides = [1, 1]} : vector<512x128xf32> to vector<512x8xf32>
    %cst_3 = arith.constant 0.000000e+00 : f32
    %4 = vector.broadcast %cst_3 : f32 to vector<512x8xf32>
    %5 = arith.cmpf oge, %3, %4 : vector<512x8xf32>
    %cst_4 = arith.constant 2.000000e-01 : f32
    %6 = vector.broadcast %cst_4 : f32 to vector<512x8xf32>
    %7 = arith.mulf %6, %3 : vector<512x8xf32>
    %8 = arith.select %5, %3, %7 : vector<512x8xi1>, vector<512x8xf32>
    %9 = arith.truncf %8 : vector<512x8xf32> to vector<512x8xbf16>
    %c0_5 = arith.constant 0 : index
    %c0_6 = arith.constant 0 : index
    %10 = vector.load %arg3[%c0_5, %c0_6] : memref<512x8xbf16, #tpu.memory_space<vmem>>, vector<512x8xbf16>
    tpu.vector_store %arg3[%c0_5, %c0_6], %9 {strides = array<i32>} : memref<512x8xbf16, #tpu.memory_space<vmem>>, vector<512x8xbf16>,
    return
  }
  func.func @transform_0(%arg0: i32) -> (i32, i32) {
    %c0_i32 = arith.constant 0 : i32
    %c0_i32_0 = arith.constant 0 : i32
    return %arg0, %c0_i32 : i32, i32
  }
  func.func @transform_1(%arg0: i32) -> (i32, i32) {
    %c0_i32 = arith.constant 0 : i32
    %c0_i32_0 = arith.constant 0 : i32
    %c0_i32_1 = arith.constant 0 : i32
    return %c0_i32, %c0_i32_0 : i32, i32
  }
  func.func @transform_2(%arg0: i32) -> (i32, i32) {
    %c0_i32 = arith.constant 0 : i32
    %c0_i32_0 = arith.constant 0 : i32
    return %arg0, %c0_i32 : i32, i32
  }
}

module attributes {stable_mosaic.version = 11 : i64} {
  func.func @_gemm_bn_lrelu_kernel(%arg0: i32, %arg1: memref<512x128xbf16, #tpu.memory_space<vmem>>, %arg2: memref<128x128xbf16, #tpu.memory_space<vmem>>, %arg3: memref<1x128xf32, #tpu.memory_space<vmem>>, %arg4: memref<1x128xf32, #tpu.memory_space<vmem>>, %arg5: memref<512x16xbf16, #tpu.memory_space<vmem>>) attributes {dimension_semantics = [#tpu.dimension_semantics<arbitrary>], iteration_bounds = array<i64: 1>, scalar_prefetch = 0 : i64, scratch_operands = 0 : i64, tpu.core_type = #tpu.core_type<tc>, window_params = [{pipeline_mode = #tpu.pipeline_mode<synchronous>, transform_indices = @transform_0, window_bounds = array<i64: 512, 128>}, {pipeline_mode = #tpu.pipeline_mode<synchronous>, transform_indices = @transform_1, window_bounds = array<i64: 128, 128>}, {pipeline_mode = #tpu.pipeline_mode<synchronous>, transform_indices = @transform_2, window_bounds = array<i64: 1, 128>}, {pipeline_mode = #tpu.pipeline_mode<synchronous>, transform_indices = @transform_3, window_bounds = array<i64: 1, 128>}, {pipeline_mode = #tpu.pipeline_mode<synchronous>, transform_indices = @transform_4, window_bounds = array<i64: 512, 16>}]} {
    %c0 = arith.constant 0 : index
    %c0_0 = arith.constant 0 : index
    %0 = vector.load %arg1[%c0, %c0_0] : memref<512x128xbf16, #tpu.memory_space<vmem>>, vector<512x128xbf16>
    %c0_1 = arith.constant 0 : index
    %c0_2 = arith.constant 0 : index
    %1 = vector.load %arg2[%c0_1, %c0_2] : memref<128x128xbf16, #tpu.memory_space<vmem>>, vector<128x128xbf16>
    %cst = arith.constant dense<0.000000e+00> : vector<512x128xf32>
    %2 = tpu.matmul %0, %1, %cst {dimension_numbers = #tpu.dot_dimension_numbers<[1], [0], [0], [1], [0, 0, 1, 1], [], []>} : vector<512x128xbf16>, vector<128x128xbf16>, vector<512x128xf32> -> vector<512x128xf32>
    %cst_3 = arith.constant dense<0.000000e+00> : vector<128xf32>
    %3 = vector.multi_reduction <add>, %2, %cst_3 [0] : vector<512x128xf32> to vector<128xf32>
    %4 = vector.shape_cast %3 : vector<128xf32> to vector<1x128xf32>
    %cst_4 = arith.constant 5.120000e+02 : f32
    %5 = vector.broadcast %cst_4 : f32 to vector<1x128xf32>
    %6 = arith.divf %4, %5 : vector<1x128xf32>
    %7 = vector.broadcast %6 : vector<1x128xf32> to vector<512x128xf32>
    %8 = arith.subf %2, %7 : vector<512x128xf32>
    %9 = arith.mulf %8, %8 : vector<512x128xf32>
    %cst_5 = arith.constant dense<0.000000e+00> : vector<128xf32>
    %10 = vector.multi_reduction <add>, %9, %cst_5 [0] : vector<512x128xf32> to vector<128xf32>
    %11 = vector.shape_cast %10 : vector<128xf32> to vector<1x128xf32>
    %cst_6 = arith.constant 5.120000e+02 : f32
    %12 = vector.broadcast %cst_6 : f32 to vector<1x128xf32>
    %13 = arith.divf %11, %12 : vector<1x128xf32>
    %c0_7 = arith.constant 0 : index
    %c0_8 = arith.constant 0 : index
    %14 = vector.load %arg3[%c0_7, %c0_8] : memref<1x128xf32, #tpu.memory_space<vmem>>, vector<1x128xf32>
    %cst_9 = arith.constant 9.99999974E-6 : f32
    %15 = vector.broadcast %cst_9 : f32 to vector<1x128xf32>
    %16 = arith.addf %13, %15 : vector<1x128xf32>
    %17 = math.rsqrt %16 : vector<1x128xf32>
    %18 = arith.mulf %14, %17 : vector<1x128xf32>
    %c0_10 = arith.constant 0 : index
    %c0_11 = arith.constant 0 : index
    %19 = vector.load %arg4[%c0_10, %c0_11] : memref<1x128xf32, #tpu.memory_space<vmem>>, vector<1x128xf32>
    %20 = arith.mulf %6, %18 : vector<1x128xf32>
    %21 = arith.subf %19, %20 : vector<1x128xf32>
    %22 = vector.broadcast %18 : vector<1x128xf32> to vector<512x128xf32>
    %23 = arith.mulf %2, %22 : vector<512x128xf32>
    %24 = vector.broadcast %21 : vector<1x128xf32> to vector<512x128xf32>
    %25 = arith.addf %23, %24 : vector<512x128xf32>
    %cst_12 = arith.constant 0.000000e+00 : f32
    %26 = vector.broadcast %cst_12 : f32 to vector<512x128xf32>
    %27 = arith.cmpf oge, %25, %26 : vector<512x128xf32>
    %cst_13 = arith.constant 2.000000e-01 : f32
    %28 = vector.broadcast %cst_13 : f32 to vector<512x128xf32>
    %29 = arith.mulf %28, %25 : vector<512x128xf32>
    %30 = arith.select %27, %25, %29 : vector<512x128xi1>, vector<512x128xf32>
    %31 = vector.extract_strided_slice %30 {offsets = [0, 0], sizes = [512, 16], strides = [1, 1]} : vector<512x128xf32> to vector<512x16xf32>
    %32 = arith.truncf %31 : vector<512x16xf32> to vector<512x16xbf16>
    %c0_14 = arith.constant 0 : index
    %c0_15 = arith.constant 0 : index
    %33 = vector.load %arg5[%c0_14, %c0_15] : memref<512x16xbf16, #tpu.memory_space<vmem>>, vector<512x16xbf16>
    tpu.vector_store %arg5[%c0_14, %c0_15], %32 {strides = array<i32>} : memref<512x16xbf16, #tpu.memory_space<vmem>>, vector<512x16xbf16>,
    return
  }
  func.func @transform_0(%arg0: i32) -> (i32, i32) {
    %c0_i32 = arith.constant 0 : i32
    %c0_i32_0 = arith.constant 0 : i32
    %c0_i32_1 = arith.constant 0 : i32
    return %c0_i32, %c0_i32_0 : i32, i32
  }
  func.func @transform_1(%arg0: i32) -> (i32, i32) {
    %c0_i32 = arith.constant 0 : i32
    %c0_i32_0 = arith.constant 0 : i32
    %c0_i32_1 = arith.constant 0 : i32
    return %c0_i32, %c0_i32_0 : i32, i32
  }
  func.func @transform_2(%arg0: i32) -> (i32, i32) {
    %c0_i32 = arith.constant 0 : i32
    %c0_i32_0 = arith.constant 0 : i32
    %c0_i32_1 = arith.constant 0 : i32
    return %c0_i32, %c0_i32_0 : i32, i32
  }
  func.func @transform_3(%arg0: i32) -> (i32, i32) {
    %c0_i32 = arith.constant 0 : i32
    %c0_i32_0 = arith.constant 0 : i32
    %c0_i32_1 = arith.constant 0 : i32
    return %c0_i32, %c0_i32_0 : i32, i32
  }
  func.func @transform_4(%arg0: i32) -> (i32, i32) {
    %c0_i32 = arith.constant 0 : i32
    %c0_i32_0 = arith.constant 0 : i32
    %c0_i32_1 = arith.constant 0 : i32
    return %c0_i32, %c0_i32_0 : i32, i32
  }
}

module attributes {stable_mosaic.version = 11 : i64} {
  func.func @_gemm_bn_lrelu_kernel(%arg0: i32, %arg1: memref<128x256xbf16, #tpu.memory_space<vmem>>, %arg2: memref<256x128xbf16, #tpu.memory_space<vmem>>, %arg3: memref<1x128xf32, #tpu.memory_space<vmem>>, %arg4: memref<1x128xf32, #tpu.memory_space<vmem>>, %arg5: memref<128x32xbf16, #tpu.memory_space<vmem>>) attributes {dimension_semantics = [#tpu.dimension_semantics<arbitrary>], iteration_bounds = array<i64: 1>, scalar_prefetch = 0 : i64, scratch_operands = 0 : i64, tpu.core_type = #tpu.core_type<tc>, window_params = [{pipeline_mode = #tpu.pipeline_mode<synchronous>, transform_indices = @transform_0, window_bounds = array<i64: 128, 256>}, {pipeline_mode = #tpu.pipeline_mode<synchronous>, transform_indices = @transform_1, window_bounds = array<i64: 256, 128>}, {pipeline_mode = #tpu.pipeline_mode<synchronous>, transform_indices = @transform_2, window_bounds = array<i64: 1, 128>}, {pipeline_mode = #tpu.pipeline_mode<synchronous>, transform_indices = @transform_3, window_bounds = array<i64: 1, 128>}, {pipeline_mode = #tpu.pipeline_mode<synchronous>, transform_indices = @transform_4, window_bounds = array<i64: 128, 32>}]} {
    %c0 = arith.constant 0 : index
    %c0_0 = arith.constant 0 : index
    %0 = vector.load %arg1[%c0, %c0_0] : memref<128x256xbf16, #tpu.memory_space<vmem>>, vector<128x256xbf16>
    %c0_1 = arith.constant 0 : index
    %c0_2 = arith.constant 0 : index
    %1 = vector.load %arg2[%c0_1, %c0_2] : memref<256x128xbf16, #tpu.memory_space<vmem>>, vector<256x128xbf16>
    %cst = arith.constant dense<0.000000e+00> : vector<128x128xf32>
    %2 = tpu.matmul %0, %1, %cst {dimension_numbers = #tpu.dot_dimension_numbers<[1], [0], [0], [1], [0, 0, 1, 1], [], []>} : vector<128x256xbf16>, vector<256x128xbf16>, vector<128x128xf32> -> vector<128x128xf32>
    %cst_3 = arith.constant dense<0.000000e+00> : vector<128xf32>
    %3 = vector.multi_reduction <add>, %2, %cst_3 [0] : vector<128x128xf32> to vector<128xf32>
    %4 = vector.shape_cast %3 : vector<128xf32> to vector<1x128xf32>
    %cst_4 = arith.constant 1.280000e+02 : f32
    %5 = vector.broadcast %cst_4 : f32 to vector<1x128xf32>
    %6 = arith.divf %4, %5 : vector<1x128xf32>
    %7 = vector.broadcast %6 : vector<1x128xf32> to vector<128x128xf32>
    %8 = arith.subf %2, %7 : vector<128x128xf32>
    %9 = arith.mulf %8, %8 : vector<128x128xf32>
    %cst_5 = arith.constant dense<0.000000e+00> : vector<128xf32>
    %10 = vector.multi_reduction <add>, %9, %cst_5 [0] : vector<128x128xf32> to vector<128xf32>
    %11 = vector.shape_cast %10 : vector<128xf32> to vector<1x128xf32>
    %cst_6 = arith.constant 1.280000e+02 : f32
    %12 = vector.broadcast %cst_6 : f32 to vector<1x128xf32>
    %13 = arith.divf %11, %12 : vector<1x128xf32>
    %c0_7 = arith.constant 0 : index
    %c0_8 = arith.constant 0 : index
    %14 = vector.load %arg3[%c0_7, %c0_8] : memref<1x128xf32, #tpu.memory_space<vmem>>, vector<1x128xf32>
    %cst_9 = arith.constant 9.99999974E-6 : f32
    %15 = vector.broadcast %cst_9 : f32 to vector<1x128xf32>
    %16 = arith.addf %13, %15 : vector<1x128xf32>
    %17 = math.rsqrt %16 : vector<1x128xf32>
    %18 = arith.mulf %14, %17 : vector<1x128xf32>
    %c0_10 = arith.constant 0 : index
    %c0_11 = arith.constant 0 : index
    %19 = vector.load %arg4[%c0_10, %c0_11] : memref<1x128xf32, #tpu.memory_space<vmem>>, vector<1x128xf32>
    %20 = arith.mulf %6, %18 : vector<1x128xf32>
    %21 = arith.subf %19, %20 : vector<1x128xf32>
    %22 = vector.broadcast %18 : vector<1x128xf32> to vector<128x128xf32>
    %23 = arith.mulf %2, %22 : vector<128x128xf32>
    %24 = vector.broadcast %21 : vector<1x128xf32> to vector<128x128xf32>
    %25 = arith.addf %23, %24 : vector<128x128xf32>
    %cst_12 = arith.constant 0.000000e+00 : f32
    %26 = vector.broadcast %cst_12 : f32 to vector<128x128xf32>
    %27 = arith.cmpf oge, %25, %26 : vector<128x128xf32>
    %cst_13 = arith.constant 2.000000e-01 : f32
    %28 = vector.broadcast %cst_13 : f32 to vector<128x128xf32>
    %29 = arith.mulf %28, %25 : vector<128x128xf32>
    %30 = arith.select %27, %25, %29 : vector<128x128xi1>, vector<128x128xf32>
    %31 = vector.extract_strided_slice %30 {offsets = [0, 0], sizes = [128, 32], strides = [1, 1]} : vector<128x128xf32> to vector<128x32xf32>
    %32 = arith.truncf %31 : vector<128x32xf32> to vector<128x32xbf16>
    %c0_14 = arith.constant 0 : index
    %c0_15 = arith.constant 0 : index
    %33 = vector.load %arg5[%c0_14, %c0_15] : memref<128x32xbf16, #tpu.memory_space<vmem>>, vector<128x32xbf16>
    tpu.vector_store %arg5[%c0_14, %c0_15], %32 {strides = array<i32>} : memref<128x32xbf16, #tpu.memory_space<vmem>>, vector<128x32xbf16>,
    return
  }
  func.func @transform_0(%arg0: i32) -> (i32, i32) {
    %c0_i32 = arith.constant 0 : i32
    %c0_i32_0 = arith.constant 0 : i32
    %c0_i32_1 = arith.constant 0 : i32
    return %c0_i32, %c0_i32_0 : i32, i32
  }
  func.func @transform_1(%arg0: i32) -> (i32, i32) {
    %c0_i32 = arith.constant 0 : i32
    %c0_i32_0 = arith.constant 0 : i32
    %c0_i32_1 = arith.constant 0 : i32
    return %c0_i32, %c0_i32_0 : i32, i32
  }
  func.func @transform_2(%arg0: i32) -> (i32, i32) {
    %c0_i32 = arith.constant 0 : i32
    %c0_i32_0 = arith.constant 0 : i32
    %c0_i32_1 = arith.constant 0 : i32
    return %c0_i32, %c0_i32_0 : i32, i32
  }
  func.func @transform_3(%arg0: i32) -> (i32, i32) {
    %c0_i32 = arith.constant 0 : i32
    %c0_i32_0 = arith.constant 0 : i32
    %c0_i32_1 = arith.constant 0 : i32
    return %c0_i32, %c0_i32_0 : i32, i32
  }
  func.func @transform_4(%arg0: i32) -> (i32, i32) {
    %c0_i32 = arith.constant 0 : i32
    %c0_i32_0 = arith.constant 0 : i32
    %c0_i32_1 = arith.constant 0 : i32
    return %c0_i32, %c0_i32_0 : i32, i32
  }
}

module attributes {stable_mosaic.version = 11 : i64} {
  func.func @_gemm_bn_lrelu_kernel(%arg0: i32, %arg1: memref<32x512xbf16, #tpu.memory_space<vmem>>, %arg2: memref<512x128xbf16, #tpu.memory_space<vmem>>, %arg3: memref<1x128xf32, #tpu.memory_space<vmem>>, %arg4: memref<1x128xf32, #tpu.memory_space<vmem>>, %arg5: memref<32x64xbf16, #tpu.memory_space<vmem>>) attributes {dimension_semantics = [#tpu.dimension_semantics<arbitrary>], iteration_bounds = array<i64: 1>, scalar_prefetch = 0 : i64, scratch_operands = 0 : i64, tpu.core_type = #tpu.core_type<tc>, window_params = [{pipeline_mode = #tpu.pipeline_mode<synchronous>, transform_indices = @transform_0, window_bounds = array<i64: 32, 512>}, {pipeline_mode = #tpu.pipeline_mode<synchronous>, transform_indices = @transform_1, window_bounds = array<i64: 512, 128>}, {pipeline_mode = #tpu.pipeline_mode<synchronous>, transform_indices = @transform_2, window_bounds = array<i64: 1, 128>}, {pipeline_mode = #tpu.pipeline_mode<synchronous>, transform_indices = @transform_3, window_bounds = array<i64: 1, 128>}, {pipeline_mode = #tpu.pipeline_mode<synchronous>, transform_indices = @transform_4, window_bounds = array<i64: 32, 64>}]} {
    %c0 = arith.constant 0 : index
    %c0_0 = arith.constant 0 : index
    %0 = vector.load %arg1[%c0, %c0_0] : memref<32x512xbf16, #tpu.memory_space<vmem>>, vector<32x512xbf16>
    %c0_1 = arith.constant 0 : index
    %c0_2 = arith.constant 0 : index
    %1 = vector.load %arg2[%c0_1, %c0_2] : memref<512x128xbf16, #tpu.memory_space<vmem>>, vector<512x128xbf16>
    %cst = arith.constant dense<0.000000e+00> : vector<32x128xf32>
    %2 = tpu.matmul %0, %1, %cst {dimension_numbers = #tpu.dot_dimension_numbers<[1], [0], [0], [1], [0, 0, 1, 1], [], []>} : vector<32x512xbf16>, vector<512x128xbf16>, vector<32x128xf32> -> vector<32x128xf32>
    %cst_3 = arith.constant dense<0.000000e+00> : vector<128xf32>
    %3 = vector.multi_reduction <add>, %2, %cst_3 [0] : vector<32x128xf32> to vector<128xf32>
    %4 = vector.shape_cast %3 : vector<128xf32> to vector<1x128xf32>
    %cst_4 = arith.constant 3.200000e+01 : f32
    %5 = vector.broadcast %cst_4 : f32 to vector<1x128xf32>
    %6 = arith.divf %4, %5 : vector<1x128xf32>
    %7 = vector.broadcast %6 : vector<1x128xf32> to vector<32x128xf32>
    %8 = arith.subf %2, %7 : vector<32x128xf32>
    %9 = arith.mulf %8, %8 : vector<32x128xf32>
    %cst_5 = arith.constant dense<0.000000e+00> : vector<128xf32>
    %10 = vector.multi_reduction <add>, %9, %cst_5 [0] : vector<32x128xf32> to vector<128xf32>
    %11 = vector.shape_cast %10 : vector<128xf32> to vector<1x128xf32>
    %cst_6 = arith.constant 3.200000e+01 : f32
    %12 = vector.broadcast %cst_6 : f32 to vector<1x128xf32>
    %13 = arith.divf %11, %12 : vector<1x128xf32>
    %c0_7 = arith.constant 0 : index
    %c0_8 = arith.constant 0 : index
    %14 = vector.load %arg3[%c0_7, %c0_8] : memref<1x128xf32, #tpu.memory_space<vmem>>, vector<1x128xf32>
    %cst_9 = arith.constant 9.99999974E-6 : f32
    %15 = vector.broadcast %cst_9 : f32 to vector<1x128xf32>
    %16 = arith.addf %13, %15 : vector<1x128xf32>
    %17 = math.rsqrt %16 : vector<1x128xf32>
    %18 = arith.mulf %14, %17 : vector<1x128xf32>
    %c0_10 = arith.constant 0 : index
    %c0_11 = arith.constant 0 : index
    %19 = vector.load %arg4[%c0_10, %c0_11] : memref<1x128xf32, #tpu.memory_space<vmem>>, vector<1x128xf32>
    %20 = arith.mulf %6, %18 : vector<1x128xf32>
    %21 = arith.subf %19, %20 : vector<1x128xf32>
    %22 = vector.broadcast %18 : vector<1x128xf32> to vector<32x128xf32>
    %23 = arith.mulf %2, %22 : vector<32x128xf32>
    %24 = vector.broadcast %21 : vector<1x128xf32> to vector<32x128xf32>
    %25 = arith.addf %23, %24 : vector<32x128xf32>
    %cst_12 = arith.constant 0.000000e+00 : f32
    %26 = vector.broadcast %cst_12 : f32 to vector<32x128xf32>
    %27 = arith.cmpf oge, %25, %26 : vector<32x128xf32>
    %cst_13 = arith.constant 2.000000e-01 : f32
    %28 = vector.broadcast %cst_13 : f32 to vector<32x128xf32>
    %29 = arith.mulf %28, %25 : vector<32x128xf32>
    %30 = arith.select %27, %25, %29 : vector<32x128xi1>, vector<32x128xf32>
    %31 = vector.extract_strided_slice %30 {offsets = [0, 0], sizes = [32, 64], strides = [1, 1]} : vector<32x128xf32> to vector<32x64xf32>
    %32 = arith.truncf %31 : vector<32x64xf32> to vector<32x64xbf16>
    %c0_14 = arith.constant 0 : index
    %c0_15 = arith.constant 0 : index
    %33 = vector.load %arg5[%c0_14, %c0_15] : memref<32x64xbf16, #tpu.memory_space<vmem>>, vector<32x64xbf16>
    tpu.vector_store %arg5[%c0_14, %c0_15], %32 {strides = array<i32>} : memref<32x64xbf16, #tpu.memory_space<vmem>>, vector<32x64xbf16>,
    return
  }
  func.func @transform_0(%arg0: i32) -> (i32, i32) {
    %c0_i32 = arith.constant 0 : i32
    %c0_i32_0 = arith.constant 0 : i32
    %c0_i32_1 = arith.constant 0 : i32
    return %c0_i32, %c0_i32_0 : i32, i32
  }
  func.func @transform_1(%arg0: i32) -> (i32, i32) {
    %c0_i32 = arith.constant 0 : i32
    %c0_i32_0 = arith.constant 0 : i32
    %c0_i32_1 = arith.constant 0 : i32
    return %c0_i32, %c0_i32_0 : i32, i32
  }
  func.func @transform_2(%arg0: i32) -> (i32, i32) {
    %c0_i32 = arith.constant 0 : i32
    %c0_i32_0 = arith.constant 0 : i32
    %c0_i32_1 = arith.constant 0 : i32
    return %c0_i32, %c0_i32_0 : i32, i32
  }
  func.func @transform_3(%arg0: i32) -> (i32, i32) {
    %c0_i32 = arith.constant 0 : i32
    %c0_i32_0 = arith.constant 0 : i32
    %c0_i32_1 = arith.constant 0 : i32
    return %c0_i32, %c0_i32_0 : i32, i32
  }
  func.func @transform_4(%arg0: i32) -> (i32, i32) {
    %c0_i32 = arith.constant 0 : i32
    %c0_i32_0 = arith.constant 0 : i32
    %c0_i32_1 = arith.constant 0 : i32
    return %c0_i32, %c0_i32_0 : i32, i32
  }
}

</mosaic_0001>

<llo_original>
// kernel: discriminator_forward.4
$region0: #{discriminator_forward.4}
  #allocation0 [shape = 'u32[]', space=smem, size = 0x4, offset = 0x4, fixed_abs, tag = 'smem constant byte address 0x4 - core index']
  #allocation1 [shape = 'u32[144,128]{1,0:T(1,128)}', space=vmem, size = 0x12000, scoped, tag = 'internal scratch']
  %s0 = inlined_call_operand.vmem [shape: bf16[2048,128], index: 0, kind: input, shape index: {}]
  %s1 = inlined_call_operand.vmem [shape: bf16[128,128], index: 1, kind: input, shape index: {}]
  %s2 = inlined_call_operand.vmem [shape: bf16[2048,8], index: 2, kind: output, shape index: {}]
  %s3 = sld [smem:[#allocation0]]
  $region41: #{discriminator_forward.4} parent=0
    _
  %s5 = ssub.s32 1, %s3
  %s6 = scalar_select 0, %s5, %s3
  loop: start=0, step=1, limit=6
  $region2: #{discriminator_forward.4} parent=0 // loop_pre_header
    _
  $region3: #{discriminator_forward.4} parent=0 // loop_header
    %s8 = sphi 0, %s12
    %p9 = scmp.ge.s32.totalorder %s8, 6
    %s18 = sphi 0, %s20
    %s21 = sphi 0, %s18
    %s22 = sphi 0, %s21
    %s38 = sphi 0, %s22
    %s42 = sphi 0, %s42
    %s44 = sphi 0, %s42
    %s45 = sphi 0, %s44
    %s59 = sphi 0, %s45
    %s65 = sphi 0, %s67
    %s68 = sphi 0, %s65
    %s69 = sphi 0, %s68
    %s85 = sphi 0, %s69
  $region4: #{discriminator_forward.4} parent=0 // loop_header_branch
    %11 = sbr.rel (%p9) target = $region8
  $region5: #{discriminator_forward.4} parent=0 // loop_body
    %s13 = ssub.s32 %s8, 1
    %s14 = ssub.s32 %s8, 2
    %s15 = sadd.s32 %s8, 1
    %s16 = ssub.s32 %s8, %s15
    %p17 = scmp.eq.s32.totalorder %s16, 0
    %s19 = sadd.s32 %s18, 1
    %s20 = scalar_select %p17, %s18, %s19
    %p23 = pneg %p17
    %p24 = scmp.eq.s32.totalorder %s8, 3
    %p25 = por %p23, %p24
    %p26 = scmp.ne.s32.totalorder %s18, %s21
    %p27 = scmp.eq.s32.totalorder %s8, 0
    %p28 = por %p26, %p27
    %p29 = scmp.ne.s32.totalorder %s18, %s21
    %p30 = scmp.eq.s32.totalorder %s13, 3
    %p31 = por %p29, %p30
    %p32 = scmp.ne.s32.totalorder %s21, %s22
    %p33 = scmp.eq.s32.totalorder %s13, 0
    %p34 = por %p32, %p33
    %p35 = scmp.ne.s32.totalorder %s21, %s22
    %p36 = scmp.eq.s32.totalorder %s14, 3
    %p37 = por %p35, %p36
    %p39 = scmp.ne.s32.totalorder %s22, %s38
    %p40 = scmp.eq.s32.totalorder %s14, 0
    %p41 = por %p39, %p40
    %s43 = sadd.s32 %s42, 1
    %p46 = scmp.eq.s32.totalorder %s8, 3
    %p47 = scmp.ne.s32.totalorder %s42, %s44
    %p48 = scmp.eq.s32.totalorder %s8, 0
    %p49 = por %p47, %p48
    %p50 = scmp.ne.s32.totalorder %s42, %s44
    %p51 = scmp.eq.s32.totalorder %s13, 3
    %p52 = por %p50, %p51
    %p53 = scmp.ne.s32.totalorder %s44, %s45
    %p54 = scmp.eq.s32.totalorder %s13, 0
    %p55 = por %p53, %p54
    %p56 = scmp.ne.s32.totalorder %s44, %s45
    %p57 = scmp.eq.s32.totalorder %s14, 3
    %p58 = por %p56, %p57
    %p60 = scmp.ne.s32.totalorder %s45, %s59
    %p61 = scmp.eq.s32.totalorder %s14, 0
    %p62 = por %p60, %p61
    %s63 = ssub.s32 %s8, %s15
    %p64 = scmp.eq.s32.totalorder %s63, 0
    %s66 = sadd.s32 %s65, 1
    %s67 = scalar_select %p64, %s65, %s66
    %p70 = pneg %p64
    %p71 = scmp.eq.s32.totalorder %s8, 3
    %p72 = por %p70, %p71
    %p73 = scmp.ne.s32.totalorder %s65, %s68
    %p74 = scmp.eq.s32.totalorder %s8, 0
    %p75 = por %p73, %p74
    %p76 = scmp.ne.s32.totalorder %s65, %s68
    %p77 = scmp.eq.s32.totalorder %s13, 3
    %p78 = por %p76, %p77
    %p79 = scmp.ne.s32.totalorder %s68, %s69
    %p80 = scmp.eq.s32.totalorder %s13, 0
    %p81 = por %p79, %p80
    %p82 = scmp.ne.s32.totalorder %s68, %s69
    %p83 = scmp.eq.s32.totalorder %s14, 3
    %p84 = por %p82, %p83
    %p86 = scmp.ne.s32.totalorder %s69, %s85
    %p87 = scmp.eq.s32.totalorder %s14, 0
    %p88 = por %p86, %p87
    %p89 = scmp.le.s32.totalorder 1, %s8
    %p90 = scmp.lt.s32.totalorder %s8, 5
    %p91 = pnand %p89, %p90
    %p92 = pneg %p91
    // Predicated region
    $region9: #{discriminator_forward.4} parent=5 // pred_check
      _
    $region10: #{discriminator_forward.4} parent=5 // pred_check_branch
      %94 = sbr.rel (%p91) target = $region12
    $region11: #{discriminator_forward.4} parent=5 // pred_region
      %s95 = ssub.s32 %s8, 1
      // Predicated region
      $region13: #{discriminator_forward.4} parent=11 // pred_check
        %p96 = pneg %p55
      $region14: #{discriminator_forward.4} parent=11 // pred_check_branch
        %98 = sbr.rel (%p96) target = $region16
      $region15: #{discriminator_forward.4} parent=11 // pred_region
        _
      $region16: #{discriminator_forward.4} parent=11 // pred_fallthru
        _
    $region12: #{discriminator_forward.4} parent=5 // pred_fallthru
      _
    %p99 = scmp.lt.s32.totalorder %s8, 4
    // Predicated region
    $region17: #{discriminator_forward.4} parent=5 // pred_check
      %p100 = pneg %p99
    $region18: #{discriminator_forward.4} parent=5 // pred_check_branch
      %102 = sbr.rel (%p100) target = $region20
    $region19: #{discriminator_forward.4} parent=5 // pred_region
      // Predicated region
      $region21: #{discriminator_forward.4} parent=19 // pred_check
        %p103 = pneg %p28
      $region22: #{discriminator_forward.4} parent=19 // pred_check_branch
        %105 = sbr.rel (%p103) target = $region24
      $region23: #{discriminator_forward.4} parent=19 // pred_region
        %s106 = smul.u32 64, %s8
        %p107 = scmp.lt.s32.totalorder %s106, 255
        %s108 = scalar_select %p107, %s106, 255
        %s109 = smul.addr %s108, 4
        %s110 = scalar_lea.vmem %s0, %s109
        %s111 = smul.u32 64, %s8
      $region24: #{discriminator_forward.4} parent=19 // pred_fallthru
        _
    $region20: #{discriminator_forward.4} parent=5 // pred_fallthru
      _
    %p112 = scmp.le.s32.totalorder 1, %s8
    %p113 = scmp.lt.s32.totalorder %s8, 5
    %p114 = pnand %p112, %p113
    %p115 = pneg %p114
    // Predicated region
    $region25: #{discriminator_forward.4} parent=5 // pred_check
      _
    $region26: #{discriminator_forward.4} parent=5 // pred_check_branch
      %117 = sbr.rel (%p114) target = $region28
    $region27: #{discriminator_forward.4} parent=5 // pred_region
      %s118 = ssub.s32 %s8, 1
      %s119 = smul.u32 64, %s13
      %p120 = scmp.lt.s32.totalorder %s119, 255
      %s121 = scalar_select %p120, %s119, 255
      %s122 = smul.addr %s121, 4
      %s123 = scalar_lea.vmem %s0, %s122
      %p124 = pneg %p34
      %p125 = pneg %p31
      %p126 = pneg %p55
      %p127 = pneg %p52
      %p128 = pneg %p81
      %p129 = pneg %p78
      %s130 = smul.u32 64, %s13
      %p131 = scmp.lt.s32.totalorder %s130, 255
      %s132 = scalar_select %p131, %s130, 255
      %s133 = smul.addr %s132, 4
      %s134 = scalar_lea.vmem %s2, %s133
      %s135 = smul.u32 64, %s13
      %p136 = scmp.lt.s32.totalorder %s135, 255
      %s137 = scalar_select %p136, %s135, 255
      %s138 = smul.addr %s137, 4
      %s139 = scalar_lea.vmem %s0, %s138
      %s140 = smul.u32 64, %s13
      %s141 = smul.u32 64, %s13
      %p142 = scmp.lt.s32.totalorder %s141, 255
      %s143 = scalar_select %p142, %s141, 255
      %s144 = smul.addr %s143, 4
      %s145 = scalar_lea.vmem %s2, %s144
      %s146 = smul.u32 64, %s13
      %v148 = vld [vmem:[%s139] sm:$0xf]
      %v149 = vld [vmem:[%s139 + $0x4] sm:$0xf]
      %v150 = vld [vmem:[%s139 + $0x8] sm:$0xf]
      %v151 = vld [vmem:[%s139 + $0xc] sm:$0xf]
      %v152 = vld [vmem:[%s139 + $0x10] sm:$0xf]
      %v153 = vld [vmem:[%s139 + $0x14] sm:$0xf]
      %v154 = vld [vmem:[%s139 + $0x18] sm:$0xf]
      %v155 = vld [vmem:[%s139 + $0x1c] sm:$0xf]
      %v156 = vld [vmem:[%s139 + $0x20] sm:$0xf]
      %v157 = vld [vmem:[%s139 + $0x24] sm:$0xf]
      %v158 = vld [vmem:[%s139 + $0x28] sm:$0xf]
      %v159 = vld [vmem:[%s139 + $0x2c] sm:$0xf]
      %v160 = vld [vmem:[%s139 + $0x30] sm:$0xf]
      %v161 = vld [vmem:[%s139 + $0x34] sm:$0xf]
      %v162 = vld [vmem:[%s139 + $0x38] sm:$0xf]
      %v163 = vld [vmem:[%s139 + $0x3c] sm:$0xf]
      %v164 = vld [vmem:[%s139 + $0x40] sm:$0xf]
      %v165 = vld [vmem:[%s139 + $0x44] sm:$0xf]
      %v166 = vld [vmem:[%s139 + $0x48] sm:$0xf]
      %v167 = vld [vmem:[%s139 + $0x4c] sm:$0xf]
      %v168 = vld [vmem:[%s139 + $0x50] sm:$0xf]
      %v169 = vld [vmem:[%s139 + $0x54] sm:$0xf]
      %v170 = vld [vmem:[%s139 + $0x58] sm:$0xf]
      %v171 = vld [vmem:[%s139 + $0x5c] sm:$0xf]
      %v172 = vld [vmem:[%s139 + $0x60] sm:$0xf]
      %v173 = vld [vmem:[%s139 + $0x64] sm:$0xf]
      %v174 = vld [vmem:[%s139 + $0x68] sm:$0xf]
      %v175 = vld [vmem:[%s139 + $0x6c] sm:$0xf]
      %v176 = vld [vmem:[%s139 + $0x70] sm:$0xf]
      %v177 = vld [vmem:[%s139 + $0x74] sm:$0xf]
      %v178 = vld [vmem:[%s139 + $0x78] sm:$0xf]
      %v179 = vld [vmem:[%s139 + $0x7c] sm:$0xf]
      %v180 = vld [vmem:[%s139 + $0x80] sm:$0xf]
      %v181 = vld [vmem:[%s139 + $0x84] sm:$0xf]
      %v182 = vld [vmem:[%s139 + $0x88] sm:$0xf]
      %v183 = vld [vmem:[%s139 + $0x8c] sm:$0xf]
      %v184 = vld [vmem:[%s139 + $0x90] sm:$0xf]
      %v185 = vld [vmem:[%s139 + $0x94] sm:$0xf]
      %v186 = vld [vmem:[%s139 + $0x98] sm:$0xf]
      %v187 = vld [vmem:[%s139 + $0x9c] sm:$0xf]
      %v188 = vld [vmem:[%s139 + $0xa0] sm:$0xf]
      %v189 = vld [vmem:[%s139 + $0xa4] sm:$0xf]
      %v190 = vld [vmem:[%s139 + $0xa8] sm:$0xf]
      %v191 = vld [vmem:[%s139 + $0xac] sm:$0xf]
      %v192 = vld [vmem:[%s139 + $0xb0] sm:$0xf]
      %v193 = vld [vmem:[%s139 + $0xb4] sm:$0xf]
      %v194 = vld [vmem:[%s139 + $0xb8] sm:$0xf]
      %v195 = vld [vmem:[%s139 + $0xbc] sm:$0xf]
      %v196 = vld [vmem:[%s139 + $0xc0] sm:$0xf]
      %v197 = vld [vmem:[%s139 + $0xc4] sm:$0xf]
      %v198 = vld [vmem:[%s139 + $0xc8] sm:$0xf]
      %v199 = vld [vmem:[%s139 + $0xcc] sm:$0xf]
      %v200 = vld [vmem:[%s139 + $0xd0] sm:$0xf]
      %v201 = vld [vmem:[%s139 + $0xd4] sm:$0xf]
      %v202 = vld [vmem:[%s139 + $0xd8] sm:$0xf]
      %v203 = vld [vmem:[%s139 + $0xdc] sm:$0xf]
      %v204 = vld [vmem:[%s139 + $0xe0] sm:$0xf]
      %v205 = vld [vmem:[%s139 + $0xe4] sm:$0xf]
      %v206 = vld [vmem:[%s139 + $0xe8] sm:$0xf]
      %v207 = vld [vmem:[%s139 + $0xec] sm:$0xf]
      %v208 = vld [vmem:[%s139 + $0xf0] sm:$0xf]
      %v209 = vld [vmem:[%s139 + $0xf4] sm:$0xf]
      %v210 = vld [vmem:[%s139 + $0xf8] sm:$0xf]
      %v211 = vld [vmem:[%s139 + $0xfc] sm:$0xf]
      %v212 = vld [vmem:[%s1] sm:$0xf]
      %v213 = vld [vmem:[%s1 + $0x4] sm:$0xf]
      %v214 = vld [vmem:[%s1 + $0x8] sm:$0xf]
      %v215 = vld [vmem:[%s1 + $0xc] sm:$0xf]
      %v216 = vld [vmem:[%s1 + $0x10] sm:$0xf]
      %v217 = vld [vmem:[%s1 + $0x14] sm:$0xf]
      %v218 = vld [vmem:[%s1 + $0x18] sm:$0xf]
      %v219 = vld [vmem:[%s1 + $0x1c] sm:$0xf]
      %v220 = vld [vmem:[%s1 + $0x20] sm:$0xf]
      %v221 = vld [vmem:[%s1 + $0x24] sm:$0xf]
      %v222 = vld [vmem:[%s1 + $0x28] sm:$0xf]
      %v223 = vld [vmem:[%s1 + $0x2c] sm:$0xf]
      %v224 = vld [vmem:[%s1 + $0x30] sm:$0xf]
      %v225 = vld [vmem:[%s1 + $0x34] sm:$0xf]
      %v226 = vld [vmem:[%s1 + $0x38] sm:$0xf]
      %v227 = vld [vmem:[%s1 + $0x3c] sm:$0xf]
      %v292 = vunpack.c.l.b16 %v148
      %v293 = vunpack.c.l.b16 %v149
      %v294 = vunpack.c.l.b16 %v150
      %v295 = vunpack.c.l.b16 %v151
      %v296 = vunpack.c.l.b16 %v152
      %v297 = vunpack.c.l.b16 %v153
      %v298 = vunpack.c.l.b16 %v154
      %v299 = vunpack.c.l.b16 %v155
      %v300 = vunpack.c.l.b16 %v156
      %v301 = vunpack.c.l.b16 %v157
      %v302 = vunpack.c.l.b16 %v158
      %v303 = vunpack.c.l.b16 %v159
      %v304 = vunpack.c.l.b16 %v160
      %v305 = vunpack.c.l.b16 %v161
      %v306 = vunpack.c.l.b16 %v162
      %v307 = vunpack.c.l.b16 %v163
      %v308 = vunpack.c.l.b16 %v164
      %v309 = vunpack.c.l.b16 %v165
      %v310 = vunpack.c.l.b16 %v166
      %v311 = vunpack.c.l.b16 %v167
      %v312 = vunpack.c.l.b16 %v168
      %v313 = vunpack.c.l.b16 %v169
      %v314 = vunpack.c.l.b16 %v170
      %v315 = vunpack.c.l.b16 %v171
      %v316 = vunpack.c.l.b16 %v172
      %v317 = vunpack.c.l.b16 %v173
      %v318 = vunpack.c.l.b16 %v174
      %v319 = vunpack.c.l.b16 %v175
      %v320 = vunpack.c.l.b16 %v176
      %v321 = vunpack.c.l.b16 %v177
      %v322 = vunpack.c.l.b16 %v178
      %v323 = vunpack.c.l.b16 %v179
      %v324 = vunpack.c.l.b16 %v180
      %v325 = vunpack.c.l.b16 %v181
      %v326 = vunpack.c.l.b16 %v182
      %v327 = vunpack.c.l.b16 %v183
      %v328 = vunpack.c.l.b16 %v184
      %v329 = vunpack.c.l.b16 %v185
      %v330 = vunpack.c.l.b16 %v186
      %v331 = vunpack.c.l.b16 %v187
      %v332 = vunpack.c.l.b16 %v188
      %v333 = vunpack.c.l.b16 %v189
      %v334 = vunpack.c.l.b16 %v190
      %v335 = vunpack.c.l.b16 %v191
      %v336 = vunpack.c.l.b16 %v192
      %v337 = vunpack.c.l.b16 %v193
      %v338 = vunpack.c.l.b16 %v194
      %v339 = vunpack.c.l.b16 %v195
      %v340 = vunpack.c.l.b16 %v196
      %v341 = vunpack.c.l.b16 %v197
      %v342 = vunpack.c.l.b16 %v198
      %v343 = vunpack.c.l.b16 %v199
      %v344 = vunpack.c.l.b16 %v200
      %v345 = vunpack.c.l.b16 %v201
      %v346 = vunpack.c.l.b16 %v202
      %v347 = vunpack.c.l.b16 %v203
      %v348 = vunpack.c.l.b16 %v204
      %v349 = vunpack.c.l.b16 %v205
      %v350 = vunpack.c.l.b16 %v206
      %v351 = vunpack.c.l.b16 %v207
      %v352 = vunpack.c.l.b16 %v208
      %v353 = vunpack.c.l.b16 %v209
      %v354 = vunpack.c.l.b16 %v210
      %v355 = vunpack.c.l.b16 %v211
      %v356 = vpack.c.b16 %v293, %v292
      %v357 = vpack.c.b16 %v295, %v294
      %v358 = vpack.c.b16 %v297, %v296
      %v359 = vpack.c.b16 %v299, %v298
      %v360 = vpack.c.b16 %v301, %v300
      %v361 = vpack.c.b16 %v303, %v302
      %v362 = vpack.c.b16 %v305, %v304
      %v363 = vpack.c.b16 %v307, %v306
      %v364 = vpack.c.b16 %v309, %v308
      %v365 = vpack.c.b16 %v311, %v310
      %v366 = vpack.c.b16 %v313, %v312
      %v367 = vpack.c.b16 %v315, %v314
      %v368 = vpack.c.b16 %v317, %v316
      %v369 = vpack.c.b16 %v319, %v318
      %v370 = vpack.c.b16 %v321, %v320
      %v371 = vpack.c.b16 %v323, %v322
      %v372 = vpack.c.b16 %v325, %v324
      %v373 = vpack.c.b16 %v327, %v326
      %v374 = vpack.c.b16 %v329, %v328
      %v375 = vpack.c.b16 %v331, %v330
      %v376 = vpack.c.b16 %v333, %v332
      %v377 = vpack.c.b16 %v335, %v334
      %v378 = vpack.c.b16 %v337, %v336
      %v379 = vpack.c.b16 %v339, %v338
      %v380 = vpack.c.b16 %v341, %v340
      %v381 = vpack.c.b16 %v343, %v342
      %v382 = vpack.c.b16 %v345, %v344
      %v383 = vpack.c.b16 %v347, %v346
      %v384 = vpack.c.b16 %v349, %v348
      %v385 = vpack.c.b16 %v351, %v350
      %v386 = vpack.c.b16 %v353, %v352
      %v387 = vpack.c.b16 %v355, %v354
      %v436 = vunpack.c.l.b16 %v212
      %v437 = vunpack.c.l.b16 %v213
      %v438 = vunpack.c.l.b16 %v214
      %v439 = vunpack.c.l.b16 %v215
      %v440 = vunpack.c.l.b16 %v216
      %v441 = vunpack.c.l.b16 %v217
      %v442 = vunpack.c.l.b16 %v218
      %v443 = vunpack.c.l.b16 %v219
      %v444 = vunpack.c.l.b16 %v220
      %v445 = vunpack.c.l.b16 %v221
      %v446 = vunpack.c.l.b16 %v222
      %v447 = vunpack.c.l.b16 %v223
      %v448 = vunpack.c.l.b16 %v224
      %v449 = vunpack.c.l.b16 %v225
      %v450 = vunpack.c.l.b16 %v226
      %v451 = vunpack.c.l.b16 %v227
      %v452 = vpack.c.b16 %v437, %v436
      %v453 = vpack.c.b16 %v439, %v438
      %v454 = vpack.c.b16 %v441, %v440
      %v455 = vpack.c.b16 %v443, %v442
      %v456 = vpack.c.b16 %v445, %v444
      %v457 = vpack.c.b16 %v447, %v446
      %v458 = vpack.c.b16 %v449, %v448
      %v459 = vpack.c.b16 %v451, %v450
      %468 = vmatprep.subr.bf16.mxu0 0
      %469 = vmatpush1.bf16.msra.mxu0 %v459
      %470 = vmatprep.subr.bf16.mxu0 0
      %471 = vmatpush1.bf16.msra.mxu0 %v458
      %472 = vmatprep.subr.bf16.mxu0 0
      %473 = vmatpush1.bf16.msra.mxu0 %v457
      %474 = vmatprep.subr.bf16.mxu0 0
      %475 = vmatpush1.bf16.msra.mxu0 %v456
      %476 = vmatprep.subr.bf16.mxu0 0
      %477 = vmatpush1.bf16.msra.mxu0 %v455
      %478 = vmatprep.subr.bf16.mxu0 0
      %479 = vmatpush1.bf16.msra.mxu0 %v454
      %480 = vmatprep.subr.bf16.mxu0 0
      %481 = vmatpush1.bf16.msra.mxu0 %v453
      %482 = vmatprep.subr.bf16.mxu0 0
      %483 = vmatpush1.bf16.msra.mxu0 %v452
      %484 = vmatprep.subr.bf16.mxu0 0
      %485 = vmatpush2.bf16.msra.mxu0 0
      %486 = vmatprep.subr.bf16.mxu0 0
      %487 = vmatpush2.bf16.msra.mxu0 0
      %488 = vmatprep.subr.bf16.mxu0 0
      %489 = vmatpush2.bf16.msra.mxu0 0
      %490 = vmatprep.subr.bf16.mxu0 0
      %491 = vmatpush2.bf16.msra.mxu0 0
      %492 = vmatprep.subr.bf16.mxu0 0
      %493 = vmatpush2.bf16.msra.mxu0 0
      %494 = vmatprep.subr.bf16.mxu0 0
      %495 = vmatpush2.bf16.msra.mxu0 0
      %496 = vmatprep.subr.bf16.mxu0 0
      %497 = vmatpush2.bf16.msra.mxu0 0
      %498 = vmatprep.subr.bf16.mxu0 0
      %499 = vmatpush2.bf16.msra.mxu0 0
      %500 = vmatprep.mubr.bf16.mxu0 0
      %501 = vmatmul.mubr.bf16.gmra.mxu0 %v356
      %v502 = vpop.f32.mrf.mxu0
      %v503 = vadd.f32 0.0, %v502
      %v504 = vpop.f32.mrf.mxu0
      %v505 = vpop.f32.mrf.mxu0
      %v506 = vadd.f32 0.0, %v505
      %v507 = vpop.f32.mrf.mxu0
      %508 = vmatprep.mubr.bf16.mxu0 0
      %509 = vmatmul.mubr.bf16.gmra.mxu0 %v357
      %v510 = vpop.f32.mrf.mxu0
      %v511 = vadd.f32 0.0, %v510
      %v512 = vpop.f32.mrf.mxu0
      %v513 = vpop.f32.mrf.mxu0
      %v514 = vadd.f32 0.0, %v513
      %v515 = vpop.f32.mrf.mxu0
      %516 = vmatprep.mubr.bf16.mxu0 0
      %517 = vmatmul.mubr.bf16.gmra.mxu0 %v358
      %v518 = vpop.f32.mrf.mxu0
      %v519 = vadd.f32 0.0, %v518
      %v520 = vpop.f32.mrf.mxu0
      %v521 = vpop.f32.mrf.mxu0
      %v522 = vadd.f32 0.0, %v521
      %v523 = vpop.f32.mrf.mxu0
      %524 = vmatprep.mubr.bf16.mxu0 0
      %525 = vmatmul.mubr.bf16.gmra.mxu0 %v359
      %v526 = vpop.f32.mrf.mxu0
      %v527 = vadd.f32 0.0, %v526
      %v528 = vpop.f32.mrf.mxu0
      %v529 = vpop.f32.mrf.mxu0
      %v530 = vadd.f32 0.0, %v529
      %v531 = vpop.f32.mrf.mxu0
      %532 = vmatprep.mubr.bf16.mxu0 0
      %533 = vmatmul.mubr.bf16.gmra.mxu0 %v360
      %v534 = vpop.f32.mrf.mxu0
      %v535 = vadd.f32 0.0, %v534
      %v536 = vpop.f32.mrf.mxu0
      %v537 = vpop.f32.mrf.mxu0
      %v538 = vadd.f32 0.0, %v537
      %v539 = vpop.f32.mrf.mxu0
      %540 = vmatprep.mubr.bf16.mxu0 0
      %541 = vmatmul.mubr.bf16.gmra.mxu0 %v361
      %v542 = vpop.f32.mrf.mxu0
      %v543 = vadd.f32 0.0, %v542
      %v544 = vpop.f32.mrf.mxu0
      %v545 = vpop.f32.mrf.mxu0
      %v546 = vadd.f32 0.0, %v545
      %v547 = vpop.f32.mrf.mxu0
      %548 = vmatprep.mubr.bf16.mxu0 0
      %549 = vmatmul.mubr.bf16.gmra.mxu0 %v362
      %v550 = vpop.f32.mrf.mxu0
      %v551 = vadd.f32 0.0, %v550
      %v552 = vpop.f32.mrf.mxu0
      %v553 = vpop.f32.mrf.mxu0
      %v554 = vadd.f32 0.0, %v553
      %v555 = vpop.f32.mrf.mxu0
      %556 = vmatprep.mubr.bf16.mxu0 0
      %557 = vmatmul.mubr.bf16.gmra.mxu0 %v363
      %v558 = vpop.f32.mrf.mxu0
      %v559 = vadd.f32 0.0, %v558
      %v560 = vpop.f32.mrf.mxu0
      %v561 = vpop.f32.mrf.mxu0
      %v562 = vadd.f32 0.0, %v561
      %v563 = vpop.f32.mrf.mxu0
      %564 = vmatprep.mubr.bf16.mxu0 0
      %565 = vmatmul.mubr.bf16.gmra.mxu0 %v364
      %v566 = vpop.f32.mrf.mxu0
      %v567 = vadd.f32 0.0, %v566
      %v568 = vpop.f32.mrf.mxu0
      %v569 = vpop.f32.mrf.mxu0
      %v570 = vadd.f32 0.0, %v569
      %v571 = vpop.f32.mrf.mxu0
      %572 = vmatprep.mubr.bf16.mxu0 0
      %573 = vmatmul.mubr.bf16.gmra.mxu0 %v365
      %v574 = vpop.f32.mrf.mxu0
      %v575 = vadd.f32 0.0, %v574
      %v576 = vpop.f32.mrf.mxu0
      %v577 = vpop.f32.mrf.mxu0
      %v578 = vadd.f32 0.0, %v577
      %v579 = vpop.f32.mrf.mxu0
      %580 = vmatprep.mubr.bf16.mxu0 0
      %581 = vmatmul.mubr.bf16.gmra.mxu0 %v366
      %v582 = vpop.f32.mrf.mxu0
      %v583 = vadd.f32 0.0, %v582
      %v584 = vpop.f32.mrf.mxu0
      %v585 = vpop.f32.mrf.mxu0
      %v586 = vadd.f32 0.0, %v585
      %v587 = vpop.f32.mrf.mxu0
      %588 = vmatprep.mubr.bf16.mxu0 0
      %589 = vmatmul.mubr.bf16.gmra.mxu0 %v367
      %v590 = vpop.f32.mrf.mxu0
      %v591 = vadd.f32 0.0, %v590
      %v592 = vpop.f32.mrf.mxu0
      %v593 = vpop.f32.mrf.mxu0
      %v594 = vadd.f32 0.0, %v593
      %v595 = vpop.f32.mrf.mxu0
      %596 = vmatprep.mubr.bf16.mxu0 0
      %597 = vmatmul.mubr.bf16.gmra.mxu0 %v368
      %v598 = vpop.f32.mrf.mxu0
      %v599 = vadd.f32 0.0, %v598
      %v600 = vpop.f32.mrf.mxu0
      %v601 = vpop.f32.mrf.mxu0
      %v602 = vadd.f32 0.0, %v601
      %v603 = vpop.f32.mrf.mxu0
      %604 = vmatprep.mubr.bf16.mxu0 0
      %605 = vmatmul.mubr.bf16.gmra.mxu0 %v369
      %v606 = vpop.f32.mrf.mxu0
      %v607 = vadd.f32 0.0, %v606
      %v608 = vpop.f32.mrf.mxu0
      %v609 = vpop.f32.mrf.mxu0
      %v610 = vadd.f32 0.0, %v609
      %v611 = vpop.f32.mrf.mxu0
      %612 = vmatprep.mubr.bf16.mxu0 0
      %613 = vmatmul.mubr.bf16.gmra.mxu0 %v370
      %v614 = vpop.f32.mrf.mxu0
      %v615 = vadd.f32 0.0, %v614
      %v616 = vpop.f32.mrf.mxu0
      %v617 = vpop.f32.mrf.mxu0
      %v618 = vadd.f32 0.0, %v617
      %v619 = vpop.f32.mrf.mxu0
      %620 = vmatprep.mubr.bf16.mxu0 0
      %621 = vmatmul.mubr.bf16.gmra.mxu0 %v371
      %v622 = vpop.f32.mrf.mxu0
      %v623 = vadd.f32 0.0, %v622
      %v624 = vpop.f32.mrf.mxu0
      %v625 = vpop.f32.mrf.mxu0
      %v626 = vadd.f32 0.0, %v625
      %v627 = vpop.f32.mrf.mxu0
      %628 = vmatprep.mubr.bf16.mxu0 0
      %629 = vmatmul.mubr.bf16.gmra.mxu0 %v372
      %v630 = vpop.f32.mrf.mxu0
      %v631 = vadd.f32 0.0, %v630
      %v632 = vpop.f32.mrf.mxu0
      %v633 = vpop.f32.mrf.mxu0
      %v634 = vadd.f32 0.0, %v633
      %v635 = vpop.f32.mrf.mxu0
      %636 = vmatprep.mubr.bf16.mxu0 0
      %637 = vmatmul.mubr.bf16.gmra.mxu0 %v373
      %v638 = vpop.f32.mrf.mxu0
      %v639 = vadd.f32 0.0, %v638
      %v640 = vpop.f32.mrf.mxu0
      %v641 = vpop.f32.mrf.mxu0
      %v642 = vadd.f32 0.0, %v641
      %v643 = vpop.f32.mrf.mxu0
      %644 = vmatprep.mubr.bf16.mxu0 0
      %645 = vmatmul.mubr.bf16.gmra.mxu0 %v374
      %v646 = vpop.f32.mrf.mxu0
      %v647 = vadd.f32 0.0, %v646
      %v648 = vpop.f32.mrf.mxu0
      %v649 = vpop.f32.mrf.mxu0
      %v650 = vadd.f32 0.0, %v649
      %v651 = vpop.f32.mrf.mxu0
      %652 = vmatprep.mubr.bf16.mxu0 0
      %653 = vmatmul.mubr.bf16.gmra.mxu0 %v375
      %v654 = vpop.f32.mrf.mxu0
      %v655 = vadd.f32 0.0, %v654
      %v656 = vpop.f32.mrf.mxu0
      %v657 = vpop.f32.mrf.mxu0
      %v658 = vadd.f32 0.0, %v657
      %v659 = vpop.f32.mrf.mxu0
      %660 = vmatprep.mubr.bf16.mxu0 0
      %661 = vmatmul.mubr.bf16.gmra.mxu0 %v376
      %v662 = vpop.f32.mrf.mxu0
      %v663 = vadd.f32 0.0, %v662
      %v664 = vpop.f32.mrf.mxu0
      %v665 = vpop.f32.mrf.mxu0
      %v666 = vadd.f32 0.0, %v665
      %v667 = vpop.f32.mrf.mxu0
      %668 = vmatprep.mubr.bf16.mxu0 0
      %669 = vmatmul.mubr.bf16.gmra.mxu0 %v377
      %v670 = vpop.f32.mrf.mxu0
      %v671 = vadd.f32 0.0, %v670
      %v672 = vpop.f32.mrf.mxu0
      %v673 = vpop.f32.mrf.mxu0
      %v674 = vadd.f32 0.0, %v673
      %v675 = vpop.f32.mrf.mxu0
      %676 = vmatprep.mubr.bf16.mxu0 0
      %677 = vmatmul.mubr.bf16.gmra.mxu0 %v378
      %v678 = vpop.f32.mrf.mxu0
      %v679 = vadd.f32 0.0, %v678
      %v680 = vpop.f32.mrf.mxu0
      %v681 = vpop.f32.mrf.mxu0
      %v682 = vadd.f32 0.0, %v681
      %v683 = vpop.f32.mrf.mxu0
      %684 = vmatprep.mubr.bf16.mxu0 0
      %685 = vmatmul.mubr.bf16.gmra.mxu0 %v379
      %v686 = vpop.f32.mrf.mxu0
      %v687 = vadd.f32 0.0, %v686
      %v688 = vpop.f32.mrf.mxu0
      %v689 = vpop.f32.mrf.mxu0
      %v690 = vadd.f32 0.0, %v689
      %v691 = vpop.f32.mrf.mxu0
      %692 = vmatprep.mubr.bf16.mxu0 0
      %693 = vmatmul.mubr.bf16.gmra.mxu0 %v380
      %v694 = vpop.f32.mrf.mxu0
      %v695 = vadd.f32 0.0, %v694
      %v696 = vpop.f32.mrf.mxu0
      %v697 = vpop.f32.mrf.mxu0
      %v698 = vadd.f32 0.0, %v697
      %v699 = vpop.f32.mrf.mxu0
      %700 = vmatprep.mubr.bf16.mxu0 0
      %701 = vmatmul.mubr.bf16.gmra.mxu0 %v381
      %v702 = vpop.f32.mrf.mxu0
      %v703 = vadd.f32 0.0, %v702
      %v704 = vpop.f32.mrf.mxu0
      %v705 = vpop.f32.mrf.mxu0
      %v706 = vadd.f32 0.0, %v705
      %v707 = vpop.f32.mrf.mxu0
      %708 = vmatprep.mubr.bf16.mxu0 0
      %709 = vmatmul.mubr.bf16.gmra.mxu0 %v382
      %v710 = vpop.f32.mrf.mxu0
      %v711 = vadd.f32 0.0, %v710
      %v712 = vpop.f32.mrf.mxu0
      %v713 = vpop.f32.mrf.mxu0
      %v714 = vadd.f32 0.0, %v713
      %v715 = vpop.f32.mrf.mxu0
      %716 = vmatprep.mubr.bf16.mxu0 0
      %717 = vmatmul.mubr.bf16.gmra.mxu0 %v383
      %v718 = vpop.f32.mrf.mxu0
      %v719 = vadd.f32 0.0, %v718
      %v720 = vpop.f32.mrf.mxu0
      %v721 = vpop.f32.mrf.mxu0
      %v722 = vadd.f32 0.0, %v721
      %v723 = vpop.f32.mrf.mxu0
      %724 = vmatprep.mubr.bf16.mxu0 0
      %725 = vmatmul.mubr.bf16.gmra.mxu0 %v384
      %v726 = vpop.f32.mrf.mxu0
      %v727 = vadd.f32 0.0, %v726
      %v728 = vpop.f32.mrf.mxu0
      %v729 = vpop.f32.mrf.mxu0
      %v730 = vadd.f32 0.0, %v729
      %v731 = vpop.f32.mrf.mxu0
      %732 = vmatprep.mubr.bf16.mxu0 0
      %733 = vmatmul.mubr.bf16.gmra.mxu0 %v385
      %v734 = vpop.f32.mrf.mxu0
      %v735 = vadd.f32 0.0, %v734
      %v736 = vpop.f32.mrf.mxu0
      %v737 = vpop.f32.mrf.mxu0
      %v738 = vadd.f32 0.0, %v737
      %v739 = vpop.f32.mrf.mxu0
      %740 = vmatprep.mubr.bf16.mxu0 0
      %741 = vmatmul.mubr.bf16.gmra.mxu0 %v386
      %v742 = vpop.f32.mrf.mxu0
      %v743 = vadd.f32 0.0, %v742
      %v744 = vpop.f32.mrf.mxu0
      %v745 = vpop.f32.mrf.mxu0
      %v746 = vadd.f32 0.0, %v745
      %v747 = vpop.f32.mrf.mxu0
      %748 = vmatprep.mubr.bf16.mxu0 0
      %749 = vmatmul.mubr.bf16.gmra.mxu0 %v387
      %v750 = vpop.f32.mrf.mxu0
      %v751 = vadd.f32 0.0, %v750
      %v752 = vpop.f32.mrf.mxu0
      %v753 = vpop.f32.mrf.mxu0
      %v754 = vadd.f32 0.0, %v753
      %v755 = vpop.f32.mrf.mxu0
      %756 = vdwg.mxu0
      %vm757 = vcmp.ge.f32.partialorder %v503, 0.0
      %vm758 = vcmp.ge.f32.partialorder %v506, 0.0
      %vm759 = vcmp.ge.f32.partialorder %v511, 0.0
      %vm760 = vcmp.ge.f32.partialorder %v514, 0.0
      %vm761 = vcmp.ge.f32.partialorder %v519, 0.0
      %vm762 = vcmp.ge.f32.partialorder %v522, 0.0
      %vm763 = vcmp.ge.f32.partialorder %v527, 0.0
      %vm764 = vcmp.ge.f32.partialorder %v530, 0.0
      %vm765 = vcmp.ge.f32.partialorder %v535, 0.0
      %vm766 = vcmp.ge.f32.partialorder %v538, 0.0
      %vm767 = vcmp.ge.f32.partialorder %v543, 0.0
      %vm768 = vcmp.ge.f32.partialorder %v546, 0.0
      %vm769 = vcmp.ge.f32.partialorder %v551, 0.0
      %vm770 = vcmp.ge.f32.partialorder %v554, 0.0
      %vm771 = vcmp.ge.f32.partialorder %v559, 0.0
      %vm772 = vcmp.ge.f32.partialorder %v562, 0.0
      %vm773 = vcmp.ge.f32.partialorder %v567, 0.0
      %vm774 = vcmp.ge.f32.partialorder %v570, 0.0
      %vm775 = vcmp.ge.f32.partialorder %v575, 0.0
      %vm776 = vcmp.ge.f32.partialorder %v578, 0.0
      %vm777 = vcmp.ge.f32.partialorder %v583, 0.0
      %vm778 = vcmp.ge.f32.partialorder %v586, 0.0
      %vm779 = vcmp.ge.f32.partialorder %v591, 0.0
      %vm780 = vcmp.ge.f32.partialorder %v594, 0.0
      %vm781 = vcmp.ge.f32.partialorder %v599, 0.0
      %vm782 = vcmp.ge.f32.partialorder %v602, 0.0
      %vm783 = vcmp.ge.f32.partialorder %v607, 0.0
      %vm784 = vcmp.ge.f32.partialorder %v610, 0.0
      %vm785 = vcmp.ge.f32.partialorder %v615, 0.0
      %vm786 = vcmp.ge.f32.partialorder %v618, 0.0
      %vm787 = vcmp.ge.f32.partialorder %v623, 0.0
      %vm788 = vcmp.ge.f32.partialorder %v626, 0.0
      %vm789 = vcmp.ge.f32.partialorder %v631, 0.0
      %vm790 = vcmp.ge.f32.partialorder %v634, 0.0
      %vm791 = vcmp.ge.f32.partialorder %v639, 0.0
      %vm792 = vcmp.ge.f32.partialorder %v642, 0.0
      %vm793 = vcmp.ge.f32.partialorder %v647, 0.0
      %vm794 = vcmp.ge.f32.partialorder %v650, 0.0
      %vm795 = vcmp.ge.f32.partialorder %v655, 0.0
      %vm796 = vcmp.ge.f32.partialorder %v658, 0.0
      %vm797 = vcmp.ge.f32.partialorder %v663, 0.0
      %vm798 = vcmp.ge.f32.partialorder %v666, 0.0
      %vm799 = vcmp.ge.f32.partialorder %v671, 0.0
      %vm800 = vcmp.ge.f32.partialorder %v674, 0.0
      %vm801 = vcmp.ge.f32.partialorder %v679, 0.0
      %vm802 = vcmp.ge.f32.partialorder %v682, 0.0
      %vm803 = vcmp.ge.f32.partialorder %v687, 0.0
      %vm804 = vcmp.ge.f32.partialorder %v690, 0.0
      %vm805 = vcmp.ge.f32.partialorder %v695, 0.0
      %vm806 = vcmp.ge.f32.partialorder %v698, 0.0
      %vm807 = vcmp.ge.f32.partialorder %v703, 0.0
      %vm808 = vcmp.ge.f32.partialorder %v706, 0.0
      %vm809 = vcmp.ge.f32.partialorder %v711, 0.0
      %vm810 = vcmp.ge.f32.partialorder %v714, 0.0
      %vm811 = vcmp.ge.f32.partialorder %v719, 0.0
      %vm812 = vcmp.ge.f32.partialorder %v722, 0.0
      %vm813 = vcmp.ge.f32.partialorder %v727, 0.0
      %vm814 = vcmp.ge.f32.partialorder %v730, 0.0
      %vm815 = vcmp.ge.f32.partialorder %v735, 0.0
      %vm816 = vcmp.ge.f32.partialorder %v738, 0.0
      %vm817 = vcmp.ge.f32.partialorder %v743, 0.0
      %vm818 = vcmp.ge.f32.partialorder %v746, 0.0
      %vm819 = vcmp.ge.f32.partialorder %v751, 0.0
      %vm820 = vcmp.ge.f32.partialorder %v754, 0.0
      %v821 = vmul.f32 %v503, 0.2
      %v822 = vmul.f32 %v506, 0.2
      %v823 = vmul.f32 %v511, 0.2
      %v824 = vmul.f32 %v514, 0.2
      %v825 = vmul.f32 %v519, 0.2
      %v826 = vmul.f32 %v522, 0.2
      %v827 = vmul.f32 %v527, 0.2
      %v828 = vmul.f32 %v530, 0.2
      %v829 = vmul.f32 %v535, 0.2
      %v830 = vmul.f32 %v538, 0.2
      %v831 = vmul.f32 %v543, 0.2
      %v832 = vmul.f32 %v546, 0.2
      %v833 = vmul.f32 %v551, 0.2
      %v834 = vmul.f32 %v554, 0.2
      %v835 = vmul.f32 %v559, 0.2
      %v836 = vmul.f32 %v562, 0.2
      %v837 = vmul.f32 %v567, 0.2
      %v838 = vmul.f32 %v570, 0.2
      %v839 = vmul.f32 %v575, 0.2
      %v840 = vmul.f32 %v578, 0.2
      %v841 = vmul.f32 %v583, 0.2
      %v842 = vmul.f32 %v586, 0.2
      %v843 = vmul.f32 %v591, 0.2
      %v844 = vmul.f32 %v594, 0.2
      %v845 = vmul.f32 %v599, 0.2
      %v846 = vmul.f32 %v602, 0.2
      %v847 = vmul.f32 %v607, 0.2
      %v848 = vmul.f32 %v610, 0.2
      %v849 = vmul.f32 %v615, 0.2
      %v850 = vmul.f32 %v618, 0.2
      %v851 = vmul.f32 %v623, 0.2
      %v852 = vmul.f32 %v626, 0.2
      %v853 = vmul.f32 %v631, 0.2
      %v854 = vmul.f32 %v634, 0.2
      %v855 = vmul.f32 %v639, 0.2
      %v856 = vmul.f32 %v642, 0.2
      %v857 = vmul.f32 %v647, 0.2
      %v858 = vmul.f32 %v650, 0.2
      %v859 = vmul.f32 %v655, 0.2
      %v860 = vmul.f32 %v658, 0.2
      %v861 = vmul.f32 %v663, 0.2
      %v862 = vmul.f32 %v666, 0.2
      %v863 = vmul.f32 %v671, 0.2
      %v864 = vmul.f32 %v674, 0.2
      %v865 = vmul.f32 %v679, 0.2
      %v866 = vmul.f32 %v682, 0.2
      %v867 = vmul.f32 %v687, 0.2
      %v868 = vmul.f32 %v690, 0.2
      %v869 = vmul.f32 %v695, 0.2
      %v870 = vmul.f32 %v698, 0.2
      %v871 = vmul.f32 %v703, 0.2
      %v872 = vmul.f32 %v706, 0.2
      %v873 = vmul.f32 %v711, 0.2
      %v874 = vmul.f32 %v714, 0.2
      %v875 = vmul.f32 %v719, 0.2
      %v876 = vmul.f32 %v722, 0.2
      %v877 = vmul.f32 %v727, 0.2
      %v878 = vmul.f32 %v730, 0.2
      %v879 = vmul.f32 %v735, 0.2
      %v880 = vmul.f32 %v738, 0.2
      %v881 = vmul.f32 %v743, 0.2
      %v882 = vmul.f32 %v746, 0.2
      %v883 = vmul.f32 %v751, 0.2
      %v884 = vmul.f32 %v754, 0.2
      %v885 = vsel %vm757, %v503, %v821
      %v886 = vsel %vm758, %v506, %v822
      %v887 = vsel %vm759, %v511, %v823
      %v888 = vsel %vm760, %v514, %v824
      %v889 = vsel %vm761, %v519, %v825
      %v890 = vsel %vm762, %v522, %v826
      %v891 = vsel %vm763, %v527, %v827
      %v892 = vsel %vm764, %v530, %v828
      %v893 = vsel %vm765, %v535, %v829
      %v894 = vsel %vm766, %v538, %v830
      %v895 = vsel %vm767, %v543, %v831
      %v896 = vsel %vm768, %v546, %v832
      %v897 = vsel %vm769, %v551, %v833
      %v898 = vsel %vm770, %v554, %v834
      %v899 = vsel %vm771, %v559, %v835
      %v900 = vsel %vm772, %v562, %v836
      %v901 = vsel %vm773, %v567, %v837
      %v902 = vsel %vm774, %v570, %v838
      %v903 = vsel %vm775, %v575, %v839
      %v904 = vsel %vm776, %v578, %v840
      %v905 = vsel %vm777, %v583, %v841
      %v906 = vsel %vm778, %v586, %v842
      %v907 = vsel %vm779, %v591, %v843
      %v908 = vsel %vm780, %v594, %v844
      %v909 = vsel %vm781, %v599, %v845
      %v910 = vsel %vm782, %v602, %v846
      %v911 = vsel %vm783, %v607, %v847
      %v912 = vsel %vm784, %v610, %v848
      %v913 = vsel %vm785, %v615, %v849
      %v914 = vsel %vm786, %v618, %v850
      %v915 = vsel %vm787, %v623, %v851
      %v916 = vsel %vm788, %v626, %v852
      %v917 = vsel %vm789, %v631, %v853
      %v918 = vsel %vm790, %v634, %v854
      %v919 = vsel %vm791, %v639, %v855
      %v920 = vsel %vm792, %v642, %v856
      %v921 = vsel %vm793, %v647, %v857
      %v922 = vsel %vm794, %v650, %v858
      %v923 = vsel %vm795, %v655, %v859
      %v924 = vsel %vm796, %v658, %v860
      %v925 = vsel %vm797, %v663, %v861
      %v926 = vsel %vm798, %v666, %v862
      %v927 = vsel %vm799, %v671, %v863
      %v928 = vsel %vm800, %v674, %v864
      %v929 = vsel %vm801, %v679, %v865
      %v930 = vsel %vm802, %v682, %v866
      %v931 = vsel %vm803, %v687, %v867
      %v932 = vsel %vm804, %v690, %v868
      %v933 = vsel %vm805, %v695, %v869
      %v934 = vsel %vm806, %v698, %v870
      %v935 = vsel %vm807, %v703, %v871
      %v936 = vsel %vm808, %v706, %v872
      %v937 = vsel %vm809, %v711, %v873
      %v938 = vsel %vm810, %v714, %v874
      %v939 = vsel %vm811, %v719, %v875
      %v940 = vsel %vm812, %v722, %v876
      %v941 = vsel %vm813, %v727, %v877
      %v942 = vsel %vm814, %v730, %v878
      %v943 = vsel %vm815, %v735, %v879
      %v944 = vsel %vm816, %v738, %v880
      %v945 = vsel %vm817, %v743, %v881
      %v946 = vsel %vm818, %v746, %v882
      %v947 = vsel %vm819, %v751, %v883
      %v948 = vsel %vm820, %v754, %v884
      %v949 = vpack.c.bf16 %v886, %v885
      %v950 = vpack.c.bf16 %v888, %v887
      %v951 = vpack.c.bf16 %v890, %v889
      %v952 = vpack.c.bf16 %v892, %v891
      %v953 = vpack.c.bf16 %v894, %v893
      %v954 = vpack.c.bf16 %v896, %v895
      %v955 = vpack.c.bf16 %v898, %v897
      %v956 = vpack.c.bf16 %v900, %v899
      %v957 = vpack.c.bf16 %v902, %v901
      %v958 = vpack.c.bf16 %v904, %v903
      %v959 = vpack.c.bf16 %v906, %v905
      %v960 = vpack.c.bf16 %v908, %v907
      %v961 = vpack.c.bf16 %v910, %v909
      %v962 = vpack.c.bf16 %v912, %v911
      %v963 = vpack.c.bf16 %v914, %v913
      %v964 = vpack.c.bf16 %v916, %v915
      %v965 = vpack.c.bf16 %v918, %v917
      %v966 = vpack.c.bf16 %v920, %v919
      %v967 = vpack.c.bf16 %v922, %v921
      %v968 = vpack.c.bf16 %v924, %v923
      %v969 = vpack.c.bf16 %v926, %v925
      %v970 = vpack.c.bf16 %v928, %v927
      %v971 = vpack.c.bf16 %v930, %v929
      %v972 = vpack.c.bf16 %v932, %v931
      %v973 = vpack.c.bf16 %v934, %v933
      %v974 = vpack.c.bf16 %v936, %v935
      %v975 = vpack.c.bf16 %v938, %v937
      %v976 = vpack.c.bf16 %v940, %v939
      %v977 = vpack.c.bf16 %v942, %v941
      %v978 = vpack.c.bf16 %v944, %v943
      %v979 = vpack.c.bf16 %v946, %v945
      %v980 = vpack.c.bf16 %v948, %v947
      %v1013 = vunpack.c.l.b16 %v949
      %v1014 = vunpack.c.h.b16 %v949
      %v1015 = vunpack.c.l.b16 %v950
      %v1016 = vunpack.c.h.b16 %v950
      %v1017 = vunpack.c.l.b16 %v951
      %v1018 = vunpack.c.h.b16 %v951
      %v1019 = vunpack.c.l.b16 %v952
      %v1020 = vunpack.c.h.b16 %v952
      %v1021 = vunpack.c.l.b16 %v953
      %v1022 = vunpack.c.h.b16 %v953
      %v1023 = vunpack.c.l.b16 %v954
      %v1024 = vunpack.c.h.b16 %v954
      %v1025 = vunpack.c.l.b16 %v955
      %v1026 = vunpack.c.h.b16 %v955
      %v1027 = vunpack.c.l.b16 %v956
      %v1028 = vunpack.c.h.b16 %v956
      %v1029 = vunpack.c.l.b16 %v957
      %v1030 = vunpack.c.h.b16 %v957
      %v1031 = vunpack.c.l.b16 %v958
      %v1032 = vunpack.c.h.b16 %v958
      %v1033 = vunpack.c.l.b16 %v959
      %v1034 = vunpack.c.h.b16 %v959
      %v1035 = vunpack.c.l.b16 %v960
      %v1036 = vunpack.c.h.b16 %v960
      %v1037 = vunpack.c.l.b16 %v961
      %v1038 = vunpack.c.h.b16 %v961
      %v1039 = vunpack.c.l.b16 %v962
      %v1040 = vunpack.c.h.b16 %v962
      %v1041 = vunpack.c.l.b16 %v963
      %v1042 = vunpack.c.h.b16 %v963
      %v1043 = vunpack.c.l.b16 %v964
      %v1044 = vunpack.c.h.b16 %v964
      %v1045 = vunpack.c.l.b16 %v965
      %v1046 = vunpack.c.h.b16 %v965
      %v1047 = vunpack.c.l.b16 %v966
      %v1048 = vunpack.c.h.b16 %v966
      %v1049 = vunpack.c.l.b16 %v967
      %v1050 = vunpack.c.h.b16 %v967
      %v1051 = vunpack.c.l.b16 %v968
      %v1052 = vunpack.c.h.b16 %v968
      %v1053 = vunpack.c.l.b16 %v969
      %v1054 = vunpack.c.h.b16 %v969
      %v1055 = vunpack.c.l.b16 %v970
      %v1056 = vunpack.c.h.b16 %v970
      %v1057 = vunpack.c.l.b16 %v971
      %v1058 = vunpack.c.h.b16 %v971
      %v1059 = vunpack.c.l.b16 %v972
      %v1060 = vunpack.c.h.b16 %v972
      %v1061 = vunpack.c.l.b16 %v973
      %v1062 = vunpack.c.h.b16 %v973
      %v1063 = vunpack.c.l.b16 %v974
      %v1064 = vunpack.c.h.b16 %v974
      %v1065 = vunpack.c.l.b16 %v975
      %v1066 = vunpack.c.h.b16 %v975
      %v1067 = vunpack.c.l.b16 %v976
      %v1068 = vunpack.c.h.b16 %v976
      %v1069 = vunpack.c.l.b16 %v977
      %v1070 = vunpack.c.h.b16 %v977
      %v1071 = vunpack.c.l.b16 %v978
      %v1072 = vunpack.c.h.b16 %v978
      %v1073 = vunpack.c.l.b16 %v979
      %v1074 = vunpack.c.h.b16 %v979
      %v1075 = vunpack.c.l.b16 %v980
      %v1076 = vunpack.c.h.b16 %v980
      %v1077 = vpack.c.b16 %v1013, %v1013
      %v1078 = vpack.c.b16 %v1014, %v1014
      %v1079 = vpack.c.b16 %v1015, %v1015
      %v1080 = vpack.c.b16 %v1016, %v1016
      %v1081 = vpack.c.b16 %v1017, %v1017
      %v1082 = vpack.c.b16 %v1018, %v1018
      %v1083 = vpack.c.b16 %v1019, %v1019
      %v1084 = vpack.c.b16 %v1020, %v1020
      %v1085 = vpack.c.b16 %v1021, %v1021
      %v1086 = vpack.c.b16 %v1022, %v1022
      %v1087 = vpack.c.b16 %v1023, %v1023
      %v1088 = vpack.c.b16 %v1024, %v1024
      %v1089 = vpack.c.b16 %v1025, %v1025
      %v1090 = vpack.c.b16 %v1026, %v1026
      %v1091 = vpack.c.b16 %v1027, %v1027
      %v1092 = vpack.c.b16 %v1028, %v1028
      %v1093 = vpack.c.b16 %v1029, %v1029
      %v1094 = vpack.c.b16 %v1030, %v1030
      %v1095 = vpack.c.b16 %v1031, %v1031
      %v1096 = vpack.c.b16 %v1032, %v1032
      %v1097 = vpack.c.b16 %v1033, %v1033
      %v1098 = vpack.c.b16 %v1034, %v1034
      %v1099 = vpack.c.b16 %v1035, %v1035
      %v1100 = vpack.c.b16 %v1036, %v1036
      %v1101 = vpack.c.b16 %v1037, %v1037
      %v1102 = vpack.c.b16 %v1038, %v1038
      %v1103 = vpack.c.b16 %v1039, %v1039
      %v1104 = vpack.c.b16 %v1040, %v1040
      %v1105 = vpack.c.b16 %v1041, %v1041
      %v1106 = vpack.c.b16 %v1042, %v1042
      %v1107 = vpack.c.b16 %v1043, %v1043
      %v1108 = vpack.c.b16 %v1044, %v1044
      %v1109 = vpack.c.b16 %v1045, %v1045
      %v1110 = vpack.c.b16 %v1046, %v1046
      %v1111 = vpack.c.b16 %v1047, %v1047
      %v1112 = vpack.c.b16 %v1048, %v1048
      %v1113 = vpack.c.b16 %v1049, %v1049
      %v1114 = vpack.c.b16 %v1050, %v1050
      %v1115 = vpack.c.b16 %v1051, %v1051
      %v1116 = vpack.c.b16 %v1052, %v1052
      %v1117 = vpack.c.b16 %v1053, %v1053
      %v1118 = vpack.c.b16 %v1054, %v1054
      %v1119 = vpack.c.b16 %v1055, %v1055
      %v1120 = vpack.c.b16 %v1056, %v1056
      %v1121 = vpack.c.b16 %v1057, %v1057
      %v1122 = vpack.c.b16 %v1058, %v1058
      %v1123 = vpack.c.b16 %v1059, %v1059
      %v1124 = vpack.c.b16 %v1060, %v1060
      %v1125 = vpack.c.b16 %v1061, %v1061
      %v1126 = vpack.c.b16 %v1062, %v1062
      %v1127 = vpack.c.b16 %v1063, %v1063
      %v1128 = vpack.c.b16 %v1064, %v1064
      %v1129 = vpack.c.b16 %v1065, %v1065
      %v1130 = vpack.c.b16 %v1066, %v1066
      %v1131 = vpack.c.b16 %v1067, %v1067
      %v1132 = vpack.c.b16 %v1068, %v1068
      %v1133 = vpack.c.b16 %v1069, %v1069
      %v1134 = vpack.c.b16 %v1070, %v1070
      %v1135 = vpack.c.b16 %v1071, %v1071
      %v1136 = vpack.c.b16 %v1072, %v1072
      %v1137 = vpack.c.b16 %v1073, %v1073
      %v1138 = vpack.c.b16 %v1074, %v1074
      %v1139 = vpack.c.b16 %v1075, %v1075
      %v1140 = vpack.c.b16 %v1076, %v1076
      %vm1205 = vcmask 60416
      %1206 = vst.msk [vmem:[%s145] sm:$0xf] %vm1205, %v1077
      %1207 = vst.msk [vmem:[%s145 + $0x4] sm:$0xf] %vm1205, %v1078
      %1208 = vst.msk [vmem:[%s145 + $0x8] sm:$0xf] %vm1205, %v1079
      %1209 = vst.msk [vmem:[%s145 + $0xc] sm:$0xf] %vm1205, %v1080
      %1210 = vst.msk [vmem:[%s145 + $0x10] sm:$0xf] %vm1205, %v1081
      %1211 = vst.msk [vmem:[%s145 + $0x14] sm:$0xf] %vm1205, %v1082
      %1212 = vst.msk [vmem:[%s145 + $0x18] sm:$0xf] %vm1205, %v1083
      %1213 = vst.msk [vmem:[%s145 + $0x1c] sm:$0xf] %vm1205, %v1084
      %1214 = vst.msk [vmem:[%s145 + $0x20] sm:$0xf] %vm1205, %v1085
      %1215 = vst.msk [vmem:[%s145 + $0x24] sm:$0xf] %vm1205, %v1086
      %1216 = vst.msk [vmem:[%s145 + $0x28] sm:$0xf] %vm1205, %v1087
      %1217 = vst.msk [vmem:[%s145 + $0x2c] sm:$0xf] %vm1205, %v1088
      %1218 = vst.msk [vmem:[%s145 + $0x30] sm:$0xf] %vm1205, %v1089
      %1219 = vst.msk [vmem:[%s145 + $0x34] sm:$0xf] %vm1205, %v1090
      %1220 = vst.msk [vmem:[%s145 + $0x38] sm:$0xf] %vm1205, %v1091
      %1221 = vst.msk [vmem:[%s145 + $0x3c] sm:$0xf] %vm1205, %v1092
      %1222 = vst.msk [vmem:[%s145 + $0x40] sm:$0xf] %vm1205, %v1093
      %1223 = vst.msk [vmem:[%s145 + $0x44] sm:$0xf] %vm1205, %v1094
      %1224 = vst.msk [vmem:[%s145 + $0x48] sm:$0xf] %vm1205, %v1095
      %1225 = vst.msk [vmem:[%s145 + $0x4c] sm:$0xf] %vm1205, %v1096
      %1226 = vst.msk [vmem:[%s145 + $0x50] sm:$0xf] %vm1205, %v1097
      %1227 = vst.msk [vmem:[%s145 + $0x54] sm:$0xf] %vm1205, %v1098
      %1228 = vst.msk [vmem:[%s145 + $0x58] sm:$0xf] %vm1205, %v1099
      %1229 = vst.msk [vmem:[%s145 + $0x5c] sm:$0xf] %vm1205, %v1100
      %1230 = vst.msk [vmem:[%s145 + $0x60] sm:$0xf] %vm1205, %v1101
      %1231 = vst.msk [vmem:[%s145 + $0x64] sm:$0xf] %vm1205, %v1102
      %1232 = vst.msk [vmem:[%s145 + $0x68] sm:$0xf] %vm1205, %v1103
      %1233 = vst.msk [vmem:[%s145 + $0x6c] sm:$0xf] %vm1205, %v1104
      %1234 = vst.msk [vmem:[%s145 + $0x70] sm:$0xf] %vm1205, %v1105
      %1235 = vst.msk [vmem:[%s145 + $0x74] sm:$0xf] %vm1205, %v1106
      %1236 = vst.msk [vmem:[%s145 + $0x78] sm:$0xf] %vm1205, %v1107
      %1237 = vst.msk [vmem:[%s145 + $0x7c] sm:$0xf] %vm1205, %v1108
      %1238 = vst.msk [vmem:[%s145 + $0x80] sm:$0xf] %vm1205, %v1109
      %1239 = vst.msk [vmem:[%s145 + $0x84] sm:$0xf] %vm1205, %v1110
      %1240 = vst.msk [vmem:[%s145 + $0x88] sm:$0xf] %vm1205, %v1111
      %1241 = vst.msk [vmem:[%s145 + $0x8c] sm:$0xf] %vm1205, %v1112
      %1242 = vst.msk [vmem:[%s145 + $0x90] sm:$0xf] %vm1205, %v1113
      %1243 = vst.msk [vmem:[%s145 + $0x94] sm:$0xf] %vm1205, %v1114
      %1244 = vst.msk [vmem:[%s145 + $0x98] sm:$0xf] %vm1205, %v1115
      %1245 = vst.msk [vmem:[%s145 + $0x9c] sm:$0xf] %vm1205, %v1116
      %1246 = vst.msk [vmem:[%s145 + $0xa0] sm:$0xf] %vm1205, %v1117
      %1247 = vst.msk [vmem:[%s145 + $0xa4] sm:$0xf] %vm1205, %v1118
      %1248 = vst.msk [vmem:[%s145 + $0xa8] sm:$0xf] %vm1205, %v1119
      %1249 = vst.msk [vmem:[%s145 + $0xac] sm:$0xf] %vm1205, %v1120
      %1250 = vst.msk [vmem:[%s145 + $0xb0] sm:$0xf] %vm1205, %v1121
      %1251 = vst.msk [vmem:[%s145 + $0xb4] sm:$0xf] %vm1205, %v1122
      %1252 = vst.msk [vmem:[%s145 + $0xb8] sm:$0xf] %vm1205, %v1123
      %1253 = vst.msk [vmem:[%s145 + $0xbc] sm:$0xf] %vm1205, %v1124
      %1254 = vst.msk [vmem:[%s145 + $0xc0] sm:$0xf] %vm1205, %v1125
      %1255 = vst.msk [vmem:[%s145 + $0xc4] sm:$0xf] %vm1205, %v1126
      %1256 = vst.msk [vmem:[%s145 + $0xc8] sm:$0xf] %vm1205, %v1127
      %1257 = vst.msk [vmem:[%s145 + $0xcc] sm:$0xf] %vm1205, %v1128
      %1258 = vst.msk [vmem:[%s145 + $0xd0] sm:$0xf] %vm1205, %v1129
      %1259 = vst.msk [vmem:[%s145 + $0xd4] sm:$0xf] %vm1205, %v1130
      %1260 = vst.msk [vmem:[%s145 + $0xd8] sm:$0xf] %vm1205, %v1131
      %1261 = vst.msk [vmem:[%s145 + $0xdc] sm:$0xf] %vm1205, %v1132
      %1262 = vst.msk [vmem:[%s145 + $0xe0] sm:$0xf] %vm1205, %v1133
      %1263 = vst.msk [vmem:[%s145 + $0xe4] sm:$0xf] %vm1205, %v1134
      %1264 = vst.msk [vmem:[%s145 + $0xe8] sm:$0xf] %vm1205, %v1135
      %1265 = vst.msk [vmem:[%s145 + $0xec] sm:$0xf] %vm1205, %v1136
      %1266 = vst.msk [vmem:[%s145 + $0xf0] sm:$0xf] %vm1205, %v1137
      %1267 = vst.msk [vmem:[%s145 + $0xf4] sm:$0xf] %vm1205, %v1138
      %1268 = vst.msk [vmem:[%s145 + $0xf8] sm:$0xf] %vm1205, %v1139
      %1269 = vst.msk [vmem:[%s145 + $0xfc] sm:$0xf] %vm1205, %v1140
      %s1270 = smul.u32 64, %s13
      %p1271 = scmp.lt.s32.totalorder %s1270, 255
      %s1272 = scalar_select %p1271, %s1270, 255
      %s1273 = smul.addr %s1272, 4
      %s1274 = scalar_lea.vmem %s2, %s1273
      // Predicated region
      $region29: #{discriminator_forward.4} parent=27 // pred_check
        %p1275 = pneg %p78
      $region30: #{discriminator_forward.4} parent=27 // pred_check_branch
        %1277 = sbr.rel (%p1275) target = $region32
      $region31: #{discriminator_forward.4} parent=27 // pred_region
        %s1278 = smul.u32 64, %s13
      $region32: #{discriminator_forward.4} parent=27 // pred_fallthru
        _
    $region28: #{discriminator_forward.4} parent=5 // pred_fallthru
      _
    %p1279 = scmp.le.s32.totalorder 2, %s8
    // Predicated region
    $region33: #{discriminator_forward.4} parent=5 // pred_check
      %p1280 = pneg %p1279
    $region34: #{discriminator_forward.4} parent=5 // pred_check_branch
      %1282 = sbr.rel (%p1280) target = $region36
    $region35: #{discriminator_forward.4} parent=5 // pred_region
      %s1283 = ssub.s32 %s8, 2
      // Predicated region
      $region37: #{discriminator_forward.4} parent=35 // pred_check
        %p1284 = pneg %p84
      $region38: #{discriminator_forward.4} parent=35 // pred_check_branch
        %1286 = sbr.rel (%p1284) target = $region40
      $region39: #{discriminator_forward.4} parent=35 // pred_region
        %s1287 = smul.u32 64, %s14
        %p1288 = scmp.lt.s32.totalorder %s1287, 255
        %s1289 = scalar_select %p1288, %s1287, 255
        %s1290 = smul.addr %s1289, 4
        %s1291 = scalar_lea.vmem %s2, %s1290
      $region40: #{discriminator_forward.4} parent=35 // pred_fallthru
        _
    $region36: #{discriminator_forward.4} parent=5 // pred_fallthru
      _
  $region6: #{discriminator_forward.4} parent=0 // loop_footer
    %s12 = sadd.s32 1, %s8
  $region7: #{discriminator_forward.4} parent=0 // loop_footer_branch
    %7 = sbr.rel target = $region3
  $region8: #{discriminator_forward.4} parent=0 // loop_exit
    _

// kernel: discriminator_forward.5
$region0: #{discriminator_forward.5}
  #allocation0 [shape = 'u32[]', space=smem, size = 0x4, offset = 0x4, fixed_abs, tag = 'smem constant byte address 0x4 - core index']
  #allocation1 [shape = 'u32[144,128]{1,0:T(1,128)}', space=vmem, size = 0x12000, scoped, tag = 'internal scratch']
  %s0 = inlined_call_operand.vmem [shape: bf16[512,128], index: 0, kind: input, shape index: {}]
  %s1 = inlined_call_operand.vmem [shape: bf16[128,128], index: 1, kind: input, shape index: {}]
  %s2 = inlined_call_operand.vmem [shape: f32[1,128], index: 2, kind: input, shape index: {}]
  %s3 = inlined_call_operand.vmem [shape: f32[1,128], index: 3, kind: input, shape index: {}]
  %s4 = inlined_call_operand.vmem [shape: bf16[512,16], index: 4, kind: output, shape index: {}]
  %s5 = sld [smem:[#allocation0]]
  $region26: #{discriminator_forward.5} parent=0
    _
  %s7 = ssub.s32 1, %s5
  %s8 = scalar_select 0, %s7, %s5
  // Predicated region
  $region2: #{discriminator_forward.5} parent=0 // pred_check
    _
  $region3: #{discriminator_forward.5} parent=0 // pred_check_branch
    %10 = sbr.rel (0) target = $region5
  $region4: #{discriminator_forward.5} parent=0 // pred_region
    _
  $region5: #{discriminator_forward.5} parent=0 // pred_fallthru
    _
  // Predicated region
  $region6: #{discriminator_forward.5} parent=0 // pred_check
    _
  $region7: #{discriminator_forward.5} parent=0 // pred_check_branch
    %12 = sbr.rel (0) target = $region9
  $region8: #{discriminator_forward.5} parent=0 // pred_region
    _
  $region9: #{discriminator_forward.5} parent=0 // pred_fallthru
    _
  // Predicated region
  $region10: #{discriminator_forward.5} parent=0 // pred_check
    _
  $region11: #{discriminator_forward.5} parent=0 // pred_check_branch
    %14 = sbr.rel (0) target = $region13
  $region12: #{discriminator_forward.5} parent=0 // pred_region
    _
  $region13: #{discriminator_forward.5} parent=0 // pred_fallthru
    _
  // Predicated region
  $region14: #{discriminator_forward.5} parent=0 // pred_check
    _
  $region15: #{discriminator_forward.5} parent=0 // pred_check_branch
    %16 = sbr.rel (0) target = $region17
  $region16: #{discriminator_forward.5} parent=0 // pred_region
    _
  $region17: #{discriminator_forward.5} parent=0 // pred_fallthru
    _
  %v18 = vld [vmem:[%s0] sm:$0xf]
  %v19 = vld [vmem:[%s0 + $0x4] sm:$0xf]
  %v20 = vld [vmem:[%s0 + $0x8] sm:$0xf]
  %v21 = vld [vmem:[%s0 + $0xc] sm:$0xf]
  %v22 = vld [vmem:[%s0 + $0x10] sm:$0xf]
  %v23 = vld [vmem:[%s0 + $0x14] sm:$0xf]
  %v24 = vld [vmem:[%s0 + $0x18] sm:$0xf]
  %v25 = vld [vmem:[%s0 + $0x1c] sm:$0xf]
  %v26 = vld [vmem:[%s0 + $0x20] sm:$0xf]
  %v27 = vld [vmem:[%s0 + $0x24] sm:$0xf]
  %v28 = vld [vmem:[%s0 + $0x28] sm:$0xf]
  %v29 = vld [vmem:[%s0 + $0x2c] sm:$0xf]
  %v30 = vld [vmem:[%s0 + $0x30] sm:$0xf]
  %v31 = vld [vmem:[%s0 + $0x34] sm:$0xf]
  %v32 = vld [vmem:[%s0 + $0x38] sm:$0xf]
  %v33 = vld [vmem:[%s0 + $0x3c] sm:$0xf]
  %v34 = vld [vmem:[%s0 + $0x40] sm:$0xf]
  %v35 = vld [vmem:[%s0 + $0x44] sm:$0xf]
  %v36 = vld [vmem:[%s0 + $0x48] sm:$0xf]
  %v37 = vld [vmem:[%s0 + $0x4c] sm:$0xf]
  %v38 = vld [vmem:[%s0 + $0x50] sm:$0xf]
  %v39 = vld [vmem:[%s0 + $0x54] sm:$0xf]
  %v40 = vld [vmem:[%s0 + $0x58] sm:$0xf]
  %v41 = vld [vmem:[%s0 + $0x5c] sm:$0xf]
  %v42 = vld [vmem:[%s0 + $0x60] sm:$0xf]
  %v43 = vld [vmem:[%s0 + $0x64] sm:$0xf]
  %v44 = vld [vmem:[%s0 + $0x68] sm:$0xf]
  %v45 = vld [vmem:[%s0 + $0x6c] sm:$0xf]
  %v46 = vld [vmem:[%s0 + $0x70] sm:$0xf]
  %v47 = vld [vmem:[%s0 + $0x74] sm:$0xf]
  %v48 = vld [vmem:[%s0 + $0x78] sm:$0xf]
  %v49 = vld [vmem:[%s0 + $0x7c] sm:$0xf]
  %v50 = vld [vmem:[%s0 + $0x80] sm:$0xf]
  %v51 = vld [vmem:[%s0 + $0x84] sm:$0xf]
  %v52 = vld [vmem:[%s0 + $0x88] sm:$0xf]
  %v53 = vld [vmem:[%s0 + $0x8c] sm:$0xf]
  %v54 = vld [vmem:[%s0 + $0x90] sm:$0xf]
  %v55 = vld [vmem:[%s0 + $0x94] sm:$0xf]
  %v56 = vld [vmem:[%s0 + $0x98] sm:$0xf]
  %v57 = vld [vmem:[%s0 + $0x9c] sm:$0xf]
  %v58 = vld [vmem:[%s0 + $0xa0] sm:$0xf]
  %v59 = vld [vmem:[%s0 + $0xa4] sm:$0xf]
  %v60 = vld [vmem:[%s0 + $0xa8] sm:$0xf]
  %v61 = vld [vmem:[%s0 + $0xac] sm:$0xf]
  %v62 = vld [vmem:[%s0 + $0xb0] sm:$0xf]
  %v63 = vld [vmem:[%s0 + $0xb4] sm:$0xf]
  %v64 = vld [vmem:[%s0 + $0xb8] sm:$0xf]
  %v65 = vld [vmem:[%s0 + $0xbc] sm:$0xf]
  %v66 = vld [vmem:[%s0 + $0xc0] sm:$0xf]
  %v67 = vld [vmem:[%s0 + $0xc4] sm:$0xf]
  %v68 = vld [vmem:[%s0 + $0xc8] sm:$0xf]
  %v69 = vld [vmem:[%s0 + $0xcc] sm:$0xf]
  %v70 = vld [vmem:[%s0 + $0xd0] sm:$0xf]
  %v71 = vld [vmem:[%s0 + $0xd4] sm:$0xf]
  %v72 = vld [vmem:[%s0 + $0xd8] sm:$0xf]
  %v73 = vld [vmem:[%s0 + $0xdc] sm:$0xf]
  %v74 = vld [vmem:[%s0 + $0xe0] sm:$0xf]
  %v75 = vld [vmem:[%s0 + $0xe4] sm:$0xf]
  %v76 = vld [vmem:[%s0 + $0xe8] sm:$0xf]
  %v77 = vld [vmem:[%s0 + $0xec] sm:$0xf]
  %v78 = vld [vmem:[%s0 + $0xf0] sm:$0xf]
  %v79 = vld [vmem:[%s0 + $0xf4] sm:$0xf]
  %v80 = vld [vmem:[%s0 + $0xf8] sm:$0xf]
  %v81 = vld [vmem:[%s0 + $0xfc] sm:$0xf]
  %v82 = vld [vmem:[%s1] sm:$0xf]
  %v83 = vld [vmem:[%s1 + $0x4] sm:$0xf]
  %v84 = vld [vmem:[%s1 + $0x8] sm:$0xf]
  %v85 = vld [vmem:[%s1 + $0xc] sm:$0xf]
  %v86 = vld [vmem:[%s1 + $0x10] sm:$0xf]
  %v87 = vld [vmem:[%s1 + $0x14] sm:$0xf]
  %v88 = vld [vmem:[%s1 + $0x18] sm:$0xf]
  %v89 = vld [vmem:[%s1 + $0x1c] sm:$0xf]
  %v90 = vld [vmem:[%s1 + $0x20] sm:$0xf]
  %v91 = vld [vmem:[%s1 + $0x24] sm:$0xf]
  %v92 = vld [vmem:[%s1 + $0x28] sm:$0xf]
  %v93 = vld [vmem:[%s1 + $0x2c] sm:$0xf]
  %v94 = vld [vmem:[%s1 + $0x30] sm:$0xf]
  %v95 = vld [vmem:[%s1 + $0x34] sm:$0xf]
  %v96 = vld [vmem:[%s1 + $0x38] sm:$0xf]
  %v97 = vld [vmem:[%s1 + $0x3c] sm:$0xf]
  %v162 = vunpack.c.l.b16 %v18
  %v163 = vunpack.c.l.b16 %v19
  %v164 = vunpack.c.l.b16 %v20
  %v165 = vunpack.c.l.b16 %v21
  %v166 = vunpack.c.l.b16 %v22
  %v167 = vunpack.c.l.b16 %v23
  %v168 = vunpack.c.l.b16 %v24
  %v169 = vunpack.c.l.b16 %v25
  %v170 = vunpack.c.l.b16 %v26
  %v171 = vunpack.c.l.b16 %v27
  %v172 = vunpack.c.l.b16 %v28
  %v173 = vunpack.c.l.b16 %v29
  %v174 = vunpack.c.l.b16 %v30
  %v175 = vunpack.c.l.b16 %v31
  %v176 = vunpack.c.l.b16 %v32
  %v177 = vunpack.c.l.b16 %v33
  %v178 = vunpack.c.l.b16 %v34
  %v179 = vunpack.c.l.b16 %v35
  %v180 = vunpack.c.l.b16 %v36
  %v181 = vunpack.c.l.b16 %v37
  %v182 = vunpack.c.l.b16 %v38
  %v183 = vunpack.c.l.b16 %v39
  %v184 = vunpack.c.l.b16 %v40
  %v185 = vunpack.c.l.b16 %v41
  %v186 = vunpack.c.l.b16 %v42
  %v187 = vunpack.c.l.b16 %v43
  %v188 = vunpack.c.l.b16 %v44
  %v189 = vunpack.c.l.b16 %v45
  %v190 = vunpack.c.l.b16 %v46
  %v191 = vunpack.c.l.b16 %v47
  %v192 = vunpack.c.l.b16 %v48
  %v193 = vunpack.c.l.b16 %v49
  %v194 = vunpack.c.l.b16 %v50
  %v195 = vunpack.c.l.b16 %v51
  %v196 = vunpack.c.l.b16 %v52
  %v197 = vunpack.c.l.b16 %v53
  %v198 = vunpack.c.l.b16 %v54
  %v199 = vunpack.c.l.b16 %v55
  %v200 = vunpack.c.l.b16 %v56
  %v201 = vunpack.c.l.b16 %v57
  %v202 = vunpack.c.l.b16 %v58
  %v203 = vunpack.c.l.b16 %v59
  %v204 = vunpack.c.l.b16 %v60
  %v205 = vunpack.c.l.b16 %v61
  %v206 = vunpack.c.l.b16 %v62
  %v207 = vunpack.c.l.b16 %v63
  %v208 = vunpack.c.l.b16 %v64
  %v209 = vunpack.c.l.b16 %v65
  %v210 = vunpack.c.l.b16 %v66
  %v211 = vunpack.c.l.b16 %v67
  %v212 = vunpack.c.l.b16 %v68
  %v213 = vunpack.c.l.b16 %v69
  %v214 = vunpack.c.l.b16 %v70
  %v215 = vunpack.c.l.b16 %v71
  %v216 = vunpack.c.l.b16 %v72
  %v217 = vunpack.c.l.b16 %v73
  %v218 = vunpack.c.l.b16 %v74
  %v219 = vunpack.c.l.b16 %v75
  %v220 = vunpack.c.l.b16 %v76
  %v221 = vunpack.c.l.b16 %v77
  %v222 = vunpack.c.l.b16 %v78
  %v223 = vunpack.c.l.b16 %v79
  %v224 = vunpack.c.l.b16 %v80
  %v225 = vunpack.c.l.b16 %v81
  %v226 = vpack.c.b16 %v163, %v162
  %v227 = vpack.c.b16 %v165, %v164
  %v228 = vpack.c.b16 %v167, %v166
  %v229 = vpack.c.b16 %v169, %v168
  %v230 = vpack.c.b16 %v171, %v170
  %v231 = vpack.c.b16 %v173, %v172
  %v232 = vpack.c.b16 %v175, %v174
  %v233 = vpack.c.b16 %v177, %v176
  %v234 = vpack.c.b16 %v179, %v178
  %v235 = vpack.c.b16 %v181, %v180
  %v236 = vpack.c.b16 %v183, %v182
  %v237 = vpack.c.b16 %v185, %v184
  %v238 = vpack.c.b16 %v187, %v186
  %v239 = vpack.c.b16 %v189, %v188
  %v240 = vpack.c.b16 %v191, %v190
  %v241 = vpack.c.b16 %v193, %v192
  %v242 = vpack.c.b16 %v195, %v194
  %v243 = vpack.c.b16 %v197, %v196
  %v244 = vpack.c.b16 %v199, %v198
  %v245 = vpack.c.b16 %v201, %v200
  %v246 = vpack.c.b16 %v203, %v202
  %v247 = vpack.c.b16 %v205, %v204
  %v248 = vpack.c.b16 %v207, %v206
  %v249 = vpack.c.b16 %v209, %v208
  %v250 = vpack.c.b16 %v211, %v210
  %v251 = vpack.c.b16 %v213, %v212
  %v252 = vpack.c.b16 %v215, %v214
  %v253 = vpack.c.b16 %v217, %v216
  %v254 = vpack.c.b16 %v219, %v218
  %v255 = vpack.c.b16 %v221, %v220
  %v256 = vpack.c.b16 %v223, %v222
  %v257 = vpack.c.b16 %v225, %v224
  %v306 = vunpack.c.l.b16 %v82
  %v307 = vunpack.c.l.b16 %v83
  %v308 = vunpack.c.l.b16 %v84
  %v309 = vunpack.c.l.b16 %v85
  %v310 = vunpack.c.l.b16 %v86
  %v311 = vunpack.c.l.b16 %v87
  %v312 = vunpack.c.l.b16 %v88
  %v313 = vunpack.c.l.b16 %v89
  %v314 = vunpack.c.l.b16 %v90
  %v315 = vunpack.c.l.b16 %v91
  %v316 = vunpack.c.l.b16 %v92
  %v317 = vunpack.c.l.b16 %v93
  %v318 = vunpack.c.l.b16 %v94
  %v319 = vunpack.c.l.b16 %v95
  %v320 = vunpack.c.l.b16 %v96
  %v321 = vunpack.c.l.b16 %v97
  %v322 = vpack.c.b16 %v307, %v306
  %v323 = vpack.c.b16 %v309, %v308
  %v324 = vpack.c.b16 %v311, %v310
  %v325 = vpack.c.b16 %v313, %v312
  %v326 = vpack.c.b16 %v315, %v314
  %v327 = vpack.c.b16 %v317, %v316
  %v328 = vpack.c.b16 %v319, %v318
  %v329 = vpack.c.b16 %v321, %v320
  %338 = vmatprep.subr.bf16.mxu0 0
  %339 = vmatpush1.bf16.msra.mxu0 %v329
  %340 = vmatprep.subr.bf16.mxu0 0
  %341 = vmatpush1.bf16.msra.mxu0 %v328
  %342 = vmatprep.subr.bf16.mxu0 0
  %343 = vmatpush1.bf16.msra.mxu0 %v327
  %344 = vmatprep.subr.bf16.mxu0 0
  %345 = vmatpush1.bf16.msra.mxu0 %v326
  %346 = vmatprep.subr.bf16.mxu0 0
  %347 = vmatpush1.bf16.msra.mxu0 %v325
  %348 = vmatprep.subr.bf16.mxu0 0
  %349 = vmatpush1.bf16.msra.mxu0 %v324
  %350 = vmatprep.subr.bf16.mxu0 0
  %351 = vmatpush1.bf16.msra.mxu0 %v323
  %352 = vmatprep.subr.bf16.mxu0 0
  %353 = vmatpush1.bf16.msra.mxu0 %v322
  %354 = vmatprep.subr.bf16.mxu0 0
  %355 = vmatpush2.bf16.msra.mxu0 0
  %356 = vmatprep.subr.bf16.mxu0 0
  %357 = vmatpush2.bf16.msra.mxu0 0
  %358 = vmatprep.subr.bf16.mxu0 0
  %359 = vmatpush2.bf16.msra.mxu0 0
  %360 = vmatprep.subr.bf16.mxu0 0
  %361 = vmatpush2.bf16.msra.mxu0 0
  %362 = vmatprep.subr.bf16.mxu0 0
  %363 = vmatpush2.bf16.msra.mxu0 0
  %364 = vmatprep.subr.bf16.mxu0 0
  %365 = vmatpush2.bf16.msra.mxu0 0
  %366 = vmatprep.subr.bf16.mxu0 0
  %367 = vmatpush2.bf16.msra.mxu0 0
  %368 = vmatprep.subr.bf16.mxu0 0
  %369 = vmatpush2.bf16.msra.mxu0 0
  %370 = vmatprep.mubr.bf16.mxu0 0
  %371 = vmatmul.mubr.bf16.gmra.mxu0 %v226
  %v372 = vpop.f32.mrf.mxu0
  %v373 = vadd.f32 0.0, %v372
  %v374 = vpop.f32.mrf.mxu0
  %v375 = vpop.f32.mrf.mxu0
  %v376 = vadd.f32 0.0, %v375
  %v377 = vpop.f32.mrf.mxu0
  %378 = vmatprep.mubr.bf16.mxu0 0
  %379 = vmatmul.mubr.bf16.gmra.mxu0 %v227
  %v380 = vpop.f32.mrf.mxu0
  %v381 = vadd.f32 0.0, %v380
  %v382 = vpop.f32.mrf.mxu0
  %v383 = vpop.f32.mrf.mxu0
  %v384 = vadd.f32 0.0, %v383
  %v385 = vpop.f32.mrf.mxu0
  %386 = vmatprep.mubr.bf16.mxu0 0
  %387 = vmatmul.mubr.bf16.gmra.mxu0 %v228
  %v388 = vpop.f32.mrf.mxu0
  %v389 = vadd.f32 0.0, %v388
  %v390 = vpop.f32.mrf.mxu0
  %v391 = vpop.f32.mrf.mxu0
  %v392 = vadd.f32 0.0, %v391
  %v393 = vpop.f32.mrf.mxu0
  %394 = vmatprep.mubr.bf16.mxu0 0
  %395 = vmatmul.mubr.bf16.gmra.mxu0 %v229
  %v396 = vpop.f32.mrf.mxu0
  %v397 = vadd.f32 0.0, %v396
  %v398 = vpop.f32.mrf.mxu0
  %v399 = vpop.f32.mrf.mxu0
  %v400 = vadd.f32 0.0, %v399
  %v401 = vpop.f32.mrf.mxu0
  %402 = vmatprep.mubr.bf16.mxu0 0
  %403 = vmatmul.mubr.bf16.gmra.mxu0 %v230
  %v404 = vpop.f32.mrf.mxu0
  %v405 = vadd.f32 0.0, %v404
  %v406 = vpop.f32.mrf.mxu0
  %v407 = vpop.f32.mrf.mxu0
  %v408 = vadd.f32 0.0, %v407
  %v409 = vpop.f32.mrf.mxu0
  %410 = vmatprep.mubr.bf16.mxu0 0
  %411 = vmatmul.mubr.bf16.gmra.mxu0 %v231
  %v412 = vpop.f32.mrf.mxu0
  %v413 = vadd.f32 0.0, %v412
  %v414 = vpop.f32.mrf.mxu0
  %v415 = vpop.f32.mrf.mxu0
  %v416 = vadd.f32 0.0, %v415
  %v417 = vpop.f32.mrf.mxu0
  %418 = vmatprep.mubr.bf16.mxu0 0
  %419 = vmatmul.mubr.bf16.gmra.mxu0 %v232
  %v420 = vpop.f32.mrf.mxu0
  %v421 = vadd.f32 0.0, %v420
  %v422 = vpop.f32.mrf.mxu0
  %v423 = vpop.f32.mrf.mxu0
  %v424 = vadd.f32 0.0, %v423
  %v425 = vpop.f32.mrf.mxu0
  %426 = vmatprep.mubr.bf16.mxu0 0
  %427 = vmatmul.mubr.bf16.gmra.mxu0 %v233
  %v428 = vpop.f32.mrf.mxu0
  %v429 = vadd.f32 0.0, %v428
  %v430 = vpop.f32.mrf.mxu0
  %v431 = vpop.f32.mrf.mxu0
  %v432 = vadd.f32 0.0, %v431
  %v433 = vpop.f32.mrf.mxu0
  %434 = vmatprep.mubr.bf16.mxu0 0
  %435 = vmatmul.mubr.bf16.gmra.mxu0 %v234
  %v436 = vpop.f32.mrf.mxu0
  %v437 = vadd.f32 0.0, %v436
  %v438 = vpop.f32.mrf.mxu0
  %v439 = vpop.f32.mrf.mxu0
  %v440 = vadd.f32 0.0, %v439
  %v441 = vpop.f32.mrf.mxu0
  %442 = vmatprep.mubr.bf16.mxu0 0
  %443 = vmatmul.mubr.bf16.gmra.mxu0 %v235
  %v444 = vpop.f32.mrf.mxu0
  %v445 = vadd.f32 0.0, %v444
  %v446 = vpop.f32.mrf.mxu0
  %v447 = vpop.f32.mrf.mxu0
  %v448 = vadd.f32 0.0, %v447
  %v449 = vpop.f32.mrf.mxu0
  %450 = vmatprep.mubr.bf16.mxu0 0
  %451 = vmatmul.mubr.bf16.gmra.mxu0 %v236
  %v452 = vpop.f32.mrf.mxu0
  %v453 = vadd.f32 0.0, %v452
  %v454 = vpop.f32.mrf.mxu0
  %v455 = vpop.f32.mrf.mxu0
  %v456 = vadd.f32 0.0, %v455
  %v457 = vpop.f32.mrf.mxu0
  %458 = vmatprep.mubr.bf16.mxu0 0
  %459 = vmatmul.mubr.bf16.gmra.mxu0 %v237
  %v460 = vpop.f32.mrf.mxu0
  %v461 = vadd.f32 0.0, %v460
  %v462 = vpop.f32.mrf.mxu0
  %v463 = vpop.f32.mrf.mxu0
  %v464 = vadd.f32 0.0, %v463
  %v465 = vpop.f32.mrf.mxu0
  %466 = vmatprep.mubr.bf16.mxu0 0
  %467 = vmatmul.mubr.bf16.gmra.mxu0 %v238
  %v468 = vpop.f32.mrf.mxu0
  %v469 = vadd.f32 0.0, %v468
  %v470 = vpop.f32.mrf.mxu0
  %v471 = vpop.f32.mrf.mxu0
  %v472 = vadd.f32 0.0, %v471
  %v473 = vpop.f32.mrf.mxu0
  %474 = vmatprep.mubr.bf16.mxu0 0
  %475 = vmatmul.mubr.bf16.gmra.mxu0 %v239
  %v476 = vpop.f32.mrf.mxu0
  %v477 = vadd.f32 0.0, %v476
  %v478 = vpop.f32.mrf.mxu0
  %v479 = vpop.f32.mrf.mxu0
  %v480 = vadd.f32 0.0, %v479
  %v481 = vpop.f32.mrf.mxu0
  %482 = vmatprep.mubr.bf16.mxu0 0
  %483 = vmatmul.mubr.bf16.gmra.mxu0 %v240
  %v484 = vpop.f32.mrf.mxu0
  %v485 = vadd.f32 0.0, %v484
  %v486 = vpop.f32.mrf.mxu0
  %v487 = vpop.f32.mrf.mxu0
  %v488 = vadd.f32 0.0, %v487
  %v489 = vpop.f32.mrf.mxu0
  %490 = vmatprep.mubr.bf16.mxu0 0
  %491 = vmatmul.mubr.bf16.gmra.mxu0 %v241
  %v492 = vpop.f32.mrf.mxu0
  %v493 = vadd.f32 0.0, %v492
  %v494 = vpop.f32.mrf.mxu0
  %v495 = vpop.f32.mrf.mxu0
  %v496 = vadd.f32 0.0, %v495
  %v497 = vpop.f32.mrf.mxu0
  %498 = vmatprep.mubr.bf16.mxu0 0
  %499 = vmatmul.mubr.bf16.gmra.mxu0 %v242
  %v500 = vpop.f32.mrf.mxu0
  %v501 = vadd.f32 0.0, %v500
  %v502 = vpop.f32.mrf.mxu0
  %v503 = vpop.f32.mrf.mxu0
  %v504 = vadd.f32 0.0, %v503
  %v505 = vpop.f32.mrf.mxu0
  %506 = vmatprep.mubr.bf16.mxu0 0
  %507 = vmatmul.mubr.bf16.gmra.mxu0 %v243
  %v508 = vpop.f32.mrf.mxu0
  %v509 = vadd.f32 0.0, %v508
  %v510 = vpop.f32.mrf.mxu0
  %v511 = vpop.f32.mrf.mxu0
  %v512 = vadd.f32 0.0, %v511
  %v513 = vpop.f32.mrf.mxu0
  %514 = vmatprep.mubr.bf16.mxu0 0
  %515 = vmatmul.mubr.bf16.gmra.mxu0 %v244
  %v516 = vpop.f32.mrf.mxu0
  %v517 = vadd.f32 0.0, %v516
  %v518 = vpop.f32.mrf.mxu0
  %v519 = vpop.f32.mrf.mxu0
  %v520 = vadd.f32 0.0, %v519
  %v521 = vpop.f32.mrf.mxu0
  %522 = vmatprep.mubr.bf16.mxu0 0
  %523 = vmatmul.mubr.bf16.gmra.mxu0 %v245
  %v524 = vpop.f32.mrf.mxu0
  %v525 = vadd.f32 0.0, %v524
  %v526 = vpop.f32.mrf.mxu0
  %v527 = vpop.f32.mrf.mxu0
  %v528 = vadd.f32 0.0, %v527
  %v529 = vpop.f32.mrf.mxu0
  %530 = vmatprep.mubr.bf16.mxu0 0
  %531 = vmatmul.mubr.bf16.gmra.mxu0 %v246
  %v532 = vpop.f32.mrf.mxu0
  %v533 = vadd.f32 0.0, %v532
  %v534 = vpop.f32.mrf.mxu0
  %v535 = vpop.f32.mrf.mxu0
  %v536 = vadd.f32 0.0, %v535
  %v537 = vpop.f32.mrf.mxu0
  %538 = vmatprep.mubr.bf16.mxu0 0
  %539 = vmatmul.mubr.bf16.gmra.mxu0 %v247
  %v540 = vpop.f32.mrf.mxu0
  %v541 = vadd.f32 0.0, %v540
  %v542 = vpop.f32.mrf.mxu0
  %v543 = vpop.f32.mrf.mxu0
  %v544 = vadd.f32 0.0, %v543
  %v545 = vpop.f32.mrf.mxu0
  %546 = vmatprep.mubr.bf16.mxu0 0
  %547 = vmatmul.mubr.bf16.gmra.mxu0 %v248
  %v548 = vpop.f32.mrf.mxu0
  %v549 = vadd.f32 0.0, %v548
  %v550 = vpop.f32.mrf.mxu0
  %v551 = vpop.f32.mrf.mxu0
  %v552 = vadd.f32 0.0, %v551
  %v553 = vpop.f32.mrf.mxu0
  %554 = vmatprep.mubr.bf16.mxu0 0
  %555 = vmatmul.mubr.bf16.gmra.mxu0 %v249
  %v556 = vpop.f32.mrf.mxu0
  %v557 = vadd.f32 0.0, %v556
  %v558 = vpop.f32.mrf.mxu0
  %v559 = vpop.f32.mrf.mxu0
  %v560 = vadd.f32 0.0, %v559
  %v561 = vpop.f32.mrf.mxu0
  %562 = vmatprep.mubr.bf16.mxu0 0
  %563 = vmatmul.mubr.bf16.gmra.mxu0 %v250
  %v564 = vpop.f32.mrf.mxu0
  %v565 = vadd.f32 0.0, %v564
  %v566 = vpop.f32.mrf.mxu0
  %v567 = vpop.f32.mrf.mxu0
  %v568 = vadd.f32 0.0, %v567
  %v569 = vpop.f32.mrf.mxu0
  %570 = vmatprep.mubr.bf16.mxu0 0
  %571 = vmatmul.mubr.bf16.gmra.mxu0 %v251
  %v572 = vpop.f32.mrf.mxu0
  %v573 = vadd.f32 0.0, %v572
  %v574 = vpop.f32.mrf.mxu0
  %v575 = vpop.f32.mrf.mxu0
  %v576 = vadd.f32 0.0, %v575
  %v577 = vpop.f32.mrf.mxu0
  %578 = vmatprep.mubr.bf16.mxu0 0
  %579 = vmatmul.mubr.bf16.gmra.mxu0 %v252
  %v580 = vpop.f32.mrf.mxu0
  %v581 = vadd.f32 0.0, %v580
  %v582 = vpop.f32.mrf.mxu0
  %v583 = vpop.f32.mrf.mxu0
  %v584 = vadd.f32 0.0, %v583
  %v585 = vpop.f32.mrf.mxu0
  %586 = vmatprep.mubr.bf16.mxu0 0
  %587 = vmatmul.mubr.bf16.gmra.mxu0 %v253
  %v588 = vpop.f32.mrf.mxu0
  %v589 = vadd.f32 0.0, %v588
  %v590 = vpop.f32.mrf.mxu0
  %v591 = vpop.f32.mrf.mxu0
  %v592 = vadd.f32 0.0, %v591
  %v593 = vpop.f32.mrf.mxu0
  %594 = vmatprep.mubr.bf16.mxu0 0
  %595 = vmatmul.mubr.bf16.gmra.mxu0 %v254
  %v596 = vpop.f32.mrf.mxu0
  %v597 = vadd.f32 0.0, %v596
  %v598 = vpop.f32.mrf.mxu0
  %v599 = vpop.f32.mrf.mxu0
  %v600 = vadd.f32 0.0, %v599
  %v601 = vpop.f32.mrf.mxu0
  %602 = vmatprep.mubr.bf16.mxu0 0
  %603 = vmatmul.mubr.bf16.gmra.mxu0 %v255
  %v604 = vpop.f32.mrf.mxu0
  %v605 = vadd.f32 0.0, %v604
  %v606 = vpop.f32.mrf.mxu0
  %v607 = vpop.f32.mrf.mxu0
  %v608 = vadd.f32 0.0, %v607
  %v609 = vpop.f32.mrf.mxu0
  %610 = vmatprep.mubr.bf16.mxu0 0
  %611 = vmatmul.mubr.bf16.gmra.mxu0 %v256
  %v612 = vpop.f32.mrf.mxu0
  %v613 = vadd.f32 0.0, %v612
  %v614 = vpop.f32.mrf.mxu0
  %v615 = vpop.f32.mrf.mxu0
  %v616 = vadd.f32 0.0, %v615
  %v617 = vpop.f32.mrf.mxu0
  %618 = vmatprep.mubr.bf16.mxu0 0
  %619 = vmatmul.mubr.bf16.gmra.mxu0 %v257
  %v620 = vpop.f32.mrf.mxu0
  %v621 = vadd.f32 0.0, %v620
  %v622 = vpop.f32.mrf.mxu0
  %v623 = vpop.f32.mrf.mxu0
  %v624 = vadd.f32 0.0, %v623
  %v625 = vpop.f32.mrf.mxu0
  %626 = vdwg.mxu0
  %v627 = vadd.f32 %v373, %v376
  %v628 = vadd.f32 %v627, %v381
  %v629 = vadd.f32 %v628, %v384
  %v630 = vadd.f32 %v629, %v389
  %v631 = vadd.f32 %v630, %v392
  %v632 = vadd.f32 %v631, %v397
  %v633 = vadd.f32 %v632, %v400
  %v634 = vadd.f32 %v633, %v405
  %v635 = vadd.f32 %v634, %v408
  %v636 = vadd.f32 %v635, %v413
  %v637 = vadd.f32 %v636, %v416
  %v638 = vadd.f32 %v637, %v421
  %v639 = vadd.f32 %v638, %v424
  %v640 = vadd.f32 %v639, %v429
  %v641 = vadd.f32 %v640, %v432
  %v642 = vadd.f32 %v641, %v437
  %v643 = vadd.f32 %v642, %v440
  %v644 = vadd.f32 %v643, %v445
  %v645 = vadd.f32 %v644, %v448
  %v646 = vadd.f32 %v645, %v453
  %v647 = vadd.f32 %v646, %v456
  %v648 = vadd.f32 %v647, %v461
  %v649 = vadd.f32 %v648, %v464
  %v650 = vadd.f32 %v649, %v469
  %v651 = vadd.f32 %v650, %v472
  %v652 = vadd.f32 %v651, %v477
  %v653 = vadd.f32 %v652, %v480
  %v654 = vadd.f32 %v653, %v485
  %v655 = vadd.f32 %v654, %v488
  %v656 = vadd.f32 %v655, %v493
  %v657 = vadd.f32 %v656, %v496
  %v658 = vadd.f32 %v657, %v501
  %v659 = vadd.f32 %v658, %v504
  %v660 = vadd.f32 %v659, %v509
  %v661 = vadd.f32 %v660, %v512
  %v662 = vadd.f32 %v661, %v517
  %v663 = vadd.f32 %v662, %v520
  %v664 = vadd.f32 %v663, %v525
  %v665 = vadd.f32 %v664, %v528
  %v666 = vadd.f32 %v665, %v533
  %v667 = vadd.f32 %v666, %v536
  %v668 = vadd.f32 %v667, %v541
  %v669 = vadd.f32 %v668, %v544
  %v670 = vadd.f32 %v669, %v549
  %v671 = vadd.f32 %v670, %v552
  %v672 = vadd.f32 %v671, %v557
  %v673 = vadd.f32 %v672, %v560
  %v674 = vadd.f32 %v673, %v565
  %v675 = vadd.f32 %v674, %v568
  %v676 = vadd.f32 %v675, %v573
  %v677 = vadd.f32 %v676, %v576
  %v678 = vadd.f32 %v677, %v581
  %v679 = vadd.f32 %v678, %v584
  %v680 = vadd.f32 %v679, %v589
  %v681 = vadd.f32 %v680, %v592
  %v682 = vadd.f32 %v681, %v597
  %v683 = vadd.f32 %v682, %v600
  %v684 = vadd.f32 %v683, %v605
  %v685 = vadd.f32 %v684, %v608
  %v686 = vadd.f32 %v685, %v613
  %v687 = vadd.f32 %v686, %v616
  %v688 = vadd.f32 %v687, %v621
  %v689 = vadd.f32 %v688, %v624
  %v690 = vrot.slane %v689, 4
  %v691 = vadd.f32 %v689, %v690
  %v692 = vrot.slane %v691, 2
  %v693 = vadd.f32 %v691, %v692
  %v694 = vrot.slane %v693, 1
  %v695 = vadd.f32 %v693, %v694
  %v696 = vrcp.pop 512.0
  %v697 = vmul.f32 %v695, %v696
  %v698 = vsub.f32 %v373, %v697
  %v699 = vsub.f32 %v376, %v697
  %v700 = vsub.f32 %v381, %v697
  %v701 = vsub.f32 %v384, %v697
  %v702 = vsub.f32 %v389, %v697
  %v703 = vsub.f32 %v392, %v697
  %v704 = vsub.f32 %v397, %v697
  %v705 = vsub.f32 %v400, %v697
  %v706 = vsub.f32 %v405, %v697
  %v707 = vsub.f32 %v408, %v697
  %v708 = vsub.f32 %v413, %v697
  %v709 = vsub.f32 %v416, %v697
  %v710 = vsub.f32 %v421, %v697
  %v711 = vsub.f32 %v424, %v697
  %v712 = vsub.f32 %v429, %v697
  %v713 = vsub.f32 %v432, %v697
  %v714 = vsub.f32 %v437, %v697
  %v715 = vsub.f32 %v440, %v697
  %v716 = vsub.f32 %v445, %v697
  %v717 = vsub.f32 %v448, %v697
  %v718 = vsub.f32 %v453, %v697
  %v719 = vsub.f32 %v456, %v697
  %v720 = vsub.f32 %v461, %v697
  %v721 = vsub.f32 %v464, %v697
  %v722 = vsub.f32 %v469, %v697
  %v723 = vsub.f32 %v472, %v697
  %v724 = vsub.f32 %v477, %v697
  %v725 = vsub.f32 %v480, %v697
  %v726 = vsub.f32 %v485, %v697
  %v727 = vsub.f32 %v488, %v697
  %v728 = vsub.f32 %v493, %v697
  %v729 = vsub.f32 %v496, %v697
  %v730 = vsub.f32 %v501, %v697
  %v731 = vsub.f32 %v504, %v697
  %v732 = vsub.f32 %v509, %v697
  %v733 = vsub.f32 %v512, %v697
  %v734 = vsub.f32 %v517, %v697
  %v735 = vsub.f32 %v520, %v697
  %v736 = vsub.f32 %v525, %v697
  %v737 = vsub.f32 %v528, %v697
  %v738 = vsub.f32 %v533, %v697
  %v739 = vsub.f32 %v536, %v697
  %v740 = vsub.f32 %v541, %v697
  %v741 = vsub.f32 %v544, %v697
  %v742 = vsub.f32 %v549, %v697
  %v743 = vsub.f32 %v552, %v697
  %v744 = vsub.f32 %v557, %v697
  %v745 = vsub.f32 %v560, %v697
  %v746 = vsub.f32 %v565, %v697
  %v747 = vsub.f32 %v568, %v697
  %v748 = vsub.f32 %v573, %v697
  %v749 = vsub.f32 %v576, %v697
  %v750 = vsub.f32 %v581, %v697
  %v751 = vsub.f32 %v584, %v697
  %v752 = vsub.f32 %v589, %v697
  %v753 = vsub.f32 %v592, %v697
  %v754 = vsub.f32 %v597, %v697
  %v755 = vsub.f32 %v600, %v697
  %v756 = vsub.f32 %v605, %v697
  %v757 = vsub.f32 %v608, %v697
  %v758 = vsub.f32 %v613, %v697
  %v759 = vsub.f32 %v616, %v697
  %v760 = vsub.f32 %v621, %v697
  %v761 = vsub.f32 %v624, %v697
  %v762 = vmul.f32 %v698, %v698
  %v763 = vmul.f32 %v699, %v699
  %v764 = vmul.f32 %v700, %v700
  %v765 = vmul.f32 %v701, %v701
  %v766 = vmul.f32 %v702, %v702
  %v767 = vmul.f32 %v703, %v703
  %v768 = vmul.f32 %v704, %v704
  %v769 = vmul.f32 %v705, %v705
  %v770 = vmul.f32 %v706, %v706
  %v771 = vmul.f32 %v707, %v707
  %v772 = vmul.f32 %v708, %v708
  %v773 = vmul.f32 %v709, %v709
  %v774 = vmul.f32 %v710, %v710
  %v775 = vmul.f32 %v711, %v711
  %v776 = vmul.f32 %v712, %v712
  %v777 = vmul.f32 %v713, %v713
  %v778 = vmul.f32 %v714, %v714
  %v779 = vmul.f32 %v715, %v715
  %v780 = vmul.f32 %v716, %v716
  %v781 = vmul.f32 %v717, %v717
  %v782 = vmul.f32 %v718, %v718
  %v783 = vmul.f32 %v719, %v719
  %v784 = vmul.f32 %v720, %v720
  %v785 = vmul.f32 %v721, %v721
  %v786 = vmul.f32 %v722, %v722
  %v787 = vmul.f32 %v723, %v723
  %v788 = vmul.f32 %v724, %v724
  %v789 = vmul.f32 %v725, %v725
  %v790 = vmul.f32 %v726, %v726
  %v791 = vmul.f32 %v727, %v727
  %v792 = vmul.f32 %v728, %v728
  %v793 = vmul.f32 %v729, %v729
  %v794 = vmul.f32 %v730, %v730
  %v795 = vmul.f32 %v731, %v731
  %v796 = vmul.f32 %v732, %v732
  %v797 = vmul.f32 %v733, %v733
  %v798 = vmul.f32 %v734, %v734
  %v799 = vmul.f32 %v735, %v735
  %v800 = vmul.f32 %v736, %v736
  %v801 = vmul.f32 %v737, %v737
  %v802 = vmul.f32 %v738, %v738
  %v803 = vmul.f32 %v739, %v739
  %v804 = vmul.f32 %v740, %v740
  %v805 = vmul.f32 %v741, %v741
  %v806 = vmul.f32 %v742, %v742
  %v807 = vmul.f32 %v743, %v743
  %v808 = vmul.f32 %v744, %v744
  %v809 = vmul.f32 %v745, %v745
  %v810 = vmul.f32 %v746, %v746
  %v811 = vmul.f32 %v747, %v747
  %v812 = vmul.f32 %v748, %v748
  %v813 = vmul.f32 %v749, %v749
  %v814 = vmul.f32 %v750, %v750
  %v815 = vmul.f32 %v751, %v751
  %v816 = vmul.f32 %v752, %v752
  %v817 = vmul.f32 %v753, %v753
  %v818 = vmul.f32 %v754, %v754
  %v819 = vmul.f32 %v755, %v755
  %v820 = vmul.f32 %v756, %v756
  %v821 = vmul.f32 %v757, %v757
  %v822 = vmul.f32 %v758, %v758
  %v823 = vmul.f32 %v759, %v759
  %v824 = vmul.f32 %v760, %v760
  %v825 = vmul.f32 %v761, %v761
  %v826 = vadd.f32 %v762, %v763
  %v827 = vadd.f32 %v826, %v764
  %v828 = vadd.f32 %v827, %v765
  %v829 = vadd.f32 %v828, %v766
  %v830 = vadd.f32 %v829, %v767
  %v831 = vadd.f32 %v830, %v768
  %v832 = vadd.f32 %v831, %v769
  %v833 = vadd.f32 %v832, %v770
  %v834 = vadd.f32 %v833, %v771
  %v835 = vadd.f32 %v834, %v772
  %v836 = vadd.f32 %v835, %v773
  %v837 = vadd.f32 %v836, %v774
  %v838 = vadd.f32 %v837, %v775
  %v839 = vadd.f32 %v838, %v776
  %v840 = vadd.f32 %v839, %v777
  %v841 = vadd.f32 %v840, %v778
  %v842 = vadd.f32 %v841, %v779
  %v843 = vadd.f32 %v842, %v780
  %v844 = vadd.f32 %v843, %v781
  %v845 = vadd.f32 %v844, %v782
  %v846 = vadd.f32 %v845, %v783
  %v847 = vadd.f32 %v846, %v784
  %v848 = vadd.f32 %v847, %v785
  %v849 = vadd.f32 %v848, %v786
  %v850 = vadd.f32 %v849, %v787
  %v851 = vadd.f32 %v850, %v788
  %v852 = vadd.f32 %v851, %v789
  %v853 = vadd.f32 %v852, %v790
  %v854 = vadd.f32 %v853, %v791
  %v855 = vadd.f32 %v854, %v792
  %v856 = vadd.f32 %v855, %v793
  %v857 = vadd.f32 %v856, %v794
  %v858 = vadd.f32 %v857, %v795
  %v859 = vadd.f32 %v858, %v796
  %v860 = vadd.f32 %v859, %v797
  %v861 = vadd.f32 %v860, %v798
  %v862 = vadd.f32 %v861, %v799
  %v863 = vadd.f32 %v862, %v800
  %v864 = vadd.f32 %v863, %v801
  %v865 = vadd.f32 %v864, %v802
  %v866 = vadd.f32 %v865, %v803
  %v867 = vadd.f32 %v866, %v804
  %v868 = vadd.f32 %v867, %v805
  %v869 = vadd.f32 %v868, %v806
  %v870 = vadd.f32 %v869, %v807
  %v871 = vadd.f32 %v870, %v808
  %v872 = vadd.f32 %v871, %v809
  %v873 = vadd.f32 %v872, %v810
  %v874 = vadd.f32 %v873, %v811
  %v875 = vadd.f32 %v874, %v812
  %v876 = vadd.f32 %v875, %v813
  %v877 = vadd.f32 %v876, %v814
  %v878 = vadd.f32 %v877, %v815
  %v879 = vadd.f32 %v878, %v816
  %v880 = vadd.f32 %v879, %v817
  %v881 = vadd.f32 %v880, %v818
  %v882 = vadd.f32 %v881, %v819
  %v883 = vadd.f32 %v882, %v820
  %v884 = vadd.f32 %v883, %v821
  %v885 = vadd.f32 %v884, %v822
  %v886 = vadd.f32 %v885, %v823
  %v887 = vadd.f32 %v886, %v824
  %v888 = vadd.f32 %v887, %v825
  %v889 = vrot.slane %v888, 4
  %v890 = vadd.f32 %v888, %v889
  %v891 = vrot.slane %v890, 2
  %v892 = vadd.f32 %v890, %v891
  %v893 = vrot.slane %v892, 1
  %v894 = vadd.f32 %v892, %v893
  %v895 = vmul.f32 %v894, %v696
  %v896 = vld [vmem:[%s2] sm:$0x1]
  %v897 = vadd.f32 %v895, 1e-05
  %v898 = vrsqrt.pop %v897
  %v899 = vmul.f32 %v896, %v898
  %v900 = vld [vmem:[%s3] sm:$0x1]
  %v901 = vmul.f32 %v697, %v899
  %v902 = vsub.f32 %v900, %v901
  %v904 = vlaneseq
  %v905 = vshrl.u32 %v904, 7
  %v906 = vsub.s32 0, %v905
  %v907 = vrot.slane %v899, %v906
  %v909 = vmul.f32 %v373, %v907
  %v910 = vmul.f32 %v376, %v907
  %v911 = vmul.f32 %v381, %v907
  %v912 = vmul.f32 %v384, %v907
  %v913 = vmul.f32 %v389, %v907
  %v914 = vmul.f32 %v392, %v907
  %v915 = vmul.f32 %v397, %v907
  %v916 = vmul.f32 %v400, %v907
  %v917 = vmul.f32 %v405, %v907
  %v918 = vmul.f32 %v408, %v907
  %v919 = vmul.f32 %v413, %v907
  %v920 = vmul.f32 %v416, %v907
  %v921 = vmul.f32 %v421, %v907
  %v922 = vmul.f32 %v424, %v907
  %v923 = vmul.f32 %v429, %v907
  %v924 = vmul.f32 %v432, %v907
  %v925 = vmul.f32 %v437, %v907
  %v926 = vmul.f32 %v440, %v907
  %v927 = vmul.f32 %v445, %v907
  %v928 = vmul.f32 %v448, %v907
  %v929 = vmul.f32 %v453, %v907
  %v930 = vmul.f32 %v456, %v907
  %v931 = vmul.f32 %v461, %v907
  %v932 = vmul.f32 %v464, %v907
  %v933 = vmul.f32 %v469, %v907
  %v934 = vmul.f32 %v472, %v907
  %v935 = vmul.f32 %v477, %v907
  %v936 = vmul.f32 %v480, %v907
  %v937 = vmul.f32 %v485, %v907
  %v938 = vmul.f32 %v488, %v907
  %v939 = vmul.f32 %v493, %v907
  %v940 = vmul.f32 %v496, %v907
  %v941 = vmul.f32 %v501, %v907
  %v942 = vmul.f32 %v504, %v907
  %v943 = vmul.f32 %v509, %v907
  %v944 = vmul.f32 %v512, %v907
  %v945 = vmul.f32 %v517, %v907
  %v946 = vmul.f32 %v520, %v907
  %v947 = vmul.f32 %v525, %v907
  %v948 = vmul.f32 %v528, %v907
  %v949 = vmul.f32 %v533, %v907
  %v950 = vmul.f32 %v536, %v907
  %v951 = vmul.f32 %v541, %v907
  %v952 = vmul.f32 %v544, %v907
  %v953 = vmul.f32 %v549, %v907
  %v954 = vmul.f32 %v552, %v907
  %v955 = vmul.f32 %v557, %v907
  %v956 = vmul.f32 %v560, %v907
  %v957 = vmul.f32 %v565, %v907
  %v958 = vmul.f32 %v568, %v907
  %v959 = vmul.f32 %v573, %v907
  %v960 = vmul.f32 %v576, %v907
  %v961 = vmul.f32 %v581, %v907
  %v962 = vmul.f32 %v584, %v907
  %v963 = vmul.f32 %v589, %v907
  %v964 = vmul.f32 %v592, %v907
  %v965 = vmul.f32 %v597, %v907
  %v966 = vmul.f32 %v600, %v907
  %v967 = vmul.f32 %v605, %v907
  %v968 = vmul.f32 %v608, %v907
  %v969 = vmul.f32 %v613, %v907
  %v970 = vmul.f32 %v616, %v907
  %v971 = vmul.f32 %v621, %v907
  %v972 = vmul.f32 %v624, %v907
  %v974 = vlaneseq
  %v975 = vshrl.u32 %v974, 7
  %v976 = vsub.s32 0, %v975
  %v977 = vrot.slane %v902, %v976
  %v979 = vadd.f32 %v909, %v977
  %v980 = vadd.f32 %v910, %v977
  %v981 = vadd.f32 %v911, %v977
  %v982 = vadd.f32 %v912, %v977
  %v983 = vadd.f32 %v913, %v977
  %v984 = vadd.f32 %v914, %v977
  %v985 = vadd.f32 %v915, %v977
  %v986 = vadd.f32 %v916, %v977
  %v987 = vadd.f32 %v917, %v977
  %v988 = vadd.f32 %v918, %v977
  %v989 = vadd.f32 %v919, %v977
  %v990 = vadd.f32 %v920, %v977
  %v991 = vadd.f32 %v921, %v977
  %v992 = vadd.f32 %v922, %v977
  %v993 = vadd.f32 %v923, %v977
  %v994 = vadd.f32 %v924, %v977
  %v995 = vadd.f32 %v925, %v977
  %v996 = vadd.f32 %v926, %v977
  %v997 = vadd.f32 %v927, %v977
  %v998 = vadd.f32 %v928, %v977
  %v999 = vadd.f32 %v929, %v977
  %v1000 = vadd.f32 %v930, %v977
  %v1001 = vadd.f32 %v931, %v977
  %v1002 = vadd.f32 %v932, %v977
  %v1003 = vadd.f32 %v933, %v977
  %v1004 = vadd.f32 %v934, %v977
  %v1005 = vadd.f32 %v935, %v977
  %v1006 = vadd.f32 %v936, %v977
  %v1007 = vadd.f32 %v937, %v977
  %v1008 = vadd.f32 %v938, %v977
  %v1009 = vadd.f32 %v939, %v977
  %v1010 = vadd.f32 %v940, %v977
  %v1011 = vadd.f32 %v941, %v977
  %v1012 = vadd.f32 %v942, %v977
  %v1013 = vadd.f32 %v943, %v977
  %v1014 = vadd.f32 %v944, %v977
  %v1015 = vadd.f32 %v945, %v977
  %v1016 = vadd.f32 %v946, %v977
  %v1017 = vadd.f32 %v947, %v977
  %v1018 = vadd.f32 %v948, %v977
  %v1019 = vadd.f32 %v949, %v977
  %v1020 = vadd.f32 %v950, %v977
  %v1021 = vadd.f32 %v951, %v977
  %v1022 = vadd.f32 %v952, %v977
  %v1023 = vadd.f32 %v953, %v977
  %v1024 = vadd.f32 %v954, %v977
  %v1025 = vadd.f32 %v955, %v977
  %v1026 = vadd.f32 %v956, %v977
  %v1027 = vadd.f32 %v957, %v977
  %v1028 = vadd.f32 %v958, %v977
  %v1029 = vadd.f32 %v959, %v977
  %v1030 = vadd.f32 %v960, %v977
  %v1031 = vadd.f32 %v961, %v977
  %v1032 = vadd.f32 %v962, %v977
  %v1033 = vadd.f32 %v963, %v977
  %v1034 = vadd.f32 %v964, %v977
  %v1035 = vadd.f32 %v965, %v977
  %v1036 = vadd.f32 %v966, %v977
  %v1037 = vadd.f32 %v967, %v977
  %v1038 = vadd.f32 %v968, %v977
  %v1039 = vadd.f32 %v969, %v977
  %v1040 = vadd.f32 %v970, %v977
  %v1041 = vadd.f32 %v971, %v977
  %v1042 = vadd.f32 %v972, %v977
  %vm1043 = vcmp.ge.f32.partialorder %v979, 0.0
  %vm1044 = vcmp.ge.f32.partialorder %v980, 0.0
  %vm1045 = vcmp.ge.f32.partialorder %v981, 0.0
  %vm1046 = vcmp.ge.f32.partialorder %v982, 0.0
  %vm1047 = vcmp.ge.f32.partialorder %v983, 0.0
  %vm1048 = vcmp.ge.f32.partialorder %v984, 0.0
  %vm1049 = vcmp.ge.f32.partialorder %v985, 0.0
  %vm1050 = vcmp.ge.f32.partialorder %v986, 0.0
  %vm1051 = vcmp.ge.f32.partialorder %v987, 0.0
  %vm1052 = vcmp.ge.f32.partialorder %v988, 0.0
  %vm1053 = vcmp.ge.f32.partialorder %v989, 0.0
  %vm1054 = vcmp.ge.f32.partialorder %v990, 0.0
  %vm1055 = vcmp.ge.f32.partialorder %v991, 0.0
  %vm1056 = vcmp.ge.f32.partialorder %v992, 0.0
  %vm1057 = vcmp.ge.f32.partialorder %v993, 0.0
  %vm1058 = vcmp.ge.f32.partialorder %v994, 0.0
  %vm1059 = vcmp.ge.f32.partialorder %v995, 0.0
  %vm1060 = vcmp.ge.f32.partialorder %v996, 0.0
  %vm1061 = vcmp.ge.f32.partialorder %v997, 0.0
  %vm1062 = vcmp.ge.f32.partialorder %v998, 0.0
  %vm1063 = vcmp.ge.f32.partialorder %v999, 0.0
  %vm1064 = vcmp.ge.f32.partialorder %v1000, 0.0
  %vm1065 = vcmp.ge.f32.partialorder %v1001, 0.0
  %vm1066 = vcmp.ge.f32.partialorder %v1002, 0.0
  %vm1067 = vcmp.ge.f32.partialorder %v1003, 0.0
  %vm1068 = vcmp.ge.f32.partialorder %v1004, 0.0
  %vm1069 = vcmp.ge.f32.partialorder %v1005, 0.0
  %vm1070 = vcmp.ge.f32.partialorder %v1006, 0.0
  %vm1071 = vcmp.ge.f32.partialorder %v1007, 0.0
  %vm1072 = vcmp.ge.f32.partialorder %v1008, 0.0
  %vm1073 = vcmp.ge.f32.partialorder %v1009, 0.0
  %vm1074 = vcmp.ge.f32.partialorder %v1010, 0.0
  %vm1075 = vcmp.ge.f32.partialorder %v1011, 0.0
  %vm1076 = vcmp.ge.f32.partialorder %v1012, 0.0
  %vm1077 = vcmp.ge.f32.partialorder %v1013, 0.0
  %vm1078 = vcmp.ge.f32.partialorder %v1014, 0.0
  %vm1079 = vcmp.ge.f32.partialorder %v1015, 0.0
  %vm1080 = vcmp.ge.f32.partialorder %v1016, 0.0
  %vm1081 = vcmp.ge.f32.partialorder %v1017, 0.0
  %vm1082 = vcmp.ge.f32.partialorder %v1018, 0.0
  %vm1083 = vcmp.ge.f32.partialorder %v1019, 0.0
  %vm1084 = vcmp.ge.f32.partialorder %v1020, 0.0
  %vm1085 = vcmp.ge.f32.partialorder %v1021, 0.0
  %vm1086 = vcmp.ge.f32.partialorder %v1022, 0.0
  %vm1087 = vcmp.ge.f32.partialorder %v1023, 0.0
  %vm1088 = vcmp.ge.f32.partialorder %v1024, 0.0
  %vm1089 = vcmp.ge.f32.partialorder %v1025, 0.0
  %vm1090 = vcmp.ge.f32.partialorder %v1026, 0.0
  %vm1091 = vcmp.ge.f32.partialorder %v1027, 0.0
  %vm1092 = vcmp.ge.f32.partialorder %v1028, 0.0
  %vm1093 = vcmp.ge.f32.partialorder %v1029, 0.0
  %vm1094 = vcmp.ge.f32.partialorder %v1030, 0.0
  %vm1095 = vcmp.ge.f32.partialorder %v1031, 0.0
  %vm1096 = vcmp.ge.f32.partialorder %v1032, 0.0
  %vm1097 = vcmp.ge.f32.partialorder %v1033, 0.0
  %vm1098 = vcmp.ge.f32.partialorder %v1034, 0.0
  %vm1099 = vcmp.ge.f32.partialorder %v1035, 0.0
  %vm1100 = vcmp.ge.f32.partialorder %v1036, 0.0
  %vm1101 = vcmp.ge.f32.partialorder %v1037, 0.0
  %vm1102 = vcmp.ge.f32.partialorder %v1038, 0.0
  %vm1103 = vcmp.ge.f32.partialorder %v1039, 0.0
  %vm1104 = vcmp.ge.f32.partialorder %v1040, 0.0
  %vm1105 = vcmp.ge.f32.partialorder %v1041, 0.0
  %vm1106 = vcmp.ge.f32.partialorder %v1042, 0.0
  %v1107 = vmul.f32 %v979, 0.2
  %v1108 = vmul.f32 %v980, 0.2
  %v1109 = vmul.f32 %v981, 0.2
  %v1110 = vmul.f32 %v982, 0.2
  %v1111 = vmul.f32 %v983, 0.2
  %v1112 = vmul.f32 %v984, 0.2
  %v1113 = vmul.f32 %v985, 0.2
  %v1114 = vmul.f32 %v986, 0.2
  %v1115 = vmul.f32 %v987, 0.2
  %v1116 = vmul.f32 %v988, 0.2
  %v1117 = vmul.f32 %v989, 0.2
  %v1118 = vmul.f32 %v990, 0.2
  %v1119 = vmul.f32 %v991, 0.2
  %v1120 = vmul.f32 %v992, 0.2
  %v1121 = vmul.f32 %v993, 0.2
  %v1122 = vmul.f32 %v994, 0.2
  %v1123 = vmul.f32 %v995, 0.2
  %v1124 = vmul.f32 %v996, 0.2
  %v1125 = vmul.f32 %v997, 0.2
  %v1126 = vmul.f32 %v998, 0.2
  %v1127 = vmul.f32 %v999, 0.2
  %v1128 = vmul.f32 %v1000, 0.2
  %v1129 = vmul.f32 %v1001, 0.2
  %v1130 = vmul.f32 %v1002, 0.2
  %v1131 = vmul.f32 %v1003, 0.2
  %v1132 = vmul.f32 %v1004, 0.2
  %v1133 = vmul.f32 %v1005, 0.2
  %v1134 = vmul.f32 %v1006, 0.2
  %v1135 = vmul.f32 %v1007, 0.2
  %v1136 = vmul.f32 %v1008, 0.2
  %v1137 = vmul.f32 %v1009, 0.2
  %v1138 = vmul.f32 %v1010, 0.2
  %v1139 = vmul.f32 %v1011, 0.2
  %v1140 = vmul.f32 %v1012, 0.2
  %v1141 = vmul.f32 %v1013, 0.2
  %v1142 = vmul.f32 %v1014, 0.2
  %v1143 = vmul.f32 %v1015, 0.2
  %v1144 = vmul.f32 %v1016, 0.2
  %v1145 = vmul.f32 %v1017, 0.2
  %v1146 = vmul.f32 %v1018, 0.2
  %v1147 = vmul.f32 %v1019, 0.2
  %v1148 = vmul.f32 %v1020, 0.2
  %v1149 = vmul.f32 %v1021, 0.2
  %v1150 = vmul.f32 %v1022, 0.2
  %v1151 = vmul.f32 %v1023, 0.2
  %v1152 = vmul.f32 %v1024, 0.2
  %v1153 = vmul.f32 %v1025, 0.2
  %v1154 = vmul.f32 %v1026, 0.2
  %v1155 = vmul.f32 %v1027, 0.2
  %v1156 = vmul.f32 %v1028, 0.2
  %v1157 = vmul.f32 %v1029, 0.2
  %v1158 = vmul.f32 %v1030, 0.2
  %v1159 = vmul.f32 %v1031, 0.2
  %v1160 = vmul.f32 %v1032, 0.2
  %v1161 = vmul.f32 %v1033, 0.2
  %v1162 = vmul.f32 %v1034, 0.2
  %v1163 = vmul.f32 %v1035, 0.2
  %v1164 = vmul.f32 %v1036, 0.2
  %v1165 = vmul.f32 %v1037, 0.2
  %v1166 = vmul.f32 %v1038, 0.2
  %v1167 = vmul.f32 %v1039, 0.2
  %v1168 = vmul.f32 %v1040, 0.2
  %v1169 = vmul.f32 %v1041, 0.2
  %v1170 = vmul.f32 %v1042, 0.2
  %v1171 = vsel %vm1043, %v979, %v1107
  %v1172 = vsel %vm1044, %v980, %v1108
  %v1173 = vsel %vm1045, %v981, %v1109
  %v1174 = vsel %vm1046, %v982, %v1110
  %v1175 = vsel %vm1047, %v983, %v1111
  %v1176 = vsel %vm1048, %v984, %v1112
  %v1177 = vsel %vm1049, %v985, %v1113
  %v1178 = vsel %vm1050, %v986, %v1114
  %v1179 = vsel %vm1051, %v987, %v1115
  %v1180 = vsel %vm1052, %v988, %v1116
  %v1181 = vsel %vm1053, %v989, %v1117
  %v1182 = vsel %vm1054, %v990, %v1118
  %v1183 = vsel %vm1055, %v991, %v1119
  %v1184 = vsel %vm1056, %v992, %v1120
  %v1185 = vsel %vm1057, %v993, %v1121
  %v1186 = vsel %vm1058, %v994, %v1122
  %v1187 = vsel %vm1059, %v995, %v1123
  %v1188 = vsel %vm1060, %v996, %v1124
  %v1189 = vsel %vm1061, %v997, %v1125
  %v1190 = vsel %vm1062, %v998, %v1126
  %v1191 = vsel %vm1063, %v999, %v1127
  %v1192 = vsel %vm1064, %v1000, %v1128
  %v1193 = vsel %vm1065, %v1001, %v1129
  %v1194 = vsel %vm1066, %v1002, %v1130
  %v1195 = vsel %vm1067, %v1003, %v1131
  %v1196 = vsel %vm1068, %v1004, %v1132
  %v1197 = vsel %vm1069, %v1005, %v1133
  %v1198 = vsel %vm1070, %v1006, %v1134
  %v1199 = vsel %vm1071, %v1007, %v1135
  %v1200 = vsel %vm1072, %v1008, %v1136
  %v1201 = vsel %vm1073, %v1009, %v1137
  %v1202 = vsel %vm1074, %v1010, %v1138
  %v1203 = vsel %vm1075, %v1011, %v1139
  %v1204 = vsel %vm1076, %v1012, %v1140
  %v1205 = vsel %vm1077, %v1013, %v1141
  %v1206 = vsel %vm1078, %v1014, %v1142
  %v1207 = vsel %vm1079, %v1015, %v1143
  %v1208 = vsel %vm1080, %v1016, %v1144
  %v1209 = vsel %vm1081, %v1017, %v1145
  %v1210 = vsel %vm1082, %v1018, %v1146
  %v1211 = vsel %vm1083, %v1019, %v1147
  %v1212 = vsel %vm1084, %v1020, %v1148
  %v1213 = vsel %vm1085, %v1021, %v1149
  %v1214 = vsel %vm1086, %v1022, %v1150
  %v1215 = vsel %vm1087, %v1023, %v1151
  %v1216 = vsel %vm1088, %v1024, %v1152
  %v1217 = vsel %vm1089, %v1025, %v1153
  %v1218 = vsel %vm1090, %v1026, %v1154
  %v1219 = vsel %vm1091, %v1027, %v1155
  %v1220 = vsel %vm1092, %v1028, %v1156
  %v1221 = vsel %vm1093, %v1029, %v1157
  %v1222 = vsel %vm1094, %v1030, %v1158
  %v1223 = vsel %vm1095, %v1031, %v1159
  %v1224 = vsel %vm1096, %v1032, %v1160
  %v1225 = vsel %vm1097, %v1033, %v1161
  %v1226 = vsel %vm1098, %v1034, %v1162
  %v1227 = vsel %vm1099, %v1035, %v1163
  %v1228 = vsel %vm1100, %v1036, %v1164
  %v1229 = vsel %vm1101, %v1037, %v1165
  %v1230 = vsel %vm1102, %v1038, %v1166
  %v1231 = vsel %vm1103, %v1039, %v1167
  %v1232 = vsel %vm1104, %v1040, %v1168
  %v1233 = vsel %vm1105, %v1041, %v1169
  %v1234 = vsel %vm1106, %v1042, %v1170
  %v1235 = vpack.c.bf16 %v1172, %v1171
  %v1236 = vpack.c.bf16 %v1174, %v1173
  %v1237 = vpack.c.bf16 %v1176, %v1175
  %v1238 = vpack.c.bf16 %v1178, %v1177
  %v1239 = vpack.c.bf16 %v1180, %v1179
  %v1240 = vpack.c.bf16 %v1182, %v1181
  %v1241 = vpack.c.bf16 %v1184, %v1183
  %v1242 = vpack.c.bf16 %v1186, %v1185
  %v1243 = vpack.c.bf16 %v1188, %v1187
  %v1244 = vpack.c.bf16 %v1190, %v1189
  %v1245 = vpack.c.bf16 %v1192, %v1191
  %v1246 = vpack.c.bf16 %v1194, %v1193
  %v1247 = vpack.c.bf16 %v1196, %v1195
  %v1248 = vpack.c.bf16 %v1198, %v1197
  %v1249 = vpack.c.bf16 %v1200, %v1199
  %v1250 = vpack.c.bf16 %v1202, %v1201
  %v1251 = vpack.c.bf16 %v1204, %v1203
  %v1252 = vpack.c.bf16 %v1206, %v1205
  %v1253 = vpack.c.bf16 %v1208, %v1207
  %v1254 = vpack.c.bf16 %v1210, %v1209
  %v1255 = vpack.c.bf16 %v1212, %v1211
  %v1256 = vpack.c.bf16 %v1214, %v1213
  %v1257 = vpack.c.bf16 %v1216, %v1215
  %v1258 = vpack.c.bf16 %v1218, %v1217
  %v1259 = vpack.c.bf16 %v1220, %v1219
  %v1260 = vpack.c.bf16 %v1222, %v1221
  %v1261 = vpack.c.bf16 %v1224, %v1223
  %v1262 = vpack.c.bf16 %v1226, %v1225
  %v1263 = vpack.c.bf16 %v1228, %v1227
  %v1264 = vpack.c.bf16 %v1230, %v1229
  %v1265 = vpack.c.bf16 %v1232, %v1231
  %v1266 = vpack.c.bf16 %v1234, %v1233
  %v1299 = vunpack.c.l.b16 %v1235
  %v1300 = vunpack.c.h.b16 %v1235
  %v1301 = vunpack.c.l.b16 %v1236
  %v1302 = vunpack.c.h.b16 %v1236
  %v1303 = vunpack.c.l.b16 %v1237
  %v1304 = vunpack.c.h.b16 %v1237
  %v1305 = vunpack.c.l.b16 %v1238
  %v1306 = vunpack.c.h.b16 %v1238
  %v1307 = vunpack.c.l.b16 %v1239
  %v1308 = vunpack.c.h.b16 %v1239
  %v1309 = vunpack.c.l.b16 %v1240
  %v1310 = vunpack.c.h.b16 %v1240
  %v1311 = vunpack.c.l.b16 %v1241
  %v1312 = vunpack.c.h.b16 %v1241
  %v1313 = vunpack.c.l.b16 %v1242
  %v1314 = vunpack.c.h.b16 %v1242
  %v1315 = vunpack.c.l.b16 %v1243
  %v1316 = vunpack.c.h.b16 %v1243
  %v1317 = vunpack.c.l.b16 %v1244
  %v1318 = vunpack.c.h.b16 %v1244
  %v1319 = vunpack.c.l.b16 %v1245
  %v1320 = vunpack.c.h.b16 %v1245
  %v1321 = vunpack.c.l.b16 %v1246
  %v1322 = vunpack.c.h.b16 %v1246
  %v1323 = vunpack.c.l.b16 %v1247
  %v1324 = vunpack.c.h.b16 %v1247
  %v1325 = vunpack.c.l.b16 %v1248
  %v1326 = vunpack.c.h.b16 %v1248
  %v1327 = vunpack.c.l.b16 %v1249
  %v1328 = vunpack.c.h.b16 %v1249
  %v1329 = vunpack.c.l.b16 %v1250
  %v1330 = vunpack.c.h.b16 %v1250
  %v1331 = vunpack.c.l.b16 %v1251
  %v1332 = vunpack.c.h.b16 %v1251
  %v1333 = vunpack.c.l.b16 %v1252
  %v1334 = vunpack.c.h.b16 %v1252
  %v1335 = vunpack.c.l.b16 %v1253
  %v1336 = vunpack.c.h.b16 %v1253
  %v1337 = vunpack.c.l.b16 %v1254
  %v1338 = vunpack.c.h.b16 %v1254
  %v1339 = vunpack.c.l.b16 %v1255
  %v1340 = vunpack.c.h.b16 %v1255
  %v1341 = vunpack.c.l.b16 %v1256
  %v1342 = vunpack.c.h.b16 %v1256
  %v1343 = vunpack.c.l.b16 %v1257
  %v1344 = vunpack.c.h.b16 %v1257
  %v1345 = vunpack.c.l.b16 %v1258
  %v1346 = vunpack.c.h.b16 %v1258
  %v1347 = vunpack.c.l.b16 %v1259
  %v1348 = vunpack.c.h.b16 %v1259
  %v1349 = vunpack.c.l.b16 %v1260
  %v1350 = vunpack.c.h.b16 %v1260
  %v1351 = vunpack.c.l.b16 %v1261
  %v1352 = vunpack.c.h.b16 %v1261
  %v1353 = vunpack.c.l.b16 %v1262
  %v1354 = vunpack.c.h.b16 %v1262
  %v1355 = vunpack.c.l.b16 %v1263
  %v1356 = vunpack.c.h.b16 %v1263
  %v1357 = vunpack.c.l.b16 %v1264
  %v1358 = vunpack.c.h.b16 %v1264
  %v1359 = vunpack.c.l.b16 %v1265
  %v1360 = vunpack.c.h.b16 %v1265
  %v1361 = vunpack.c.l.b16 %v1266
  %v1362 = vunpack.c.h.b16 %v1266
  %v1363 = vpack.c.b16 %v1299, %v1299
  %v1364 = vpack.c.b16 %v1300, %v1300
  %v1365 = vpack.c.b16 %v1301, %v1301
  %v1366 = vpack.c.b16 %v1302, %v1302
  %v1367 = vpack.c.b16 %v1303, %v1303
  %v1368 = vpack.c.b16 %v1304, %v1304
  %v1369 = vpack.c.b16 %v1305, %v1305
  %v1370 = vpack.c.b16 %v1306, %v1306
  %v1371 = vpack.c.b16 %v1307, %v1307
  %v1372 = vpack.c.b16 %v1308, %v1308
  %v1373 = vpack.c.b16 %v1309, %v1309
  %v1374 = vpack.c.b16 %v1310, %v1310
  %v1375 = vpack.c.b16 %v1311, %v1311
  %v1376 = vpack.c.b16 %v1312, %v1312
  %v1377 = vpack.c.b16 %v1313, %v1313
  %v1378 = vpack.c.b16 %v1314, %v1314
  %v1379 = vpack.c.b16 %v1315, %v1315
  %v1380 = vpack.c.b16 %v1316, %v1316
  %v1381 = vpack.c.b16 %v1317, %v1317
  %v1382 = vpack.c.b16 %v1318, %v1318
  %v1383 = vpack.c.b16 %v1319, %v1319
  %v1384 = vpack.c.b16 %v1320, %v1320
  %v1385 = vpack.c.b16 %v1321, %v1321
  %v1386 = vpack.c.b16 %v1322, %v1322
  %v1387 = vpack.c.b16 %v1323, %v1323
  %v1388 = vpack.c.b16 %v1324, %v1324
  %v1389 = vpack.c.b16 %v1325, %v1325
  %v1390 = vpack.c.b16 %v1326, %v1326
  %v1391 = vpack.c.b16 %v1327, %v1327
  %v1392 = vpack.c.b16 %v1328, %v1328
  %v1393 = vpack.c.b16 %v1329, %v1329
  %v1394 = vpack.c.b16 %v1330, %v1330
  %v1395 = vpack.c.b16 %v1331, %v1331
  %v1396 = vpack.c.b16 %v1332, %v1332
  %v1397 = vpack.c.b16 %v1333, %v1333
  %v1398 = vpack.c.b16 %v1334, %v1334
  %v1399 = vpack.c.b16 %v1335, %v1335
  %v1400 = vpack.c.b16 %v1336, %v1336
  %v1401 = vpack.c.b16 %v1337, %v1337
  %v1402 = vpack.c.b16 %v1338, %v1338
  %v1403 = vpack.c.b16 %v1339, %v1339
  %v1404 = vpack.c.b16 %v1340, %v1340
  %v1405 = vpack.c.b16 %v1341, %v1341
  %v1406 = vpack.c.b16 %v1342, %v1342
  %v1407 = vpack.c.b16 %v1343, %v1343
  %v1408 = vpack.c.b16 %v1344, %v1344
  %v1409 = vpack.c.b16 %v1345, %v1345
  %v1410 = vpack.c.b16 %v1346, %v1346
  %v1411 = vpack.c.b16 %v1347, %v1347
  %v1412 = vpack.c.b16 %v1348, %v1348
  %v1413 = vpack.c.b16 %v1349, %v1349
  %v1414 = vpack.c.b16 %v1350, %v1350
  %v1415 = vpack.c.b16 %v1351, %v1351
  %v1416 = vpack.c.b16 %v1352, %v1352
  %v1417 = vpack.c.b16 %v1353, %v1353
  %v1418 = vpack.c.b16 %v1354, %v1354
  %v1419 = vpack.c.b16 %v1355, %v1355
  %v1420 = vpack.c.b16 %v1356, %v1356
  %v1421 = vpack.c.b16 %v1357, %v1357
  %v1422 = vpack.c.b16 %v1358, %v1358
  %v1423 = vpack.c.b16 %v1359, %v1359
  %v1424 = vpack.c.b16 %v1360, %v1360
  %v1425 = vpack.c.b16 %v1361, %v1361
  %v1426 = vpack.c.b16 %v1362, %v1362
  %vm1491 = vcmask 125952
  %1492 = vst.msk [vmem:[%s4] sm:$0xf] %vm1491, %v1363
  %1493 = vst.msk [vmem:[%s4 + $0x4] sm:$0xf] %vm1491, %v1364
  %1494 = vst.msk [vmem:[%s4 + $0x8] sm:$0xf] %vm1491, %v1365
  %1495 = vst.msk [vmem:[%s4 + $0xc] sm:$0xf] %vm1491, %v1366
  %1496 = vst.msk [vmem:[%s4 + $0x10] sm:$0xf] %vm1491, %v1367
  %1497 = vst.msk [vmem:[%s4 + $0x14] sm:$0xf] %vm1491, %v1368
  %1498 = vst.msk [vmem:[%s4 + $0x18] sm:$0xf] %vm1491, %v1369
  %1499 = vst.msk [vmem:[%s4 + $0x1c] sm:$0xf] %vm1491, %v1370
  %1500 = vst.msk [vmem:[%s4 + $0x20] sm:$0xf] %vm1491, %v1371
  %1501 = vst.msk [vmem:[%s4 + $0x24] sm:$0xf] %vm1491, %v1372
  %1502 = vst.msk [vmem:[%s4 + $0x28] sm:$0xf] %vm1491, %v1373
  %1503 = vst.msk [vmem:[%s4 + $0x2c] sm:$0xf] %vm1491, %v1374
  %1504 = vst.msk [vmem:[%s4 + $0x30] sm:$0xf] %vm1491, %v1375
  %1505 = vst.msk [vmem:[%s4 + $0x34] sm:$0xf] %vm1491, %v1376
  %1506 = vst.msk [vmem:[%s4 + $0x38] sm:$0xf] %vm1491, %v1377
  %1507 = vst.msk [vmem:[%s4 + $0x3c] sm:$0xf] %vm1491, %v1378
  %1508 = vst.msk [vmem:[%s4 + $0x40] sm:$0xf] %vm1491, %v1379
  %1509 = vst.msk [vmem:[%s4 + $0x44] sm:$0xf] %vm1491, %v1380
  %1510 = vst.msk [vmem:[%s4 + $0x48] sm:$0xf] %vm1491, %v1381
  %1511 = vst.msk [vmem:[%s4 + $0x4c] sm:$0xf] %vm1491, %v1382
  %1512 = vst.msk [vmem:[%s4 + $0x50] sm:$0xf] %vm1491, %v1383
  %1513 = vst.msk [vmem:[%s4 + $0x54] sm:$0xf] %vm1491, %v1384
  %1514 = vst.msk [vmem:[%s4 + $0x58] sm:$0xf] %vm1491, %v1385
  %1515 = vst.msk [vmem:[%s4 + $0x5c] sm:$0xf] %vm1491, %v1386
  %1516 = vst.msk [vmem:[%s4 + $0x60] sm:$0xf] %vm1491, %v1387
  %1517 = vst.msk [vmem:[%s4 + $0x64] sm:$0xf] %vm1491, %v1388
  %1518 = vst.msk [vmem:[%s4 + $0x68] sm:$0xf] %vm1491, %v1389
  %1519 = vst.msk [vmem:[%s4 + $0x6c] sm:$0xf] %vm1491, %v1390
  %1520 = vst.msk [vmem:[%s4 + $0x70] sm:$0xf] %vm1491, %v1391
  %1521 = vst.msk [vmem:[%s4 + $0x74] sm:$0xf] %vm1491, %v1392
  %1522 = vst.msk [vmem:[%s4 + $0x78] sm:$0xf] %vm1491, %v1393
  %1523 = vst.msk [vmem:[%s4 + $0x7c] sm:$0xf] %vm1491, %v1394
  %1524 = vst.msk [vmem:[%s4 + $0x80] sm:$0xf] %vm1491, %v1395
  %1525 = vst.msk [vmem:[%s4 + $0x84] sm:$0xf] %vm1491, %v1396
  %1526 = vst.msk [vmem:[%s4 + $0x88] sm:$0xf] %vm1491, %v1397
  %1527 = vst.msk [vmem:[%s4 + $0x8c] sm:$0xf] %vm1491, %v1398
  %1528 = vst.msk [vmem:[%s4 + $0x90] sm:$0xf] %vm1491, %v1399
  %1529 = vst.msk [vmem:[%s4 + $0x94] sm:$0xf] %vm1491, %v1400
  %1530 = vst.msk [vmem:[%s4 + $0x98] sm:$0xf] %vm1491, %v1401
  %1531 = vst.msk [vmem:[%s4 + $0x9c] sm:$0xf] %vm1491, %v1402
  %1532 = vst.msk [vmem:[%s4 + $0xa0] sm:$0xf] %vm1491, %v1403
  %1533 = vst.msk [vmem:[%s4 + $0xa4] sm:$0xf] %vm1491, %v1404
  %1534 = vst.msk [vmem:[%s4 + $0xa8] sm:$0xf] %vm1491, %v1405
  %1535 = vst.msk [vmem:[%s4 + $0xac] sm:$0xf] %vm1491, %v1406
  %1536 = vst.msk [vmem:[%s4 + $0xb0] sm:$0xf] %vm1491, %v1407
  %1537 = vst.msk [vmem:[%s4 + $0xb4] sm:$0xf] %vm1491, %v1408
  %1538 = vst.msk [vmem:[%s4 + $0xb8] sm:$0xf] %vm1491, %v1409
  %1539 = vst.msk [vmem:[%s4 + $0xbc] sm:$0xf] %vm1491, %v1410
  %1540 = vst.msk [vmem:[%s4 + $0xc0] sm:$0xf] %vm1491, %v1411
  %1541 = vst.msk [vmem:[%s4 + $0xc4] sm:$0xf] %vm1491, %v1412
  %1542 = vst.msk [vmem:[%s4 + $0xc8] sm:$0xf] %vm1491, %v1413
  %1543 = vst.msk [vmem:[%s4 + $0xcc] sm:$0xf] %vm1491, %v1414
  %1544 = vst.msk [vmem:[%s4 + $0xd0] sm:$0xf] %vm1491, %v1415
  %1545 = vst.msk [vmem:[%s4 + $0xd4] sm:$0xf] %vm1491, %v1416
  %1546 = vst.msk [vmem:[%s4 + $0xd8] sm:$0xf] %vm1491, %v1417
  %1547 = vst.msk [vmem:[%s4 + $0xdc] sm:$0xf] %vm1491, %v1418
  %1548 = vst.msk [vmem:[%s4 + $0xe0] sm:$0xf] %vm1491, %v1419
  %1549 = vst.msk [vmem:[%s4 + $0xe4] sm:$0xf] %vm1491, %v1420
  %1550 = vst.msk [vmem:[%s4 + $0xe8] sm:$0xf] %vm1491, %v1421
  %1551 = vst.msk [vmem:[%s4 + $0xec] sm:$0xf] %vm1491, %v1422
  %1552 = vst.msk [vmem:[%s4 + $0xf0] sm:$0xf] %vm1491, %v1423
  %1553 = vst.msk [vmem:[%s4 + $0xf4] sm:$0xf] %vm1491, %v1424
  %1554 = vst.msk [vmem:[%s4 + $0xf8] sm:$0xf] %vm1491, %v1425
  %1555 = vst.msk [vmem:[%s4 + $0xfc] sm:$0xf] %vm1491, %v1426
  // Predicated region
  $region18: #{discriminator_forward.5} parent=0 // pred_check
    _
  $region19: #{discriminator_forward.5} parent=0 // pred_check_branch
    %1557 = sbr.rel (0) target = $region21
  $region20: #{discriminator_forward.5} parent=0 // pred_region
    _
  $region21: #{discriminator_forward.5} parent=0 // pred_fallthru
    _
  // Predicated region
  $region22: #{discriminator_forward.5} parent=0 // pred_check
    _
  $region23: #{discriminator_forward.5} parent=0 // pred_check_branch
    %1559 = sbr.rel (0) target = $region25
  $region24: #{discriminator_forward.5} parent=0 // pred_region
    _
  $region25: #{discriminator_forward.5} parent=0 // pred_fallthru
    _

// kernel: discriminator_forward.6
$region0: #{discriminator_forward.6}
  #allocation0 [shape = 'u32[]', space=smem, size = 0x4, offset = 0x4, fixed_abs, tag = 'smem constant byte address 0x4 - core index']
  #allocation1 [shape = 'u32[144,128]{1,0:T(1,128)}', space=vmem, size = 0x12000, scoped, tag = 'internal scratch']
  %s0 = inlined_call_operand.vmem [shape: bf16[128,256], index: 0, kind: input, shape index: {}]
  %s1 = inlined_call_operand.vmem [shape: bf16[256,128], index: 1, kind: input, shape index: {}]
  %s2 = inlined_call_operand.vmem [shape: f32[1,128], index: 2, kind: input, shape index: {}]
  %s3 = inlined_call_operand.vmem [shape: f32[1,128], index: 3, kind: input, shape index: {}]
  %s4 = inlined_call_operand.vmem [shape: bf16[128,32], index: 4, kind: output, shape index: {}]
  %s5 = sld [smem:[#allocation0]]
  $region26: #{discriminator_forward.6} parent=0
    _
  %s7 = ssub.s32 1, %s5
  %s8 = scalar_select 0, %s7, %s5
  // Predicated region
  $region2: #{discriminator_forward.6} parent=0 // pred_check
    _
  $region3: #{discriminator_forward.6} parent=0 // pred_check_branch
    %10 = sbr.rel (0) target = $region5
  $region4: #{discriminator_forward.6} parent=0 // pred_region
    _
  $region5: #{discriminator_forward.6} parent=0 // pred_fallthru
    _
  // Predicated region
  $region6: #{discriminator_forward.6} parent=0 // pred_check
    _
  $region7: #{discriminator_forward.6} parent=0 // pred_check_branch
    %12 = sbr.rel (0) target = $region9
  $region8: #{discriminator_forward.6} parent=0 // pred_region
    _
  $region9: #{discriminator_forward.6} parent=0 // pred_fallthru
    _
  // Predicated region
  $region10: #{discriminator_forward.6} parent=0 // pred_check
    _
  $region11: #{discriminator_forward.6} parent=0 // pred_check_branch
    %14 = sbr.rel (0) target = $region13
  $region12: #{discriminator_forward.6} parent=0 // pred_region
    _
  $region13: #{discriminator_forward.6} parent=0 // pred_fallthru
    _
  // Predicated region
  $region14: #{discriminator_forward.6} parent=0 // pred_check
    _
  $region15: #{discriminator_forward.6} parent=0 // pred_check_branch
    %16 = sbr.rel (0) target = $region17
  $region16: #{discriminator_forward.6} parent=0 // pred_region
    _
  $region17: #{discriminator_forward.6} parent=0 // pred_fallthru
    _
  %v18 = vld [vmem:[%s0] sm:$0xff]
  %v19 = vld [vmem:[%s0 + $0x8] sm:$0xff]
  %v20 = vld [vmem:[%s0 + $0x10] sm:$0xff]
  %v21 = vld [vmem:[%s0 + $0x18] sm:$0xff]
  %v22 = vld [vmem:[%s0 + $0x20] sm:$0xff]
  %v23 = vld [vmem:[%s0 + $0x28] sm:$0xff]
  %v24 = vld [vmem:[%s0 + $0x30] sm:$0xff]
  %v25 = vld [vmem:[%s0 + $0x38] sm:$0xff]
  %v26 = vld [vmem:[%s0 + $0x40] sm:$0xff]
  %v27 = vld [vmem:[%s0 + $0x48] sm:$0xff]
  %v28 = vld [vmem:[%s0 + $0x50] sm:$0xff]
  %v29 = vld [vmem:[%s0 + $0x58] sm:$0xff]
  %v30 = vld [vmem:[%s0 + $0x60] sm:$0xff]
  %v31 = vld [vmem:[%s0 + $0x68] sm:$0xff]
  %v32 = vld [vmem:[%s0 + $0x70] sm:$0xff]
  %v33 = vld [vmem:[%s0 + $0x78] sm:$0xff]
  %v34 = vld [vmem:[%s1] sm:$0xf]
  %v35 = vld [vmem:[%s1 + $0x4] sm:$0xf]
  %v36 = vld [vmem:[%s1 + $0x8] sm:$0xf]
  %v37 = vld [vmem:[%s1 + $0xc] sm:$0xf]
  %v38 = vld [vmem:[%s1 + $0x10] sm:$0xf]
  %v39 = vld [vmem:[%s1 + $0x14] sm:$0xf]
  %v40 = vld [vmem:[%s1 + $0x18] sm:$0xf]
  %v41 = vld [vmem:[%s1 + $0x1c] sm:$0xf]
  %v42 = vld [vmem:[%s1 + $0x20] sm:$0xf]
  %v43 = vld [vmem:[%s1 + $0x24] sm:$0xf]
  %v44 = vld [vmem:[%s1 + $0x28] sm:$0xf]
  %v45 = vld [vmem:[%s1 + $0x2c] sm:$0xf]
  %v46 = vld [vmem:[%s1 + $0x30] sm:$0xf]
  %v47 = vld [vmem:[%s1 + $0x34] sm:$0xf]
  %v48 = vld [vmem:[%s1 + $0x38] sm:$0xf]
  %v49 = vld [vmem:[%s1 + $0x3c] sm:$0xf]
  %v50 = vld [vmem:[%s1 + $0x40] sm:$0xf]
  %v51 = vld [vmem:[%s1 + $0x44] sm:$0xf]
  %v52 = vld [vmem:[%s1 + $0x48] sm:$0xf]
  %v53 = vld [vmem:[%s1 + $0x4c] sm:$0xf]
  %v54 = vld [vmem:[%s1 + $0x50] sm:$0xf]
  %v55 = vld [vmem:[%s1 + $0x54] sm:$0xf]
  %v56 = vld [vmem:[%s1 + $0x58] sm:$0xf]
  %v57 = vld [vmem:[%s1 + $0x5c] sm:$0xf]
  %v58 = vld [vmem:[%s1 + $0x60] sm:$0xf]
  %v59 = vld [vmem:[%s1 + $0x64] sm:$0xf]
  %v60 = vld [vmem:[%s1 + $0x68] sm:$0xf]
  %v61 = vld [vmem:[%s1 + $0x6c] sm:$0xf]
  %v62 = vld [vmem:[%s1 + $0x70] sm:$0xf]
  %v63 = vld [vmem:[%s1 + $0x74] sm:$0xf]
  %v64 = vld [vmem:[%s1 + $0x78] sm:$0xf]
  %v65 = vld [vmem:[%s1 + $0x7c] sm:$0xf]
  %v82 = vunpack.c.l.b16 %v18
  %v83 = vunpack.c.h.b16 %v18
  %v84 = vunpack.c.l.b16 %v19
  %v85 = vunpack.c.h.b16 %v19
  %v86 = vunpack.c.l.b16 %v20
  %v87 = vunpack.c.h.b16 %v20
  %v88 = vunpack.c.l.b16 %v21
  %v89 = vunpack.c.h.b16 %v21
  %v90 = vunpack.c.l.b16 %v22
  %v91 = vunpack.c.h.b16 %v22
  %v92 = vunpack.c.l.b16 %v23
  %v93 = vunpack.c.h.b16 %v23
  %v94 = vunpack.c.l.b16 %v24
  %v95 = vunpack.c.h.b16 %v24
  %v96 = vunpack.c.l.b16 %v25
  %v97 = vunpack.c.h.b16 %v25
  %v98 = vunpack.c.l.b16 %v26
  %v99 = vunpack.c.h.b16 %v26
  %v100 = vunpack.c.l.b16 %v27
  %v101 = vunpack.c.h.b16 %v27
  %v102 = vunpack.c.l.b16 %v28
  %v103 = vunpack.c.h.b16 %v28
  %v104 = vunpack.c.l.b16 %v29
  %v105 = vunpack.c.h.b16 %v29
  %v106 = vunpack.c.l.b16 %v30
  %v107 = vunpack.c.h.b16 %v30
  %v108 = vunpack.c.l.b16 %v31
  %v109 = vunpack.c.h.b16 %v31
  %v110 = vunpack.c.l.b16 %v32
  %v111 = vunpack.c.h.b16 %v32
  %v112 = vunpack.c.l.b16 %v33
  %v113 = vunpack.c.h.b16 %v33
  %v114 = vpack.c.b16 %v84, %v82
  %v115 = vpack.c.b16 %v85, %v83
  %v116 = vpack.c.b16 %v88, %v86
  %v117 = vpack.c.b16 %v89, %v87
  %v118 = vpack.c.b16 %v92, %v90
  %v119 = vpack.c.b16 %v93, %v91
  %v120 = vpack.c.b16 %v96, %v94
  %v121 = vpack.c.b16 %v97, %v95
  %v122 = vpack.c.b16 %v100, %v98
  %v123 = vpack.c.b16 %v101, %v99
  %v124 = vpack.c.b16 %v104, %v102
  %v125 = vpack.c.b16 %v105, %v103
  %v126 = vpack.c.b16 %v108, %v106
  %v127 = vpack.c.b16 %v109, %v107
  %v128 = vpack.c.b16 %v112, %v110
  %v129 = vpack.c.b16 %v113, %v111
  %v178 = vunpack.c.l.b16 %v34
  %v179 = vunpack.c.l.b16 %v35
  %v180 = vunpack.c.l.b16 %v36
  %v181 = vunpack.c.l.b16 %v37
  %v182 = vunpack.c.l.b16 %v38
  %v183 = vunpack.c.l.b16 %v39
  %v184 = vunpack.c.l.b16 %v40
  %v185 = vunpack.c.l.b16 %v41
  %v186 = vunpack.c.l.b16 %v42
  %v187 = vunpack.c.l.b16 %v43
  %v188 = vunpack.c.l.b16 %v44
  %v189 = vunpack.c.l.b16 %v45
  %v190 = vunpack.c.l.b16 %v46
  %v191 = vunpack.c.l.b16 %v47
  %v192 = vunpack.c.l.b16 %v48
  %v193 = vunpack.c.l.b16 %v49
  %v194 = vunpack.c.l.b16 %v50
  %v195 = vunpack.c.l.b16 %v51
  %v196 = vunpack.c.l.b16 %v52
  %v197 = vunpack.c.l.b16 %v53
  %v198 = vunpack.c.l.b16 %v54
  %v199 = vunpack.c.l.b16 %v55
  %v200 = vunpack.c.l.b16 %v56
  %v201 = vunpack.c.l.b16 %v57
  %v202 = vunpack.c.l.b16 %v58
  %v203 = vunpack.c.l.b16 %v59
  %v204 = vunpack.c.l.b16 %v60
  %v205 = vunpack.c.l.b16 %v61
  %v206 = vunpack.c.l.b16 %v62
  %v207 = vunpack.c.l.b16 %v63
  %v208 = vunpack.c.l.b16 %v64
  %v209 = vunpack.c.l.b16 %v65
  %v210 = vpack.c.b16 %v179, %v178
  %v211 = vpack.c.b16 %v181, %v180
  %v212 = vpack.c.b16 %v183, %v182
  %v213 = vpack.c.b16 %v185, %v184
  %v214 = vpack.c.b16 %v187, %v186
  %v215 = vpack.c.b16 %v189, %v188
  %v216 = vpack.c.b16 %v191, %v190
  %v217 = vpack.c.b16 %v193, %v192
  %v218 = vpack.c.b16 %v195, %v194
  %v219 = vpack.c.b16 %v197, %v196
  %v220 = vpack.c.b16 %v199, %v198
  %v221 = vpack.c.b16 %v201, %v200
  %v222 = vpack.c.b16 %v203, %v202
  %v223 = vpack.c.b16 %v205, %v204
  %v224 = vpack.c.b16 %v207, %v206
  %v225 = vpack.c.b16 %v209, %v208
  %242 = vmatprep.subr.bf16.mxu0 0
  %243 = vmatpush1.bf16.msra.mxu0 %v217
  %244 = vmatprep.subr.bf16.mxu0 0
  %245 = vmatpush1.bf16.msra.mxu0 %v216
  %246 = vmatprep.subr.bf16.mxu0 0
  %247 = vmatpush1.bf16.msra.mxu0 %v215
  %248 = vmatprep.subr.bf16.mxu0 0
  %249 = vmatpush1.bf16.msra.mxu0 %v214
  %250 = vmatprep.subr.bf16.mxu0 0
  %251 = vmatpush1.bf16.msra.mxu0 %v213
  %252 = vmatprep.subr.bf16.mxu0 0
  %253 = vmatpush1.bf16.msra.mxu0 %v212
  %254 = vmatprep.subr.bf16.mxu0 0
  %255 = vmatpush1.bf16.msra.mxu0 %v211
  %256 = vmatprep.subr.bf16.mxu0 0
  %257 = vmatpush1.bf16.msra.mxu0 %v210
  %258 = vmatprep.subr.bf16.mxu0 0
  %259 = vmatpush2.bf16.msra.mxu0 %v225
  %260 = vmatprep.subr.bf16.mxu0 0
  %261 = vmatpush2.bf16.msra.mxu0 %v224
  %262 = vmatprep.subr.bf16.mxu0 0
  %263 = vmatpush2.bf16.msra.mxu0 %v223
  %264 = vmatprep.subr.bf16.mxu0 0
  %265 = vmatpush2.bf16.msra.mxu0 %v222
  %266 = vmatprep.subr.bf16.mxu0 0
  %267 = vmatpush2.bf16.msra.mxu0 %v221
  %268 = vmatprep.subr.bf16.mxu0 0
  %269 = vmatpush2.bf16.msra.mxu0 %v220
  %270 = vmatprep.subr.bf16.mxu0 0
  %271 = vmatpush2.bf16.msra.mxu0 %v219
  %272 = vmatprep.subr.bf16.mxu0 0
  %273 = vmatpush2.bf16.msra.mxu0 %v218
  %274 = vmatprep.mubr.bf16.mxu0 %v115
  %275 = vmatmul.mubr.bf16.gmra.mxu0 %v114
  %v276 = vpop.f32.mrf.mxu0
  %v277 = vadd.f32 0.0, %v276
  %v278 = vpop.f32.mrf.mxu0
  %v279 = vpop.f32.mrf.mxu0
  %v280 = vadd.f32 0.0, %v279
  %v281 = vpop.f32.mrf.mxu0
  %282 = vmatprep.mubr.bf16.mxu0 %v117
  %283 = vmatmul.mubr.bf16.gmra.mxu0 %v116
  %v284 = vpop.f32.mrf.mxu0
  %v285 = vadd.f32 0.0, %v284
  %v286 = vpop.f32.mrf.mxu0
  %v287 = vpop.f32.mrf.mxu0
  %v288 = vadd.f32 0.0, %v287
  %v289 = vpop.f32.mrf.mxu0
  %290 = vmatprep.mubr.bf16.mxu0 %v119
  %291 = vmatmul.mubr.bf16.gmra.mxu0 %v118
  %v292 = vpop.f32.mrf.mxu0
  %v293 = vadd.f32 0.0, %v292
  %v294 = vpop.f32.mrf.mxu0
  %v295 = vpop.f32.mrf.mxu0
  %v296 = vadd.f32 0.0, %v295
  %v297 = vpop.f32.mrf.mxu0
  %298 = vmatprep.mubr.bf16.mxu0 %v121
  %299 = vmatmul.mubr.bf16.gmra.mxu0 %v120
  %v300 = vpop.f32.mrf.mxu0
  %v301 = vadd.f32 0.0, %v300
  %v302 = vpop.f32.mrf.mxu0
  %v303 = vpop.f32.mrf.mxu0
  %v304 = vadd.f32 0.0, %v303
  %v305 = vpop.f32.mrf.mxu0
  %306 = vmatprep.mubr.bf16.mxu0 %v123
  %307 = vmatmul.mubr.bf16.gmra.mxu0 %v122
  %v308 = vpop.f32.mrf.mxu0
  %v309 = vadd.f32 0.0, %v308
  %v310 = vpop.f32.mrf.mxu0
  %v311 = vpop.f32.mrf.mxu0
  %v312 = vadd.f32 0.0, %v311
  %v313 = vpop.f32.mrf.mxu0
  %314 = vmatprep.mubr.bf16.mxu0 %v125
  %315 = vmatmul.mubr.bf16.gmra.mxu0 %v124
  %v316 = vpop.f32.mrf.mxu0
  %v317 = vadd.f32 0.0, %v316
  %v318 = vpop.f32.mrf.mxu0
  %v319 = vpop.f32.mrf.mxu0
  %v320 = vadd.f32 0.0, %v319
  %v321 = vpop.f32.mrf.mxu0
  %322 = vmatprep.mubr.bf16.mxu0 %v127
  %323 = vmatmul.mubr.bf16.gmra.mxu0 %v126
  %v324 = vpop.f32.mrf.mxu0
  %v325 = vadd.f32 0.0, %v324
  %v326 = vpop.f32.mrf.mxu0
  %v327 = vpop.f32.mrf.mxu0
  %v328 = vadd.f32 0.0, %v327
  %v329 = vpop.f32.mrf.mxu0
  %330 = vmatprep.mubr.bf16.mxu0 %v129
  %331 = vmatmul.mubr.bf16.gmra.mxu0 %v128
  %v332 = vpop.f32.mrf.mxu0
  %v333 = vadd.f32 0.0, %v332
  %v334 = vpop.f32.mrf.mxu0
  %v335 = vpop.f32.mrf.mxu0
  %v336 = vadd.f32 0.0, %v335
  %v337 = vpop.f32.mrf.mxu0
  %338 = vdwg.mxu0
  %v339 = vadd.f32 %v277, %v280
  %v340 = vadd.f32 %v339, %v285
  %v341 = vadd.f32 %v340, %v288
  %v342 = vadd.f32 %v341, %v293
  %v343 = vadd.f32 %v342, %v296
  %v344 = vadd.f32 %v343, %v301
  %v345 = vadd.f32 %v344, %v304
  %v346 = vadd.f32 %v345, %v309
  %v347 = vadd.f32 %v346, %v312
  %v348 = vadd.f32 %v347, %v317
  %v349 = vadd.f32 %v348, %v320
  %v350 = vadd.f32 %v349, %v325
  %v351 = vadd.f32 %v350, %v328
  %v352 = vadd.f32 %v351, %v333
  %v353 = vadd.f32 %v352, %v336
  %v354 = vrot.slane %v353, 4
  %v355 = vadd.f32 %v353, %v354
  %v356 = vrot.slane %v355, 2
  %v357 = vadd.f32 %v355, %v356
  %v358 = vrot.slane %v357, 1
  %v359 = vadd.f32 %v357, %v358
  %v360 = vrcp.pop 128.0
  %v361 = vmul.f32 %v359, %v360
  %v362 = vsub.f32 %v277, %v361
  %v363 = vsub.f32 %v280, %v361
  %v364 = vsub.f32 %v285, %v361
  %v365 = vsub.f32 %v288, %v361
  %v366 = vsub.f32 %v293, %v361
  %v367 = vsub.f32 %v296, %v361
  %v368 = vsub.f32 %v301, %v361
  %v369 = vsub.f32 %v304, %v361
  %v370 = vsub.f32 %v309, %v361
  %v371 = vsub.f32 %v312, %v361
  %v372 = vsub.f32 %v317, %v361
  %v373 = vsub.f32 %v320, %v361
  %v374 = vsub.f32 %v325, %v361
  %v375 = vsub.f32 %v328, %v361
  %v376 = vsub.f32 %v333, %v361
  %v377 = vsub.f32 %v336, %v361
  %v378 = vmul.f32 %v362, %v362
  %v379 = vmul.f32 %v363, %v363
  %v380 = vmul.f32 %v364, %v364
  %v381 = vmul.f32 %v365, %v365
  %v382 = vmul.f32 %v366, %v366
  %v383 = vmul.f32 %v367, %v367
  %v384 = vmul.f32 %v368, %v368
  %v385 = vmul.f32 %v369, %v369
  %v386 = vmul.f32 %v370, %v370
  %v387 = vmul.f32 %v371, %v371
  %v388 = vmul.f32 %v372, %v372
  %v389 = vmul.f32 %v373, %v373
  %v390 = vmul.f32 %v374, %v374
  %v391 = vmul.f32 %v375, %v375
  %v392 = vmul.f32 %v376, %v376
  %v393 = vmul.f32 %v377, %v377
  %v394 = vadd.f32 %v378, %v379
  %v395 = vadd.f32 %v394, %v380
  %v396 = vadd.f32 %v395, %v381
  %v397 = vadd.f32 %v396, %v382
  %v398 = vadd.f32 %v397, %v383
  %v399 = vadd.f32 %v398, %v384
  %v400 = vadd.f32 %v399, %v385
  %v401 = vadd.f32 %v400, %v386
  %v402 = vadd.f32 %v401, %v387
  %v403 = vadd.f32 %v402, %v388
  %v404 = vadd.f32 %v403, %v389
  %v405 = vadd.f32 %v404, %v390
  %v406 = vadd.f32 %v405, %v391
  %v407 = vadd.f32 %v406, %v392
  %v408 = vadd.f32 %v407, %v393
  %v409 = vrot.slane %v408, 4
  %v410 = vadd.f32 %v408, %v409
  %v411 = vrot.slane %v410, 2
  %v412 = vadd.f32 %v410, %v411
  %v413 = vrot.slane %v412, 1
  %v414 = vadd.f32 %v412, %v413
  %v415 = vmul.f32 %v414, %v360
  %v416 = vld [vmem:[%s2] sm:$0x1]
  %v417 = vadd.f32 %v415, 1e-05
  %v418 = vrsqrt.pop %v417
  %v419 = vmul.f32 %v416, %v418
  %v420 = vld [vmem:[%s3] sm:$0x1]
  %v421 = vmul.f32 %v361, %v419
  %v422 = vsub.f32 %v420, %v421
  %v424 = vlaneseq
  %v425 = vshrl.u32 %v424, 7
  %v426 = vsub.s32 0, %v425
  %v427 = vrot.slane %v419, %v426
  %v429 = vmul.f32 %v277, %v427
  %v430 = vmul.f32 %v280, %v427
  %v431 = vmul.f32 %v285, %v427
  %v432 = vmul.f32 %v288, %v427
  %v433 = vmul.f32 %v293, %v427
  %v434 = vmul.f32 %v296, %v427
  %v435 = vmul.f32 %v301, %v427
  %v436 = vmul.f32 %v304, %v427
  %v437 = vmul.f32 %v309, %v427
  %v438 = vmul.f32 %v312, %v427
  %v439 = vmul.f32 %v317, %v427
  %v440 = vmul.f32 %v320, %v427
  %v441 = vmul.f32 %v325, %v427
  %v442 = vmul.f32 %v328, %v427
  %v443 = vmul.f32 %v333, %v427
  %v444 = vmul.f32 %v336, %v427
  %v446 = vlaneseq
  %v447 = vshrl.u32 %v446, 7
  %v448 = vsub.s32 0, %v447
  %v449 = vrot.slane %v422, %v448
  %v451 = vadd.f32 %v429, %v449
  %v452 = vadd.f32 %v430, %v449
  %v453 = vadd.f32 %v431, %v449
  %v454 = vadd.f32 %v432, %v449
  %v455 = vadd.f32 %v433, %v449
  %v456 = vadd.f32 %v434, %v449
  %v457 = vadd.f32 %v435, %v449
  %v458 = vadd.f32 %v436, %v449
  %v459 = vadd.f32 %v437, %v449
  %v460 = vadd.f32 %v438, %v449
  %v461 = vadd.f32 %v439, %v449
  %v462 = vadd.f32 %v440, %v449
  %v463 = vadd.f32 %v441, %v449
  %v464 = vadd.f32 %v442, %v449
  %v465 = vadd.f32 %v443, %v449
  %v466 = vadd.f32 %v444, %v449
  %vm467 = vcmp.ge.f32.partialorder %v451, 0.0
  %vm468 = vcmp.ge.f32.partialorder %v452, 0.0
  %vm469 = vcmp.ge.f32.partialorder %v453, 0.0
  %vm470 = vcmp.ge.f32.partialorder %v454, 0.0
  %vm471 = vcmp.ge.f32.partialorder %v455, 0.0
  %vm472 = vcmp.ge.f32.partialorder %v456, 0.0
  %vm473 = vcmp.ge.f32.partialorder %v457, 0.0
  %vm474 = vcmp.ge.f32.partialorder %v458, 0.0
  %vm475 = vcmp.ge.f32.partialorder %v459, 0.0
  %vm476 = vcmp.ge.f32.partialorder %v460, 0.0
  %vm477 = vcmp.ge.f32.partialorder %v461, 0.0
  %vm478 = vcmp.ge.f32.partialorder %v462, 0.0
  %vm479 = vcmp.ge.f32.partialorder %v463, 0.0
  %vm480 = vcmp.ge.f32.partialorder %v464, 0.0
  %vm481 = vcmp.ge.f32.partialorder %v465, 0.0
  %vm482 = vcmp.ge.f32.partialorder %v466, 0.0
  %v483 = vmul.f32 %v451, 0.2
  %v484 = vmul.f32 %v452, 0.2
  %v485 = vmul.f32 %v453, 0.2
  %v486 = vmul.f32 %v454, 0.2
  %v487 = vmul.f32 %v455, 0.2
  %v488 = vmul.f32 %v456, 0.2
  %v489 = vmul.f32 %v457, 0.2
  %v490 = vmul.f32 %v458, 0.2
  %v491 = vmul.f32 %v459, 0.2
  %v492 = vmul.f32 %v460, 0.2
  %v493 = vmul.f32 %v461, 0.2
  %v494 = vmul.f32 %v462, 0.2
  %v495 = vmul.f32 %v463, 0.2
  %v496 = vmul.f32 %v464, 0.2
  %v497 = vmul.f32 %v465, 0.2
  %v498 = vmul.f32 %v466, 0.2
  %v499 = vsel %vm467, %v451, %v483
  %v500 = vsel %vm468, %v452, %v484
  %v501 = vsel %vm469, %v453, %v485
  %v502 = vsel %vm470, %v454, %v486
  %v503 = vsel %vm471, %v455, %v487
  %v504 = vsel %vm472, %v456, %v488
  %v505 = vsel %vm473, %v457, %v489
  %v506 = vsel %vm474, %v458, %v490
  %v507 = vsel %vm475, %v459, %v491
  %v508 = vsel %vm476, %v460, %v492
  %v509 = vsel %vm477, %v461, %v493
  %v510 = vsel %vm478, %v462, %v494
  %v511 = vsel %vm479, %v463, %v495
  %v512 = vsel %vm480, %v464, %v496
  %v513 = vsel %vm481, %v465, %v497
  %v514 = vsel %vm482, %v466, %v498
  %v515 = vpack.c.bf16 %v500, %v499
  %v516 = vpack.c.bf16 %v502, %v501
  %v517 = vpack.c.bf16 %v504, %v503
  %v518 = vpack.c.bf16 %v506, %v505
  %v519 = vpack.c.bf16 %v508, %v507
  %v520 = vpack.c.bf16 %v510, %v509
  %v521 = vpack.c.bf16 %v512, %v511
  %v522 = vpack.c.bf16 %v514, %v513
  %v531 = vunpack.c.l.b16 %v515
  %v532 = vunpack.c.h.b16 %v515
  %v533 = vunpack.c.l.b16 %v516
  %v534 = vunpack.c.h.b16 %v516
  %v535 = vunpack.c.l.b16 %v517
  %v536 = vunpack.c.h.b16 %v517
  %v537 = vunpack.c.l.b16 %v518
  %v538 = vunpack.c.h.b16 %v518
  %v539 = vunpack.c.l.b16 %v519
  %v540 = vunpack.c.h.b16 %v519
  %v541 = vunpack.c.l.b16 %v520
  %v542 = vunpack.c.h.b16 %v520
  %v543 = vunpack.c.l.b16 %v521
  %v544 = vunpack.c.h.b16 %v521
  %v545 = vunpack.c.l.b16 %v522
  %v546 = vunpack.c.h.b16 %v522
  %v547 = vpack.c.b16 %v531, %v531
  %v548 = vpack.c.b16 %v532, %v532
  %v549 = vpack.c.b16 %v533, %v533
  %v550 = vpack.c.b16 %v534, %v534
  %v551 = vpack.c.b16 %v535, %v535
  %v552 = vpack.c.b16 %v536, %v536
  %v553 = vpack.c.b16 %v537, %v537
  %v554 = vpack.c.b16 %v538, %v538
  %v555 = vpack.c.b16 %v539, %v539
  %v556 = vpack.c.b16 %v540, %v540
  %v557 = vpack.c.b16 %v541, %v541
  %v558 = vpack.c.b16 %v542, %v542
  %v559 = vpack.c.b16 %v543, %v543
  %v560 = vpack.c.b16 %v544, %v544
  %v561 = vpack.c.b16 %v545, %v545
  %v562 = vpack.c.b16 %v546, %v546
  %vm579 = vcmask 257024
  %580 = vst.msk [vmem:[%s4] sm:$0xf] %vm579, %v547
  %581 = vst.msk [vmem:[%s4 + $0x4] sm:$0xf] %vm579, %v548
  %582 = vst.msk [vmem:[%s4 + $0x8] sm:$0xf] %vm579, %v549
  %583 = vst.msk [vmem:[%s4 + $0xc] sm:$0xf] %vm579, %v550
  %584 = vst.msk [vmem:[%s4 + $0x10] sm:$0xf] %vm579, %v551
  %585 = vst.msk [vmem:[%s4 + $0x14] sm:$0xf] %vm579, %v552
  %586 = vst.msk [vmem:[%s4 + $0x18] sm:$0xf] %vm579, %v553
  %587 = vst.msk [vmem:[%s4 + $0x1c] sm:$0xf] %vm579, %v554
  %588 = vst.msk [vmem:[%s4 + $0x20] sm:$0xf] %vm579, %v555
  %589 = vst.msk [vmem:[%s4 + $0x24] sm:$0xf] %vm579, %v556
  %590 = vst.msk [vmem:[%s4 + $0x28] sm:$0xf] %vm579, %v557
  %591 = vst.msk [vmem:[%s4 + $0x2c] sm:$0xf] %vm579, %v558
  %592 = vst.msk [vmem:[%s4 + $0x30] sm:$0xf] %vm579, %v559
  %593 = vst.msk [vmem:[%s4 + $0x34] sm:$0xf] %vm579, %v560
  %594 = vst.msk [vmem:[%s4 + $0x38] sm:$0xf] %vm579, %v561
  %595 = vst.msk [vmem:[%s4 + $0x3c] sm:$0xf] %vm579, %v562
  // Predicated region
  $region18: #{discriminator_forward.6} parent=0 // pred_check
    _
  $region19: #{discriminator_forward.6} parent=0 // pred_check_branch
    %597 = sbr.rel (0) target = $region21
  $region20: #{discriminator_forward.6} parent=0 // pred_region
    _
  $region21: #{discriminator_forward.6} parent=0 // pred_fallthru
    _
  // Predicated region
  $region22: #{discriminator_forward.6} parent=0 // pred_check
    _
  $region23: #{discriminator_forward.6} parent=0 // pred_check_branch
    %599 = sbr.rel (0) target = $region25
  $region24: #{discriminator_forward.6} parent=0 // pred_region
    _
  $region25: #{discriminator_forward.6} parent=0 // pred_fallthru
    _

// kernel: discriminator_forward.7
$region0: #{discriminator_forward.7}
  #allocation0 [shape = 'u32[]', space=smem, size = 0x4, offset = 0x4, fixed_abs, tag = 'smem constant byte address 0x4 - core index']
  #allocation1 [shape = 'u32[144,128]{1,0:T(1,128)}', space=vmem, size = 0x12000, scoped, tag = 'internal scratch']
  %s0 = inlined_call_operand.vmem [shape: bf16[32,512], index: 0, kind: input, shape index: {}]
  %s1 = inlined_call_operand.vmem [shape: bf16[512,128], index: 1, kind: input, shape index: {}]
  %s2 = inlined_call_operand.vmem [shape: f32[1,128], index: 2, kind: input, shape index: {}]
  %s3 = inlined_call_operand.vmem [shape: f32[1,128], index: 3, kind: input, shape index: {}]
  %s4 = inlined_call_operand.vmem [shape: bf16[32,64], index: 4, kind: output, shape index: {}]
  %s5 = sld [smem:[#allocation0]]
  $region26: #{discriminator_forward.7} parent=0
    _
  %s7 = ssub.s32 1, %s5
  %s8 = scalar_select 0, %s7, %s5
  // Predicated region
  $region2: #{discriminator_forward.7} parent=0 // pred_check
    _
  $region3: #{discriminator_forward.7} parent=0 // pred_check_branch
    %10 = sbr.rel (0) target = $region5
  $region4: #{discriminator_forward.7} parent=0 // pred_region
    _
  $region5: #{discriminator_forward.7} parent=0 // pred_fallthru
    _
  // Predicated region
  $region6: #{discriminator_forward.7} parent=0 // pred_check
    _
  $region7: #{discriminator_forward.7} parent=0 // pred_check_branch
    %12 = sbr.rel (0) target = $region9
  $region8: #{discriminator_forward.7} parent=0 // pred_region
    _
  $region9: #{discriminator_forward.7} parent=0 // pred_fallthru
    _
  // Predicated region
  $region10: #{discriminator_forward.7} parent=0 // pred_check
    _
  $region11: #{discriminator_forward.7} parent=0 // pred_check_branch
    %14 = sbr.rel (0) target = $region13
  $region12: #{discriminator_forward.7} parent=0 // pred_region
    _
  $region13: #{discriminator_forward.7} parent=0 // pred_fallthru
    _
  // Predicated region
  $region14: #{discriminator_forward.7} parent=0 // pred_check
    _
  $region15: #{discriminator_forward.7} parent=0 // pred_check_branch
    %16 = sbr.rel (0) target = $region17
  $region16: #{discriminator_forward.7} parent=0 // pred_region
    _
  $region17: #{discriminator_forward.7} parent=0 // pred_fallthru
    _
  %v18 = vld [vmem:[%s0] sm:$0xff]
  %v19 = vld [vmem:[%s0 + $0x8] sm:$0xff]
  %v20 = vld [vmem:[%s0 + $0x10] sm:$0xff]
  %v21 = vld [vmem:[%s0 + $0x18] sm:$0xff]
  %v22 = vld [vmem:[%s0 + $0x20] sm:$0xff]
  %v23 = vld [vmem:[%s0 + $0x28] sm:$0xff]
  %v24 = vld [vmem:[%s0 + $0x30] sm:$0xff]
  %v25 = vld [vmem:[%s0 + $0x38] sm:$0xff]
  %v26 = vld [vmem:[%s1] sm:$0xf]
  %v27 = vld [vmem:[%s1 + $0x4] sm:$0xf]
  %v28 = vld [vmem:[%s1 + $0x8] sm:$0xf]
  %v29 = vld [vmem:[%s1 + $0xc] sm:$0xf]
  %v30 = vld [vmem:[%s1 + $0x10] sm:$0xf]
  %v31 = vld [vmem:[%s1 + $0x14] sm:$0xf]
  %v32 = vld [vmem:[%s1 + $0x18] sm:$0xf]
  %v33 = vld [vmem:[%s1 + $0x1c] sm:$0xf]
  %v34 = vld [vmem:[%s1 + $0x20] sm:$0xf]
  %v35 = vld [vmem:[%s1 + $0x24] sm:$0xf]
  %v36 = vld [vmem:[%s1 + $0x28] sm:$0xf]
  %v37 = vld [vmem:[%s1 + $0x2c] sm:$0xf]
  %v38 = vld [vmem:[%s1 + $0x30] sm:$0xf]
  %v39 = vld [vmem:[%s1 + $0x34] sm:$0xf]
  %v40 = vld [vmem:[%s1 + $0x38] sm:$0xf]
  %v41 = vld [vmem:[%s1 + $0x3c] sm:$0xf]
  %v42 = vld [vmem:[%s1 + $0x40] sm:$0xf]
  %v43 = vld [vmem:[%s1 + $0x44] sm:$0xf]
  %v44 = vld [vmem:[%s1 + $0x48] sm:$0xf]
  %v45 = vld [vmem:[%s1 + $0x4c] sm:$0xf]
  %v46 = vld [vmem:[%s1 + $0x50] sm:$0xf]
  %v47 = vld [vmem:[%s1 + $0x54] sm:$0xf]
  %v48 = vld [vmem:[%s1 + $0x58] sm:$0xf]
  %v49 = vld [vmem:[%s1 + $0x5c] sm:$0xf]
  %v50 = vld [vmem:[%s1 + $0x60] sm:$0xf]
  %v51 = vld [vmem:[%s1 + $0x64] sm:$0xf]
  %v52 = vld [vmem:[%s1 + $0x68] sm:$0xf]
  %v53 = vld [vmem:[%s1 + $0x6c] sm:$0xf]
  %v54 = vld [vmem:[%s1 + $0x70] sm:$0xf]
  %v55 = vld [vmem:[%s1 + $0x74] sm:$0xf]
  %v56 = vld [vmem:[%s1 + $0x78] sm:$0xf]
  %v57 = vld [vmem:[%s1 + $0x7c] sm:$0xf]
  %v58 = vld [vmem:[%s1 + $0x80] sm:$0xf]
  %v59 = vld [vmem:[%s1 + $0x84] sm:$0xf]
  %v60 = vld [vmem:[%s1 + $0x88] sm:$0xf]
  %v61 = vld [vmem:[%s1 + $0x8c] sm:$0xf]
  %v62 = vld [vmem:[%s1 + $0x90] sm:$0xf]
  %v63 = vld [vmem:[%s1 + $0x94] sm:$0xf]
  %v64 = vld [vmem:[%s1 + $0x98] sm:$0xf]
  %v65 = vld [vmem:[%s1 + $0x9c] sm:$0xf]
  %v66 = vld [vmem:[%s1 + $0xa0] sm:$0xf]
  %v67 = vld [vmem:[%s1 + $0xa4] sm:$0xf]
  %v68 = vld [vmem:[%s1 + $0xa8] sm:$0xf]
  %v69 = vld [vmem:[%s1 + $0xac] sm:$0xf]
  %v70 = vld [vmem:[%s1 + $0xb0] sm:$0xf]
  %v71 = vld [vmem:[%s1 + $0xb4] sm:$0xf]
  %v72 = vld [vmem:[%s1 + $0xb8] sm:$0xf]
  %v73 = vld [vmem:[%s1 + $0xbc] sm:$0xf]
  %v74 = vld [vmem:[%s1 + $0xc0] sm:$0xf]
  %v75 = vld [vmem:[%s1 + $0xc4] sm:$0xf]
  %v76 = vld [vmem:[%s1 + $0xc8] sm:$0xf]
  %v77 = vld [vmem:[%s1 + $0xcc] sm:$0xf]
  %v78 = vld [vmem:[%s1 + $0xd0] sm:$0xf]
  %v79 = vld [vmem:[%s1 + $0xd4] sm:$0xf]
  %v80 = vld [vmem:[%s1 + $0xd8] sm:$0xf]
  %v81 = vld [vmem:[%s1 + $0xdc] sm:$0xf]
  %v82 = vld [vmem:[%s1 + $0xe0] sm:$0xf]
  %v83 = vld [vmem:[%s1 + $0xe4] sm:$0xf]
  %v84 = vld [vmem:[%s1 + $0xe8] sm:$0xf]
  %v85 = vld [vmem:[%s1 + $0xec] sm:$0xf]
  %v86 = vld [vmem:[%s1 + $0xf0] sm:$0xf]
  %v87 = vld [vmem:[%s1 + $0xf4] sm:$0xf]
  %v88 = vld [vmem:[%s1 + $0xf8] sm:$0xf]
  %v89 = vld [vmem:[%s1 + $0xfc] sm:$0xf]
  %v98 = vunpack.c.l.b16 %v18
  %v99 = vunpack.c.h.b16 %v18
  %v100 = vunpack.c.l.b16 %v19
  %v101 = vunpack.c.h.b16 %v19
  %v102 = vunpack.c.l.b16 %v20
  %v103 = vunpack.c.h.b16 %v20
  %v104 = vunpack.c.l.b16 %v21
  %v105 = vunpack.c.h.b16 %v21
  %v106 = vunpack.c.l.b16 %v22
  %v107 = vunpack.c.h.b16 %v22
  %v108 = vunpack.c.l.b16 %v23
  %v109 = vunpack.c.h.b16 %v23
  %v110 = vunpack.c.l.b16 %v24
  %v111 = vunpack.c.h.b16 %v24
  %v112 = vunpack.c.l.b16 %v25
  %v113 = vunpack.c.h.b16 %v25
  %v114 = vpack.c.b16 %v102, %v98
  %v115 = vpack.c.b16 %v103, %v99
  %v116 = vpack.c.b16 %v104, %v100
  %v117 = vpack.c.b16 %v105, %v101
  %v118 = vpack.c.b16 %v110, %v106
  %v119 = vpack.c.b16 %v111, %v107
  %v120 = vpack.c.b16 %v112, %v108
  %v121 = vpack.c.b16 %v113, %v109
  %v194 = vunpack.c.l.b16 %v26
  %v195 = vunpack.c.l.b16 %v27
  %v196 = vunpack.c.l.b16 %v28
  %v197 = vunpack.c.l.b16 %v29
  %v198 = vunpack.c.l.b16 %v30
  %v199 = vunpack.c.l.b16 %v31
  %v200 = vunpack.c.l.b16 %v32
  %v201 = vunpack.c.l.b16 %v33
  %v202 = vunpack.c.l.b16 %v34
  %v203 = vunpack.c.l.b16 %v35
  %v204 = vunpack.c.l.b16 %v36
  %v205 = vunpack.c.l.b16 %v37
  %v206 = vunpack.c.l.b16 %v38
  %v207 = vunpack.c.l.b16 %v39
  %v208 = vunpack.c.l.b16 %v40
  %v209 = vunpack.c.l.b16 %v41
  %v210 = vunpack.c.l.b16 %v42
  %v211 = vunpack.c.l.b16 %v43
  %v212 = vunpack.c.l.b16 %v44
  %v213 = vunpack.c.l.b16 %v45
  %v214 = vunpack.c.l.b16 %v46
  %v215 = vunpack.c.l.b16 %v47
  %v216 = vunpack.c.l.b16 %v48
  %v217 = vunpack.c.l.b16 %v49
  %v218 = vunpack.c.l.b16 %v50
  %v219 = vunpack.c.l.b16 %v51
  %v220 = vunpack.c.l.b16 %v52
  %v221 = vunpack.c.l.b16 %v53
  %v222 = vunpack.c.l.b16 %v54
  %v223 = vunpack.c.l.b16 %v55
  %v224 = vunpack.c.l.b16 %v56
  %v225 = vunpack.c.l.b16 %v57
  %v226 = vunpack.c.l.b16 %v58
  %v227 = vunpack.c.l.b16 %v59
  %v228 = vunpack.c.l.b16 %v60
  %v229 = vunpack.c.l.b16 %v61
  %v230 = vunpack.c.l.b16 %v62
  %v231 = vunpack.c.l.b16 %v63
  %v232 = vunpack.c.l.b16 %v64
  %v233 = vunpack.c.l.b16 %v65
  %v234 = vunpack.c.l.b16 %v66
  %v235 = vunpack.c.l.b16 %v67
  %v236 = vunpack.c.l.b16 %v68
  %v237 = vunpack.c.l.b16 %v69
  %v238 = vunpack.c.l.b16 %v70
  %v239 = vunpack.c.l.b16 %v71
  %v240 = vunpack.c.l.b16 %v72
  %v241 = vunpack.c.l.b16 %v73
  %v242 = vunpack.c.l.b16 %v74
  %v243 = vunpack.c.l.b16 %v75
  %v244 = vunpack.c.l.b16 %v76
  %v245 = vunpack.c.l.b16 %v77
  %v246 = vunpack.c.l.b16 %v78
  %v247 = vunpack.c.l.b16 %v79
  %v248 = vunpack.c.l.b16 %v80
  %v249 = vunpack.c.l.b16 %v81
  %v250 = vunpack.c.l.b16 %v82
  %v251 = vunpack.c.l.b16 %v83
  %v252 = vunpack.c.l.b16 %v84
  %v253 = vunpack.c.l.b16 %v85
  %v254 = vunpack.c.l.b16 %v86
  %v255 = vunpack.c.l.b16 %v87
  %v256 = vunpack.c.l.b16 %v88
  %v257 = vunpack.c.l.b16 %v89
  %v258 = vpack.c.b16 %v195, %v194
  %v259 = vpack.c.b16 %v197, %v196
  %v260 = vpack.c.b16 %v199, %v198
  %v261 = vpack.c.b16 %v201, %v200
  %v262 = vpack.c.b16 %v203, %v202
  %v263 = vpack.c.b16 %v205, %v204
  %v264 = vpack.c.b16 %v207, %v206
  %v265 = vpack.c.b16 %v209, %v208
  %v266 = vpack.c.b16 %v211, %v210
  %v267 = vpack.c.b16 %v213, %v212
  %v268 = vpack.c.b16 %v215, %v214
  %v269 = vpack.c.b16 %v217, %v216
  %v270 = vpack.c.b16 %v219, %v218
  %v271 = vpack.c.b16 %v221, %v220
  %v272 = vpack.c.b16 %v223, %v222
  %v273 = vpack.c.b16 %v225, %v224
  %v274 = vpack.c.b16 %v227, %v226
  %v275 = vpack.c.b16 %v229, %v228
  %v276 = vpack.c.b16 %v231, %v230
  %v277 = vpack.c.b16 %v233, %v232
  %v278 = vpack.c.b16 %v235, %v234
  %v279 = vpack.c.b16 %v237, %v236
  %v280 = vpack.c.b16 %v239, %v238
  %v281 = vpack.c.b16 %v241, %v240
  %v282 = vpack.c.b16 %v243, %v242
  %v283 = vpack.c.b16 %v245, %v244
  %v284 = vpack.c.b16 %v247, %v246
  %v285 = vpack.c.b16 %v249, %v248
  %v286 = vpack.c.b16 %v251, %v250
  %v287 = vpack.c.b16 %v253, %v252
  %v288 = vpack.c.b16 %v255, %v254
  %v289 = vpack.c.b16 %v257, %v256
  %322 = vmatprep.subr.bf16.mxu0 0
  %323 = vmatpush1.bf16.msra.mxu0 %v265
  %324 = vmatprep.subr.bf16.mxu0 0
  %325 = vmatpush1.bf16.msra.mxu0 %v264
  %326 = vmatprep.subr.bf16.mxu0 0
  %327 = vmatpush1.bf16.msra.mxu0 %v263
  %328 = vmatprep.subr.bf16.mxu0 0
  %329 = vmatpush1.bf16.msra.mxu0 %v262
  %330 = vmatprep.subr.bf16.mxu0 0
  %331 = vmatpush1.bf16.msra.mxu0 %v261
  %332 = vmatprep.subr.bf16.mxu0 0
  %333 = vmatpush1.bf16.msra.mxu0 %v260
  %334 = vmatprep.subr.bf16.mxu0 0
  %335 = vmatpush1.bf16.msra.mxu0 %v259
  %336 = vmatprep.subr.bf16.mxu0 0
  %337 = vmatpush1.bf16.msra.mxu0 %v258
  %338 = vmatprep.subr.bf16.mxu0 0
  %339 = vmatpush2.bf16.msra.mxu0 %v273
  %340 = vmatprep.subr.bf16.mxu0 0
  %341 = vmatpush2.bf16.msra.mxu0 %v272
  %342 = vmatprep.subr.bf16.mxu0 0
  %343 = vmatpush2.bf16.msra.mxu0 %v271
  %344 = vmatprep.subr.bf16.mxu0 0
  %345 = vmatpush2.bf16.msra.mxu0 %v270
  %346 = vmatprep.subr.bf16.mxu0 0
  %347 = vmatpush2.bf16.msra.mxu0 %v269
  %348 = vmatprep.subr.bf16.mxu0 0
  %349 = vmatpush2.bf16.msra.mxu0 %v268
  %350 = vmatprep.subr.bf16.mxu0 0
  %351 = vmatpush2.bf16.msra.mxu0 %v267
  %352 = vmatprep.subr.bf16.mxu0 0
  %353 = vmatpush2.bf16.msra.mxu0 %v266
  %354 = vmatprep.mubr.bf16.mxu0 %v115
  %355 = vmatmul.mubr.bf16.gmra.mxu0 %v114
  %v356 = vpop.f32.mrf.mxu0
  %v357 = vadd.f32 0.0, %v356
  %v358 = vpop.f32.mrf.mxu0
  %v359 = vpop.f32.mrf.mxu0
  %v360 = vadd.f32 0.0, %v359
  %v361 = vpop.f32.mrf.mxu0
  %362 = vmatprep.mubr.bf16.mxu0 %v119
  %363 = vmatmul.mubr.bf16.gmra.mxu0 %v118
  %v364 = vpop.f32.mrf.mxu0
  %v365 = vadd.f32 0.0, %v364
  %v366 = vpop.f32.mrf.mxu0
  %v367 = vpop.f32.mrf.mxu0
  %v368 = vadd.f32 0.0, %v367
  %v369 = vpop.f32.mrf.mxu0
  %370 = vdwg.mxu0
  %371 = vmatprep.subr.bf16.mxu0 0
  %372 = vmatpush1.bf16.msra.mxu0 %v281
  %373 = vmatprep.subr.bf16.mxu0 0
  %374 = vmatpush1.bf16.msra.mxu0 %v280
  %375 = vmatprep.subr.bf16.mxu0 0
  %376 = vmatpush1.bf16.msra.mxu0 %v279
  %377 = vmatprep.subr.bf16.mxu0 0
  %378 = vmatpush1.bf16.msra.mxu0 %v278
  %379 = vmatprep.subr.bf16.mxu0 0
  %380 = vmatpush1.bf16.msra.mxu0 %v277
  %381 = vmatprep.subr.bf16.mxu0 0
  %382 = vmatpush1.bf16.msra.mxu0 %v276
  %383 = vmatprep.subr.bf16.mxu0 0
  %384 = vmatpush1.bf16.msra.mxu0 %v275
  %385 = vmatprep.subr.bf16.mxu0 0
  %386 = vmatpush1.bf16.msra.mxu0 %v274
  %387 = vmatprep.subr.bf16.mxu0 0
  %388 = vmatpush2.bf16.msra.mxu0 %v289
  %389 = vmatprep.subr.bf16.mxu0 0
  %390 = vmatpush2.bf16.msra.mxu0 %v288
  %391 = vmatprep.subr.bf16.mxu0 0
  %392 = vmatpush2.bf16.msra.mxu0 %v287
  %393 = vmatprep.subr.bf16.mxu0 0
  %394 = vmatpush2.bf16.msra.mxu0 %v286
  %395 = vmatprep.subr.bf16.mxu0 0
  %396 = vmatpush2.bf16.msra.mxu0 %v285
  %397 = vmatprep.subr.bf16.mxu0 0
  %398 = vmatpush2.bf16.msra.mxu0 %v284
  %399 = vmatprep.subr.bf16.mxu0 0
  %400 = vmatpush2.bf16.msra.mxu0 %v283
  %401 = vmatprep.subr.bf16.mxu0 0
  %402 = vmatpush2.bf16.msra.mxu0 %v282
  %403 = vmatprep.mubr.bf16.mxu0 %v117
  %404 = vmatmul.mubr.bf16.gmra.mxu0 %v116
  %v405 = vpop.f32.mrf.mxu0
  %v406 = vadd.f32 %v357, %v405
  %v407 = vpop.f32.mrf.mxu0
  %v408 = vpop.f32.mrf.mxu0
  %v409 = vadd.f32 %v360, %v408
  %v410 = vpop.f32.mrf.mxu0
  %411 = vmatprep.mubr.bf16.mxu0 %v121
  %412 = vmatmul.mubr.bf16.gmra.mxu0 %v120
  %v413 = vpop.f32.mrf.mxu0
  %v414 = vadd.f32 %v365, %v413
  %v415 = vpop.f32.mrf.mxu0
  %v416 = vpop.f32.mrf.mxu0
  %v417 = vadd.f32 %v368, %v416
  %v418 = vpop.f32.mrf.mxu0
  %419 = vdwg.mxu0
  %v420 = vadd.f32 %v406, %v409
  %v421 = vadd.f32 %v420, %v414
  %v422 = vadd.f32 %v421, %v417
  %v423 = vrot.slane %v422, 4
  %v424 = vadd.f32 %v422, %v423
  %v425 = vrot.slane %v424, 2
  %v426 = vadd.f32 %v424, %v425
  %v427 = vrot.slane %v426, 1
  %v428 = vadd.f32 %v426, %v427
  %v429 = vrcp.pop 32.0
  %v430 = vmul.f32 %v428, %v429
  %v431 = vsub.f32 %v406, %v430
  %v432 = vsub.f32 %v409, %v430
  %v433 = vsub.f32 %v414, %v430
  %v434 = vsub.f32 %v417, %v430
  %v435 = vmul.f32 %v431, %v431
  %v436 = vmul.f32 %v432, %v432
  %v437 = vmul.f32 %v433, %v433
  %v438 = vmul.f32 %v434, %v434
  %v439 = vadd.f32 %v435, %v436
  %v440 = vadd.f32 %v439, %v437
  %v441 = vadd.f32 %v440, %v438
  %v442 = vrot.slane %v441, 4
  %v443 = vadd.f32 %v441, %v442
  %v444 = vrot.slane %v443, 2
  %v445 = vadd.f32 %v443, %v444
  %v446 = vrot.slane %v445, 1
  %v447 = vadd.f32 %v445, %v446
  %v448 = vmul.f32 %v447, %v429
  %v449 = vld [vmem:[%s2] sm:$0x1]
  %v450 = vadd.f32 %v448, 1e-05
  %v451 = vrsqrt.pop %v450
  %v452 = vmul.f32 %v449, %v451
  %v453 = vld [vmem:[%s3] sm:$0x1]
  %v454 = vmul.f32 %v430, %v452
  %v455 = vsub.f32 %v453, %v454
  %v457 = vlaneseq
  %v458 = vshrl.u32 %v457, 7
  %v459 = vsub.s32 0, %v458
  %v460 = vrot.slane %v452, %v459
  %v462 = vmul.f32 %v406, %v460
  %v463 = vmul.f32 %v409, %v460
  %v464 = vmul.f32 %v414, %v460
  %v465 = vmul.f32 %v417, %v460
  %v467 = vlaneseq
  %v468 = vshrl.u32 %v467, 7
  %v469 = vsub.s32 0, %v468
  %v470 = vrot.slane %v455, %v469
  %v472 = vadd.f32 %v462, %v470
  %v473 = vadd.f32 %v463, %v470
  %v474 = vadd.f32 %v464, %v470
  %v475 = vadd.f32 %v465, %v470
  %vm476 = vcmp.ge.f32.partialorder %v472, 0.0
  %vm477 = vcmp.ge.f32.partialorder %v473, 0.0
  %vm478 = vcmp.ge.f32.partialorder %v474, 0.0
  %vm479 = vcmp.ge.f32.partialorder %v475, 0.0
  %v480 = vmul.f32 %v472, 0.2
  %v481 = vmul.f32 %v473, 0.2
  %v482 = vmul.f32 %v474, 0.2
  %v483 = vmul.f32 %v475, 0.2
  %v484 = vsel %vm476, %v472, %v480
  %v485 = vsel %vm477, %v473, %v481
  %v486 = vsel %vm478, %v474, %v482
  %v487 = vsel %vm479, %v475, %v483
  %v488 = vpack.c.bf16 %v485, %v484
  %v489 = vpack.c.bf16 %v487, %v486
  %v492 = vunpack.c.l.b16 %v488
  %v493 = vunpack.c.h.b16 %v488
  %v494 = vunpack.c.l.b16 %v489
  %v495 = vunpack.c.h.b16 %v489
  %v496 = vpack.c.b16 %v492, %v492
  %v497 = vpack.c.b16 %v493, %v493
  %v498 = vpack.c.b16 %v494, %v494
  %v499 = vpack.c.b16 %v495, %v495
  %vm504 = vcmask 519168
  %505 = vst.msk [vmem:[%s4] sm:$0xf] %vm504, %v496
  %506 = vst.msk [vmem:[%s4 + $0x4] sm:$0xf] %vm504, %v497
  %507 = vst.msk [vmem:[%s4 + $0x8] sm:$0xf] %vm504, %v498
  %508 = vst.msk [vmem:[%s4 + $0xc] sm:$0xf] %vm504, %v499
  // Predicated region
  $region18: #{discriminator_forward.7} parent=0 // pred_check
    _
  $region19: #{discriminator_forward.7} parent=0 // pred_check_branch
    %510 = sbr.rel (0) target = $region21
  $region20: #{discriminator_forward.7} parent=0 // pred_region
    _
  $region21: #{discriminator_forward.7} parent=0 // pred_fallthru
    _
  // Predicated region
  $region22: #{discriminator_forward.7} parent=0 // pred_check
    _
  $region23: #{discriminator_forward.7} parent=0 // pred_check_branch
    %512 = sbr.rel (0) target = $region25
  $region24: #{discriminator_forward.7} parent=0 // pred_region
    _
  $region25: #{discriminator_forward.7} parent=0 // pred_fallthru
    _

</llo_original>
